<compile_context>
chip_gen: v7x
topology: tpu7x:2x2x1
jax: 0.10.0
libtpu: 0.0.40
codegen_flags: <defaults>
</compile_context>

<pallas_src>
import functools

import jax
import jax.numpy as jnp
from jax.experimental import pallas as pl
from jax.experimental.pallas import tpu as pltpu


# --------------------------------------------------------------------------------- kernel
def _decoder_kernel(L, H, Hg, is_attn, *refs):
    f32, bf16 = jnp.float32, jnp.bfloat16

    idx = 0
    emb_ref = refs[idx]; idx += 1                     # [Bp, E]            bf16
    hid_ref = refs[idx]; idx += 1                     # [L, Bp, H]         bf16
    if is_attn:
        enc_ref = refs[idx]; idx += 1                 # [Bp, S, H]         bf16
    whh_ref = refs[idx]; idx += 1                     # [L, H, 3*Hg]       bf16
    bih_ref = refs[idx]; idx += 1                     # [L, 1, 3*Hg]       f32
    bhh_ref = refs[idx]; idx += 1                     # [L, 1, 3*Hg]       f32
    wih_refs = refs[idx:idx + L]; idx += L            # per layer [in, 3*Hg] bf16
    w1_ref, b1_ref, w2_ref, b2_ref = refs[idx:idx + 4]; idx += 4
    w3_ref, b3_ref = refs[idx:idx + 2]; idx += 2      # [4H, tv] bf16, [1, tv] f32
    pred_ref, hid_out_ref = refs[idx], refs[idx + 1]  # [Bp, tv] f32, [1, L, Bp, H] f32
    h2_ref = refs[idx + 2]                            # scratch [Bp, 4H] bf16

    # ---- stage 1: attention + GRU + Linear1/2, once per core (first vocab tile) ----
    @pl.when(pl.program_id(1) == 0)
    def _stage1():
        x = emb_ref[...]                                              # bf16 [Bp, E]
        if is_attn:
            enc_f = enc_ref[...].astype(f32)                          # [Bp, S, H]

        for l in range(L):                                            # static unroll
            if is_attn:
                # scores[b,s] = sum_h enc[b,s,h] * hidden[l,b,h]  (softmax over s, dim=1)
                h_l = hid_ref[l].astype(f32)                          # [Bp, H]
                s_l = jnp.sum(enc_f * h_l[:, None, :], axis=2)        # [Bp, S]
                s_l = s_l - jnp.max(s_l, axis=1, keepdims=True)
                w_l = jnp.exp(s_l)
                w_l = w_l * pl.reciprocal(jnp.sum(w_l, axis=1, keepdims=True), approx=True)
                # context replaces the GRU initial hidden (as in the PyTorch bmm)
                h_prev = jnp.sum(w_l[:, :, None] * enc_f, axis=1)     # [Bp, H] f32
            else:
                h_prev = hid_ref[l].astype(f32)

            # fused per-layer gate matmuls: bf16 x bf16 -> f32 on the MXU (2 instead of 6)
            gi = jnp.dot(x, wih_refs[l][...], preferred_element_type=f32) + bih_ref[l]
            gh = jnp.dot(h_prev.astype(bf16), whh_ref[l],
                         preferred_element_type=f32) + bhh_ref[l]

            r = jax.nn.sigmoid(gi[:, 0 * Hg:0 * Hg + H] + gh[:, 0 * Hg:0 * Hg + H])
            z = jax.nn.sigmoid(gi[:, 1 * Hg:1 * Hg + H] + gh[:, 1 * Hg:1 * Hg + H])
            n = jnp.tanh(gi[:, 2 * Hg:2 * Hg + H] + r * gh[:, 2 * Hg:2 * Hg + H])
            h_new = (1.0 - z) * n + z * h_prev                        # f32 [Bp, H]

            hid_out_ref[0, l] = h_new.astype(hid_out_ref.dtype)
            x = h_new.astype(bf16)                                    # feeds the next layer

        # first two Linears of embedding2vocab (no nonlinearity, as in the module)
        h1 = jnp.dot(x, w1_ref[...], preferred_element_type=f32) + b1_ref[...]
        h2 = jnp.dot(h1.astype(bf16), w2_ref[...], preferred_element_type=f32) + b2_ref[...]
        h2_ref[...] = h2.astype(bf16)

    # ---- every grid step: one vocab tile, h2 (bf16) x w3 tile (bf16) on the MXU ----
    pred = jnp.dot(h2_ref[...], w3_ref[...], preferred_element_type=f32) + b3_ref[...]
    pred_ref[...] = pred.astype(pred_ref.dtype)


# --------------------------------------------------------------------------------- wrapper
def _whole_spec(arr):
    zeros = (0,) * arr.ndim
    return pl.BlockSpec(arr.shape, lambda c, j: zeros)


def decoder_forward(tokens, hidden, encoder_outputs, params, *, is_attn=True, tile_v=2048):
    """tokens [B] int32, hidden [L,B,H] f32, encoder_outputs [B,S,H] f32
       -> (pred [B,V] f32, hidden [L,B,H] f32)."""
    f32, bf16 = jnp.float32, jnp.bfloat16
    L, B, H = hidden.shape
    Hg = -(-H // 128) * 128
    V = params["w3"].shape[1]

    # data-dependent embedding row gather stays in XLA (B is tiny); table is bf16 already
    emb = params["embedding"][tokens]                                  # bf16 [B, E]

    # pad batch to 16: bf16 activations pack 16 rows per vreg sublane group
    Bp = -(-B // 16) * 16
    if Bp != B:
        emb = jnp.pad(emb, ((0, Bp - B), (0, 0)))
        hidden_p = jnp.pad(hidden, ((0, 0), (0, Bp - B), (0, 0)))
    else:
        hidden_p = hidden
    hidden_b = hidden_p.astype(bf16)                                   # no wrapper transpose
    if is_attn:
        enc_p = (jnp.pad(encoder_outputs, ((0, Bp - B), (0, 0), (0, 0)))
                 if Bp != B else encoder_outputs)
        enc_b = enc_p.astype(bf16)

    # vocab tiling: pad V to a multiple of 2*tv so both v7x TensorCores get whole tiles
    tv = tile_v if V >= tile_v else -(-V // 128) * 128
    Vp = -(-V // (2 * tv)) * (2 * tv)
    Nt2 = Vp // tv // 2                                                # tiles per core
    w3, b3 = params["w3"], params["b3"]
    if Vp != V:
        w3 = jnp.pad(w3, ((0, 0), (0, Vp - V)))
        b3 = jnp.pad(b3, ((0, 0), (0, Vp - V)))

    stage1_inputs = [emb, hidden_b] + ([enc_b] if is_attn else []) + [
        params["whh"], params["bih"], params["bhh"], *params["wih"],
        params["w1"], params["b1"], params["w2"], params["b2"]]
    in_specs = [_whole_spec(a) for a in stage1_inputs]                 # resident, DMA'd once

    vocab_idx = lambda c, j: (0, c * Nt2 + j)                          # core c streams its half
    in_specs += [pl.BlockSpec((4 * H, tv), vocab_idx),                 # w3 tile (double-buffered)
                 pl.BlockSpec((1, tv), vocab_idx)]                     # b3 tile
    inputs = stage1_inputs + [w3, b3]

    out_shape = (jax.ShapeDtypeStruct((Bp, Vp), f32),
                 jax.ShapeDtypeStruct((2, L, Bp, H), f32))             # per-core hidden copy
    out_specs = (pl.BlockSpec((Bp, tv), vocab_idx),
                 pl.BlockSpec((1, L, Bp, H), lambda c, j: (c, 0, 0, 0)))

    pred_p, hid_out = pl.pallas_call(
        functools.partial(_decoder_kernel, L, H, Hg, is_attn),
        out_shape=out_shape,
        grid=(2, Nt2),
        in_specs=in_specs,
        out_specs=out_specs,
        scratch_shapes=[pltpu.VMEM((Bp, 4 * H), bf16)],                # h2, carried over tiles
        compiler_params=pltpu.CompilerParams(
            dimension_semantics=("parallel", "arbitrary"),             # shard vocab over 2 TCs
            vmem_limit_bytes=48 << 20),                                # safe on v7x's 64 MiB
    )(*inputs)

    return pred_p[:B, :V], hid_out[0, :, :B, :]


# --------------------------------------------------------------------------------- params
def init_params(key, cn_vocab_size, embed_dim, hidden_dim, n_layers):
    f32, bf16 = jnp.float32, jnp.bfloat16
    H = hidden_dim * 2
    Hg = -(-H // 128) * 128
    ks = list(jax.random.split(key, 64))

    def u(shape, scale):
        return jax.random.uniform(ks.pop(), shape, f32, -scale, scale)

    def gate_pack(per_gate, dtype):
        # per_gate [3, in, H] -> [in, 3*Hg] with each gate block lane-padded to Hg (zeros)
        in_dim = per_gate.shape[1]
        out = jnp.zeros((in_dim, 3 * Hg), dtype)
        for g in range(3):
            out = out.at[:, g * Hg:g * Hg + H].set(per_gate[g].astype(dtype))
        return out

    s = 1.0 / (H ** 0.5)
    wih = [gate_pack(u((3, embed_dim if l == 0 else H, H), s), bf16) for l in range(n_layers)]
    whh = jnp.stack([gate_pack(u((3, H, H), s), bf16) for _ in range(n_layers)])
    bih = jnp.stack([gate_pack(u((3, 1, H), s), f32) for _ in range(n_layers)])
    bhh = jnp.stack([gate_pack(u((3, 1, H), s), f32) for _ in range(n_layers)])

    params = dict(
        embedding=jax.random.normal(ks.pop(), (cn_vocab_size, embed_dim), f32).astype(bf16),
        wih=wih, whh=whh, bih=bih, bhh=bhh,
        w1=u((H, 2 * H), H ** -0.5).astype(bf16),
        b1=u((1, 2 * H), H ** -0.5),
        w2=u((2 * H, 4 * H), (2 * H) ** -0.5).astype(bf16),
        b2=u((1, 4 * H), (2 * H) ** -0.5),
        w3=u((4 * H, cn_vocab_size), (4 * H) ** -0.5).astype(bf16),
        b3=u((1, cn_vocab_size), (4 * H) ** -0.5),
    )
    return params


# --------------------------------------------------------------------------------- reference
def decoder_reference(tokens, hidden, enc, params, *, is_attn=True):
    """Pure-JAX f32 reference mirroring the PyTorch forward (shares the bf16-stored weights)."""
    f32 = jnp.float32
    L, B, H = hidden.shape
    Hg = -(-H // 128) * 128
    x = params["embedding"][tokens].astype(f32)
    enc = enc.astype(f32)

    if is_attn:
        hid_bhl = jnp.transpose(hidden, (1, 2, 0)).astype(f32)         # [B, H, L]
        scores = jnp.einsum("bsh,bhl->bsl", enc, hid_bhl)
        w = jax.nn.softmax(scores, axis=1)
        ctx = jnp.einsum("bsl,bsh->blh", w, enc)                       # [B, L, H]

    def gate(m, g):
        return m[:, g * Hg:g * Hg + H]

    new_hidden = []
    for l in range(L):
        h_prev = ctx[:, l, :] if is_attn else hidden[l].astype(f32)
        gi = x @ params["wih"][l].astype(f32) + params["bih"][l]
        gh = h_prev @ params["whh"][l].astype(f32) + params["bhh"][l]
        r = jax.nn.sigmoid(gate(gi, 0) + gate(gh, 0))
        z = jax.nn.sigmoid(gate(gi, 1) + gate(gh, 1))
        n = jnp.tanh(gate(gi, 2) + r * gate(gh, 2))
        h_new = (1.0 - z) * n + z * h_prev
        new_hidden.append(h_new)
        x = h_new

    h1 = x @ params["w1"].astype(f32) + params["b1"]
    h2 = h1 @ params["w2"].astype(f32) + params["b2"]
    pred = h2 @ params["w3"].astype(f32) + params["b3"]
    return pred, jnp.stack(new_hidden, axis=0)


if __name__ == "__main__":
    cn_vocab_size, embed_dim, hidden_dim, n_layers = 128, 32, 32, 2
    B, S = 2, 8
    H = hidden_dim * 2                       # self.hidden_dim = hidden_dim * 2 in the module

    key = jax.random.PRNGKey(0)
    k_param, k_tok, k_hid, k_enc = jax.random.split(key, 4)
    params = init_params(k_param, cn_vocab_size, embed_dim, hidden_dim, n_layers)
    tokens = jax.random.randint(k_tok, (B,), 0, cn_vocab_size)
    hidden = jax.random.normal(k_hid, (n_layers, B, H), jnp.float32)
    encoder_outputs = jax.random.normal(k_enc, (B, S, H), jnp.float32)

    # attention path
    pred, new_hidden = decoder_forward(tokens, hidden, encoder_outputs, params, is_attn=True)
    jax.block_until_ready((pred, new_hidden))
    assert pred.shape == (B, cn_vocab_size) and new_hidden.shape == (n_layers, B, H)

    ref_pred, ref_hidden = decoder_reference(tokens, hidden, encoder_outputs, params, is_attn=True)
    # tolerance covers bf16 activations/weights on the MXU + approx-reciprocal softmax
    assert jnp.allclose(pred, ref_pred, atol=3e-2, rtol=3e-2)
    assert jnp.allclose(new_hidden, ref_hidden, atol=3e-2, rtol=3e-2)

    # non-attention path (encoder_outputs never passed to / DMA'd by the kernel)
    pred2, hid2 = decoder_forward(tokens, hidden, encoder_outputs, params, is_attn=False)
    jax.block_until_ready((pred2, hid2))
    ref_pred2, ref_hid2 = decoder_reference(tokens, hidden, encoder_outputs, params, is_attn=False)
    assert jnp.allclose(pred2, ref_pred2, atol=3e-2, rtol=3e-2)
    assert jnp.allclose(hid2, ref_hid2, atol=3e-2, rtol=3e-2)

    print("KERNEL_OK")
</pallas_src>

<mosaic_0001>
module attributes {stable_mosaic.version = 11 : i64} {
  func.func @_decoder_kernel(%arg0: i32, %arg1: i32, %arg2: memref<16x32xbf16, #tpu.memory_space<vmem>>, %arg3: memref<2x16x64xbf16, #tpu.memory_space<vmem>>, %arg4: memref<16x8x64xbf16, #tpu.memory_space<vmem>>, %arg5: memref<2x64x384xbf16, #tpu.memory_space<vmem>>, %arg6: memref<2x1x384xf32, #tpu.memory_space<vmem>>, %arg7: memref<2x1x384xf32, #tpu.memory_space<vmem>>, %arg8: memref<32x384xbf16, #tpu.memory_space<vmem>>, %arg9: memref<64x384xbf16, #tpu.memory_space<vmem>>, %arg10: memref<64x128xbf16, #tpu.memory_space<vmem>>, %arg11: memref<1x128xf32, #tpu.memory_space<vmem>>, %arg12: memref<128x256xbf16, #tpu.memory_space<vmem>>, %arg13: memref<1x256xf32, #tpu.memory_space<vmem>>, %arg14: memref<256x128xbf16, #tpu.memory_space<vmem>>, %arg15: memref<1x128xf32, #tpu.memory_space<vmem>>, %arg16: memref<16x128xf32, #tpu.memory_space<vmem>>, %arg17: memref<1x2x16x64xf32, #tpu.memory_space<vmem>>, %arg18: memref<16x256xbf16, #tpu.memory_space<vmem>>) attributes {dimension_semantics = [#tpu.dimension_semantics<parallel>, #tpu.dimension_semantics<arbitrary>], iteration_bounds = array<i64: 2, 1>, scalar_prefetch = 0 : i64, scratch_operands = 1 : i64, tpu.core_type = #tpu.core_type<tc>, window_params = [{pipeline_mode = #tpu.pipeline_mode<synchronous>, transform_indices = @transform_0, window_bounds = array<i64: 16, 32>}, {pipeline_mode = #tpu.pipeline_mode<synchronous>, transform_indices = @transform_1, window_bounds = array<i64: 2, 16, 64>}, {pipeline_mode = #tpu.pipeline_mode<synchronous>, transform_indices = @transform_2, window_bounds = array<i64: 16, 8, 64>}, {pipeline_mode = #tpu.pipeline_mode<synchronous>, transform_indices = @transform_3, window_bounds = array<i64: 2, 64, 384>}, {pipeline_mode = #tpu.pipeline_mode<synchronous>, transform_indices = @transform_4, window_bounds = array<i64: 2, 1, 384>}, {pipeline_mode = #tpu.pipeline_mode<synchronous>, transform_indices = @transform_5, window_bounds = array<i64: 2, 1, 384>}, {pipeline_mode = #tpu.pipeline_mode<synchronous>, transform_indices = @transform_6, window_bounds = array<i64: 32, 384>}, {pipeline_mode = #tpu.pipeline_mode<synchronous>, transform_indices = @transform_7, window_bounds = array<i64: 64, 384>}, {pipeline_mode = #tpu.pipeline_mode<synchronous>, transform_indices = @transform_8, window_bounds = array<i64: 64, 128>}, {pipeline_mode = #tpu.pipeline_mode<synchronous>, transform_indices = @transform_9, window_bounds = array<i64: 1, 128>}, {pipeline_mode = #tpu.pipeline_mode<synchronous>, transform_indices = @transform_10, window_bounds = array<i64: 128, 256>}, {pipeline_mode = #tpu.pipeline_mode<synchronous>, transform_indices = @transform_11, window_bounds = array<i64: 1, 256>}, {transform_indices = @transform_12, window_bounds = array<i64: 256, 128>}, {transform_indices = @transform_13, window_bounds = array<i64: 1, 128>}, {transform_indices = @transform_14, window_bounds = array<i64: 16, 128>}, {transform_indices = @transform_15, window_bounds = array<i64: 1, 2, 16, 64>}]} {
    %c0_i32 = arith.constant 0 : i32
    %0 = arith.cmpi eq, %arg1, %c0_i32 : i32
    %1 = arith.extui %0 : i1 to i32
    %c0_i32_0 = arith.constant 0 : i32
    %2 = arith.cmpi ne, %1, %c0_i32_0 : i32
    scf.if %2 {
      %c0_8 = arith.constant 0 : index
      %c0_9 = arith.constant 0 : index
      %10 = vector.load %arg2[%c0_8, %c0_9] : memref<16x32xbf16, #tpu.memory_space<vmem>>, vector<16x32xbf16>
      %c0_10 = arith.constant 0 : index
      %c0_11 = arith.constant 0 : index
      %c0_12 = arith.constant 0 : index
      %11 = vector.load %arg4[%c0_10, %c0_11, %c0_12] : memref<16x8x64xbf16, #tpu.memory_space<vmem>>, vector<16x8x64xbf16>
      %12 = arith.extf %11 : vector<16x8x64xbf16> to vector<16x8x64xf32>
      %c0_13 = arith.constant 0 : index
      %c0_14 = arith.constant 0 : index
      %c0_15 = arith.constant 0 : index
      %13 = vector.load %arg3[%c0_13, %c0_14, %c0_15] : memref<2x16x64xbf16, #tpu.memory_space<vmem>>, vector<1x16x64xbf16>
      %14 = vector.shape_cast %13 : vector<1x16x64xbf16> to vector<16x64xbf16>
      %15 = arith.extf %14 : vector<16x64xbf16> to vector<16x64xf32>
      %16 = vector.shape_cast %15 : vector<16x64xf32> to vector<16x1x64xf32>
      %17 = vector.broadcast %16 : vector<16x1x64xf32> to vector<16x8x64xf32>
      %18 = arith.mulf %12, %17 : vector<16x8x64xf32>
      %cst_16 = arith.constant dense<0.000000e+00> : vector<16x8xf32>
      %19 = vector.multi_reduction <add>, %18, %cst_16 [2] : vector<16x8x64xf32> to vector<16x8xf32>
      %cst_17 = arith.constant dense<0xFF800000> : vector<16xf32>
      %20 = vector.multi_reduction <maximumf>, %19, %cst_17 [1] : vector<16x8xf32> to vector<16xf32>
      %21 = vector.shape_cast %20 : vector<16xf32> to vector<16x1xf32>
      %22 = vector.broadcast %21 : vector<16x1xf32> to vector<16x8xf32>
      %23 = arith.subf %19, %22 : vector<16x8xf32>
      %24 = math.exp %23 : vector<16x8xf32>
      %cst_18 = arith.constant dense<0.000000e+00> : vector<16xf32>
      %25 = vector.multi_reduction <add>, %24, %cst_18 [1] : vector<16x8xf32> to vector<16xf32>
      %26 = vector.shape_cast %25 : vector<16xf32> to vector<16x1xf32>
      %27 = tpu.reciprocal %26 {approx = true} : vector<16x1xf32> -> vector<16x1xf32>
      %28 = vector.broadcast %27 : vector<16x1xf32> to vector<16x8xf32>
      %29 = arith.mulf %24, %28 : vector<16x8xf32>
      %30 = vector.shape_cast %29 : vector<16x8xf32> to vector<16x8x1xf32>
      %31 = vector.broadcast %30 : vector<16x8x1xf32> to vector<16x8x64xf32>
      %32 = arith.mulf %31, %12 : vector<16x8x64xf32>
      %cst_19 = arith.constant dense<0.000000e+00> : vector<16x64xf32>
      %33 = vector.multi_reduction <add>, %32, %cst_19 [1] : vector<16x8x64xf32> to vector<16x64xf32>
      %c0_20 = arith.constant 0 : index
      %c0_21 = arith.constant 0 : index
      %34 = vector.load %arg8[%c0_20, %c0_21] : memref<32x384xbf16, #tpu.memory_space<vmem>>, vector<32x384xbf16>
      %cst_22 = arith.constant dense<0.000000e+00> : vector<16x384xf32>
      %35 = tpu.matmul %10, %34, %cst_22 {dimension_numbers = #tpu.dot_dimension_numbers<[1], [0], [0], [1], [0, 0, 1, 1], [], []>} : vector<16x32xbf16>, vector<32x384xbf16>, vector<16x384xf32> -> vector<16x384xf32>
      %c0_23 = arith.constant 0 : index
      %c0_24 = arith.constant 0 : index
      %c0_25 = arith.constant 0 : index
      %36 = vector.load %arg6[%c0_23, %c0_24, %c0_25] : memref<2x1x384xf32, #tpu.memory_space<vmem>>, vector<1x1x384xf32>
      %37 = vector.shape_cast %36 : vector<1x1x384xf32> to vector<1x384xf32>
      %38 = vector.broadcast %37 : vector<1x384xf32> to vector<16x384xf32>
      %39 = arith.addf %35, %38 : vector<16x384xf32>
      %40 = arith.truncf %33 : vector<16x64xf32> to vector<16x64xbf16>
      %c0_26 = arith.constant 0 : index
      %c0_27 = arith.constant 0 : index
      %c0_28 = arith.constant 0 : index
      %41 = vector.load %arg5[%c0_26, %c0_27, %c0_28] : memref<2x64x384xbf16, #tpu.memory_space<vmem>>, vector<1x64x384xbf16>
      %42 = vector.shape_cast %41 : vector<1x64x384xbf16> to vector<64x384xbf16>
      %cst_29 = arith.constant dense<0.000000e+00> : vector<16x384xf32>
      %43 = tpu.matmul %40, %42, %cst_29 {dimension_numbers = #tpu.dot_dimension_numbers<[1], [0], [0], [1], [0, 0, 1, 1], [], []>} : vector<16x64xbf16>, vector<64x384xbf16>, vector<16x384xf32> -> vector<16x384xf32>
      %c0_30 = arith.constant 0 : index
      %c0_31 = arith.constant 0 : index
      %c0_32 = arith.constant 0 : index
      %44 = vector.load %arg7[%c0_30, %c0_31, %c0_32] : memref<2x1x384xf32, #tpu.memory_space<vmem>>, vector<1x1x384xf32>
      %45 = vector.shape_cast %44 : vector<1x1x384xf32> to vector<1x384xf32>
      %46 = vector.broadcast %45 : vector<1x384xf32> to vector<16x384xf32>
      %47 = arith.addf %43, %46 : vector<16x384xf32>
      %48 = vector.extract_strided_slice %39 {offsets = [0, 0], sizes = [16, 64], strides = [1, 1]} : vector<16x384xf32> to vector<16x64xf32>
      %49 = vector.extract_strided_slice %47 {offsets = [0, 0], sizes = [16, 64], strides = [1, 1]} : vector<16x384xf32> to vector<16x64xf32>
      %50 = arith.addf %48, %49 : vector<16x64xf32>
      %51 = arith.negf %50 : vector<16x64xf32>
      %52 = math.exp %51 : vector<16x64xf32>
      %cst_33 = arith.constant 1.000000e+00 : f32
      %53 = vector.broadcast %cst_33 : f32 to vector<16x64xf32>
      %54 = arith.addf %53, %52 : vector<16x64xf32>
      %55 = arith.divf %53, %54 : vector<16x64xf32>
      %56 = vector.extract_strided_slice %39 {offsets = [0, 128], sizes = [16, 64], strides = [1, 1]} : vector<16x384xf32> to vector<16x64xf32>
      %57 = vector.extract_strided_slice %47 {offsets = [0, 128], sizes = [16, 64], strides = [1, 1]} : vector<16x384xf32> to vector<16x64xf32>
      %58 = arith.addf %56, %57 : vector<16x64xf32>
      %59 = arith.negf %58 : vector<16x64xf32>
      %60 = math.exp %59 : vector<16x64xf32>
      %cst_34 = arith.constant 1.000000e+00 : f32
      %61 = vector.broadcast %cst_34 : f32 to vector<16x64xf32>
      %62 = arith.addf %61, %60 : vector<16x64xf32>
      %63 = arith.divf %61, %62 : vector<16x64xf32>
      %64 = vector.extract_strided_slice %39 {offsets = [0, 256], sizes = [16, 64], strides = [1, 1]} : vector<16x384xf32> to vector<16x64xf32>
      %65 = vector.extract_strided_slice %47 {offsets = [0, 256], sizes = [16, 64], strides = [1, 1]} : vector<16x384xf32> to vector<16x64xf32>
      %66 = arith.mulf %55, %65 : vector<16x64xf32>
      %67 = arith.addf %64, %66 : vector<16x64xf32>
      %68 = math.tanh %67 : vector<16x64xf32>
      %cst_35 = arith.constant 1.000000e+00 : f32
      %69 = vector.broadcast %cst_35 : f32 to vector<16x64xf32>
      %70 = arith.subf %69, %63 : vector<16x64xf32>
      %71 = arith.mulf %70, %68 : vector<16x64xf32>
      %72 = arith.mulf %63, %33 : vector<16x64xf32>
      %73 = arith.addf %71, %72 : vector<16x64xf32>
      %c0_36 = arith.constant 0 : index
      %c0_37 = arith.constant 0 : index
      %c0_38 = arith.constant 0 : index
      %c0_39 = arith.constant 0 : index
      %74 = vector.load %arg17[%c0_36, %c0_37, %c0_38, %c0_39] : memref<1x2x16x64xf32, #tpu.memory_space<vmem>>, vector<1x1x16x64xf32>
      %75 = vector.shape_cast %74 : vector<1x1x16x64xf32> to vector<16x64xf32>
      %76 = vector.shape_cast %73 : vector<16x64xf32> to vector<1x1x16x64xf32>
      tpu.vector_store %arg17[%c0_36, %c0_37, %c0_38, %c0_39], %76 {strides = array<i32>} : memref<1x2x16x64xf32, #tpu.memory_space<vmem>>, vector<1x1x16x64xf32>,
      %77 = arith.truncf %73 : vector<16x64xf32> to vector<16x64xbf16>
      %c1 = arith.constant 1 : index
      %c0_40 = arith.constant 0 : index
      %c0_41 = arith.constant 0 : index
      %78 = vector.load %arg3[%c1, %c0_40, %c0_41] : memref<2x16x64xbf16, #tpu.memory_space<vmem>>, vector<1x16x64xbf16>
      %79 = vector.shape_cast %78 : vector<1x16x64xbf16> to vector<16x64xbf16>
      %80 = arith.extf %79 : vector<16x64xbf16> to vector<16x64xf32>
      %81 = vector.shape_cast %80 : vector<16x64xf32> to vector<16x1x64xf32>
      %82 = vector.broadcast %81 : vector<16x1x64xf32> to vector<16x8x64xf32>
      %83 = arith.mulf %12, %82 : vector<16x8x64xf32>
      %cst_42 = arith.constant dense<0.000000e+00> : vector<16x8xf32>
      %84 = vector.multi_reduction <add>, %83, %cst_42 [2] : vector<16x8x64xf32> to vector<16x8xf32>
      %cst_43 = arith.constant dense<0xFF800000> : vector<16xf32>
      %85 = vector.multi_reduction <maximumf>, %84, %cst_43 [1] : vector<16x8xf32> to vector<16xf32>
      %86 = vector.shape_cast %85 : vector<16xf32> to vector<16x1xf32>
      %87 = vector.broadcast %86 : vector<16x1xf32> to vector<16x8xf32>
      %88 = arith.subf %84, %87 : vector<16x8xf32>
      %89 = math.exp %88 : vector<16x8xf32>
      %cst_44 = arith.constant dense<0.000000e+00> : vector<16xf32>
      %90 = vector.multi_reduction <add>, %89, %cst_44 [1] : vector<16x8xf32> to vector<16xf32>
      %91 = vector.shape_cast %90 : vector<16xf32> to vector<16x1xf32>
      %92 = tpu.reciprocal %91 {approx = true} : vector<16x1xf32> -> vector<16x1xf32>
      %93 = vector.broadcast %92 : vector<16x1xf32> to vector<16x8xf32>
      %94 = arith.mulf %89, %93 : vector<16x8xf32>
      %95 = vector.shape_cast %94 : vector<16x8xf32> to vector<16x8x1xf32>
      %96 = vector.broadcast %95 : vector<16x8x1xf32> to vector<16x8x64xf32>
      %97 = arith.mulf %96, %12 : vector<16x8x64xf32>
      %cst_45 = arith.constant dense<0.000000e+00> : vector<16x64xf32>
      %98 = vector.multi_reduction <add>, %97, %cst_45 [1] : vector<16x8x64xf32> to vector<16x64xf32>
      %c0_46 = arith.constant 0 : index
      %c0_47 = arith.constant 0 : index
      %99 = vector.load %arg9[%c0_46, %c0_47] : memref<64x384xbf16, #tpu.memory_space<vmem>>, vector<64x384xbf16>
      %cst_48 = arith.constant dense<0.000000e+00> : vector<16x384xf32>
      %100 = tpu.matmul %77, %99, %cst_48 {dimension_numbers = #tpu.dot_dimension_numbers<[1], [0], [0], [1], [0, 0, 1, 1], [], []>} : vector<16x64xbf16>, vector<64x384xbf16>, vector<16x384xf32> -> vector<16x384xf32>
      %c1_49 = arith.constant 1 : index
      %c0_50 = arith.constant 0 : index
      %c0_51 = arith.constant 0 : index
      %101 = vector.load %arg6[%c1_49, %c0_50, %c0_51] : memref<2x1x384xf32, #tpu.memory_space<vmem>>, vector<1x1x384xf32>
      %102 = vector.shape_cast %101 : vector<1x1x384xf32> to vector<1x384xf32>
      %103 = vector.broadcast %102 : vector<1x384xf32> to vector<16x384xf32>
      %104 = arith.addf %100, %103 : vector<16x384xf32>
      %105 = arith.truncf %98 : vector<16x64xf32> to vector<16x64xbf16>
      %c1_52 = arith.constant 1 : index
      %c0_53 = arith.constant 0 : index
      %c0_54 = arith.constant 0 : index
      %106 = vector.load %arg5[%c1_52, %c0_53, %c0_54] : memref<2x64x384xbf16, #tpu.memory_space<vmem>>, vector<1x64x384xbf16>
      %107 = vector.shape_cast %106 : vector<1x64x384xbf16> to vector<64x384xbf16>
      %cst_55 = arith.constant dense<0.000000e+00> : vector<16x384xf32>
      %108 = tpu.matmul %105, %107, %cst_55 {dimension_numbers = #tpu.dot_dimension_numbers<[1], [0], [0], [1], [0, 0, 1, 1], [], []>} : vector<16x64xbf16>, vector<64x384xbf16>, vector<16x384xf32> -> vector<16x384xf32>
      %c1_56 = arith.constant 1 : index
      %c0_57 = arith.constant 0 : index
      %c0_58 = arith.constant 0 : index
      %109 = vector.load %arg7[%c1_56, %c0_57, %c0_58] : memref<2x1x384xf32, #tpu.memory_space<vmem>>, vector<1x1x384xf32>
      %110 = vector.shape_cast %109 : vector<1x1x384xf32> to vector<1x384xf32>
      %111 = vector.broadcast %110 : vector<1x384xf32> to vector<16x384xf32>
      %112 = arith.addf %108, %111 : vector<16x384xf32>
      %113 = vector.extract_strided_slice %104 {offsets = [0, 0], sizes = [16, 64], strides = [1, 1]} : vector<16x384xf32> to vector<16x64xf32>
      %114 = vector.extract_strided_slice %112 {offsets = [0, 0], sizes = [16, 64], strides = [1, 1]} : vector<16x384xf32> to vector<16x64xf32>
      %115 = arith.addf %113, %114 : vector<16x64xf32>
      %116 = arith.negf %115 : vector<16x64xf32>
      %117 = math.exp %116 : vector<16x64xf32>
      %cst_59 = arith.constant 1.000000e+00 : f32
      %118 = vector.broadcast %cst_59 : f32 to vector<16x64xf32>
      %119 = arith.addf %118, %117 : vector<16x64xf32>
      %120 = arith.divf %118, %119 : vector<16x64xf32>
      %121 = vector.extract_strided_slice %104 {offsets = [0, 128], sizes = [16, 64], strides = [1, 1]} : vector<16x384xf32> to vector<16x64xf32>
      %122 = vector.extract_strided_slice %112 {offsets = [0, 128], sizes = [16, 64], strides = [1, 1]} : vector<16x384xf32> to vector<16x64xf32>
      %123 = arith.addf %121, %122 : vector<16x64xf32>
      %124 = arith.negf %123 : vector<16x64xf32>
      %125 = math.exp %124 : vector<16x64xf32>
      %cst_60 = arith.constant 1.000000e+00 : f32
      %126 = vector.broadcast %cst_60 : f32 to vector<16x64xf32>
      %127 = arith.addf %126, %125 : vector<16x64xf32>
      %128 = arith.divf %126, %127 : vector<16x64xf32>
      %129 = vector.extract_strided_slice %104 {offsets = [0, 256], sizes = [16, 64], strides = [1, 1]} : vector<16x384xf32> to vector<16x64xf32>
      %130 = vector.extract_strided_slice %112 {offsets = [0, 256], sizes = [16, 64], strides = [1, 1]} : vector<16x384xf32> to vector<16x64xf32>
      %131 = arith.mulf %120, %130 : vector<16x64xf32>
      %132 = arith.addf %129, %131 : vector<16x64xf32>
      %133 = math.tanh %132 : vector<16x64xf32>
      %cst_61 = arith.constant 1.000000e+00 : f32
      %134 = vector.broadcast %cst_61 : f32 to vector<16x64xf32>
      %135 = arith.subf %134, %128 : vector<16x64xf32>
      %136 = arith.mulf %135, %133 : vector<16x64xf32>
      %137 = arith.mulf %128, %98 : vector<16x64xf32>
      %138 = arith.addf %136, %137 : vector<16x64xf32>
      %c0_62 = arith.constant 0 : index
      %c1_63 = arith.constant 1 : index
      %c0_64 = arith.constant 0 : index
      %c0_65 = arith.constant 0 : index
      %139 = vector.load %arg17[%c0_62, %c1_63, %c0_64, %c0_65] : memref<1x2x16x64xf32, #tpu.memory_space<vmem>>, vector<1x1x16x64xf32>
      %140 = vector.shape_cast %139 : vector<1x1x16x64xf32> to vector<16x64xf32>
      %141 = vector.shape_cast %138 : vector<16x64xf32> to vector<1x1x16x64xf32>
      tpu.vector_store %arg17[%c0_62, %c1_63, %c0_64, %c0_65], %141 {strides = array<i32>} : memref<1x2x16x64xf32, #tpu.memory_space<vmem>>, vector<1x1x16x64xf32>,
      %142 = arith.truncf %138 : vector<16x64xf32> to vector<16x64xbf16>
      %c0_66 = arith.constant 0 : index
      %c0_67 = arith.constant 0 : index
      %143 = vector.load %arg10[%c0_66, %c0_67] : memref<64x128xbf16, #tpu.memory_space<vmem>>, vector<64x128xbf16>
      %cst_68 = arith.constant dense<0.000000e+00> : vector<16x128xf32>
      %144 = tpu.matmul %142, %143, %cst_68 {dimension_numbers = #tpu.dot_dimension_numbers<[1], [0], [0], [1], [0, 0, 1, 1], [], []>} : vector<16x64xbf16>, vector<64x128xbf16>, vector<16x128xf32> -> vector<16x128xf32>
      %c0_69 = arith.constant 0 : index
      %c0_70 = arith.constant 0 : index
      %145 = vector.load %arg11[%c0_69, %c0_70] : memref<1x128xf32, #tpu.memory_space<vmem>>, vector<1x128xf32>
      %146 = vector.broadcast %145 : vector<1x128xf32> to vector<16x128xf32>
      %147 = arith.addf %144, %146 : vector<16x128xf32>
      %148 = arith.truncf %147 : vector<16x128xf32> to vector<16x128xbf16>
      %c0_71 = arith.constant 0 : index
      %c0_72 = arith.constant 0 : index
      %149 = vector.load %arg12[%c0_71, %c0_72] : memref<128x256xbf16, #tpu.memory_space<vmem>>, vector<128x256xbf16>
      %cst_73 = arith.constant dense<0.000000e+00> : vector<16x256xf32>
      %150 = tpu.matmul %148, %149, %cst_73 {dimension_numbers = #tpu.dot_dimension_numbers<[1], [0], [0], [1], [0, 0, 1, 1], [], []>} : vector<16x128xbf16>, vector<128x256xbf16>, vector<16x256xf32> -> vector<16x256xf32>
      %c0_74 = arith.constant 0 : index
      %c0_75 = arith.constant 0 : index
      %151 = vector.load %arg13[%c0_74, %c0_75] : memref<1x256xf32, #tpu.memory_space<vmem>>, vector<1x256xf32>
      %152 = vector.broadcast %151 : vector<1x256xf32> to vector<16x256xf32>
      %153 = arith.addf %150, %152 : vector<16x256xf32>
      %154 = arith.truncf %153 : vector<16x256xf32> to vector<16x256xbf16>
      %c0_76 = arith.constant 0 : index
      %c0_77 = arith.constant 0 : index
      %155 = vector.load %arg18[%c0_76, %c0_77] : memref<16x256xbf16, #tpu.memory_space<vmem>>, vector<16x256xbf16>
      tpu.vector_store %arg18[%c0_76, %c0_77], %154 {strides = array<i32>} : memref<16x256xbf16, #tpu.memory_space<vmem>>, vector<16x256xbf16>,
    } else {
    }
    %c0 = arith.constant 0 : index
    %c0_1 = arith.constant 0 : index
    %3 = vector.load %arg18[%c0, %c0_1] : memref<16x256xbf16, #tpu.memory_space<vmem>>, vector<16x256xbf16>
    %c0_2 = arith.constant 0 : index
    %c0_3 = arith.constant 0 : index
    %4 = vector.load %arg14[%c0_2, %c0_3] : memref<256x128xbf16, #tpu.memory_space<vmem>>, vector<256x128xbf16>
    %cst = arith.constant dense<0.000000e+00> : vector<16x128xf32>
    %5 = tpu.matmul %3, %4, %cst {dimension_numbers = #tpu.dot_dimension_numbers<[1], [0], [0], [1], [0, 0, 1, 1], [], []>} : vector<16x256xbf16>, vector<256x128xbf16>, vector<16x128xf32> -> vector<16x128xf32>
    %c0_4 = arith.constant 0 : index
    %c0_5 = arith.constant 0 : index
    %6 = vector.load %arg15[%c0_4, %c0_5] : memref<1x128xf32, #tpu.memory_space<vmem>>, vector<1x128xf32>
    %7 = vector.broadcast %6 : vector<1x128xf32> to vector<16x128xf32>
    %8 = arith.addf %5, %7 : vector<16x128xf32>
    %c0_6 = arith.constant 0 : index
    %c0_7 = arith.constant 0 : index
    %9 = vector.load %arg16[%c0_6, %c0_7] : memref<16x128xf32, #tpu.memory_space<vmem>>, vector<16x128xf32>
    tpu.vector_store %arg16[%c0_6, %c0_7], %8 {strides = array<i32>} : memref<16x128xf32, #tpu.memory_space<vmem>>, vector<16x128xf32>,
    return
  }
  func.func @transform_0(%arg0: i32, %arg1: i32) -> (i32, i32) {
    %c0_i32 = arith.constant 0 : i32
    %c0_i32_0 = arith.constant 0 : i32
    %c0_i32_1 = arith.constant 0 : i32
    return %c0_i32, %c0_i32_0 : i32, i32
  }
  func.func @transform_1(%arg0: i32, %arg1: i32) -> (i32, i32, i32) {
    %c0_i32 = arith.constant 0 : i32
    %c0_i32_0 = arith.constant 0 : i32
    %c0_i32_1 = arith.constant 0 : i32
    %c0_i32_2 = arith.constant 0 : i32
    return %c0_i32, %c0_i32_0, %c0_i32_1 : i32, i32, i32
  }
  func.func @transform_2(%arg0: i32, %arg1: i32) -> (i32, i32, i32) {
    %c0_i32 = arith.constant 0 : i32
    %c0_i32_0 = arith.constant 0 : i32
    %c0_i32_1 = arith.constant 0 : i32
    %c0_i32_2 = arith.constant 0 : i32
    return %c0_i32, %c0_i32_0, %c0_i32_1 : i32, i32, i32
  }
  func.func @transform_3(%arg0: i32, %arg1: i32) -> (i32, i32, i32) {
    %c0_i32 = arith.constant 0 : i32
    %c0_i32_0 = arith.constant 0 : i32
    %c0_i32_1 = arith.constant 0 : i32
    %c0_i32_2 = arith.constant 0 : i32
    return %c0_i32, %c0_i32_0, %c0_i32_1 : i32, i32, i32
  }
  func.func @transform_4(%arg0: i32, %arg1: i32) -> (i32, i32, i32) {
    %c0_i32 = arith.constant 0 : i32
    %c0_i32_0 = arith.constant 0 : i32
    %c0_i32_1 = arith.constant 0 : i32
    %c0_i32_2 = arith.constant 0 : i32
    return %c0_i32, %c0_i32_0, %c0_i32_1 : i32, i32, i32
  }
  func.func @transform_5(%arg0: i32, %arg1: i32) -> (i32, i32, i32) {
    %c0_i32 = arith.constant 0 : i32
    %c0_i32_0 = arith.constant 0 : i32
    %c0_i32_1 = arith.constant 0 : i32
    %c0_i32_2 = arith.constant 0 : i32
    return %c0_i32, %c0_i32_0, %c0_i32_1 : i32, i32, i32
  }
  func.func @transform_6(%arg0: i32, %arg1: i32) -> (i32, i32) {
    %c0_i32 = arith.constant 0 : i32
    %c0_i32_0 = arith.constant 0 : i32
    %c0_i32_1 = arith.constant 0 : i32
    return %c0_i32, %c0_i32_0 : i32, i32
  }
  func.func @transform_7(%arg0: i32, %arg1: i32) -> (i32, i32) {
    %c0_i32 = arith.constant 0 : i32
    %c0_i32_0 = arith.constant 0 : i32
    %c0_i32_1 = arith.constant 0 : i32
    return %c0_i32, %c0_i32_0 : i32, i32
  }
  func.func @transform_8(%arg0: i32, %arg1: i32) -> (i32, i32) {
    %c0_i32 = arith.constant 0 : i32
    %c0_i32_0 = arith.constant 0 : i32
    %c0_i32_1 = arith.constant 0 : i32
    return %c0_i32, %c0_i32_0 : i32, i32
  }
  func.func @transform_9(%arg0: i32, %arg1: i32) -> (i32, i32) {
    %c0_i32 = arith.constant 0 : i32
    %c0_i32_0 = arith.constant 0 : i32
    %c0_i32_1 = arith.constant 0 : i32
    return %c0_i32, %c0_i32_0 : i32, i32
  }
  func.func @transform_10(%arg0: i32, %arg1: i32) -> (i32, i32) {
    %c0_i32 = arith.constant 0 : i32
    %c0_i32_0 = arith.constant 0 : i32
    %c0_i32_1 = arith.constant 0 : i32
    return %c0_i32, %c0_i32_0 : i32, i32
  }
  func.func @transform_11(%arg0: i32, %arg1: i32) -> (i32, i32) {
    %c0_i32 = arith.constant 0 : i32
    %c0_i32_0 = arith.constant 0 : i32
    %c0_i32_1 = arith.constant 0 : i32
    return %c0_i32, %c0_i32_0 : i32, i32
  }
  func.func @transform_12(%arg0: i32, %arg1: i32) -> (i32, i32) {
    %c1_i32 = arith.constant 1 : i32
    %0 = arith.muli %arg0, %c1_i32 : i32
    %1 = arith.addi %0, %arg1 : i32
    %c0_i32 = arith.constant 0 : i32
    %c0_i32_0 = arith.constant 0 : i32
    return %c0_i32, %1 : i32, i32
  }
  func.func @transform_13(%arg0: i32, %arg1: i32) -> (i32, i32) {
    %c1_i32 = arith.constant 1 : i32
    %0 = arith.muli %arg0, %c1_i32 : i32
    %1 = arith.addi %0, %arg1 : i32
    %c0_i32 = arith.constant 0 : i32
    %c0_i32_0 = arith.constant 0 : i32
    return %c0_i32, %1 : i32, i32
  }
  func.func @transform_14(%arg0: i32, %arg1: i32) -> (i32, i32) {
    %c1_i32 = arith.constant 1 : i32
    %0 = arith.muli %arg0, %c1_i32 : i32
    %1 = arith.addi %0, %arg1 : i32
    %c0_i32 = arith.constant 0 : i32
    %c0_i32_0 = arith.constant 0 : i32
    return %c0_i32, %1 : i32, i32
  }
  func.func @transform_15(%arg0: i32, %arg1: i32) -> (i32, i32, i32, i32) {
    %c0_i32 = arith.constant 0 : i32
    %c0_i32_0 = arith.constant 0 : i32
    %c0_i32_1 = arith.constant 0 : i32
    %c0_i32_2 = arith.constant 0 : i32
    return %arg0, %c0_i32, %c0_i32_0, %c0_i32_1 : i32, i32, i32, i32
  }
}

</mosaic_0001>

<llo_original>
// kernel: tpu_custom_call.1
$region0: #{tpu_custom_call.1}
  #allocation0 [shape = 'u32[]', space=smem, size = 0x4, offset = 0x4, fixed_abs, tag = 'smem constant byte address 0x4 - core index']
  #allocation1 [shape = 'u32[144,128]{1,0:T(1,128)}', space=vmem, size = 0x12000, scoped, tag = 'internal scratch']
  #allocation2 [shape = 'bf16[16,256]{1,0:T(16,128)(2,1)}', space=vmem, size = 0x2000, scoped, tag = 'scratch operand']
  %s0 = inlined_call_operand.hbm [shape: bf16[16,32], index: 0, kind: input, shape index: {}]
  %s1 = inlined_call_operand.hbm [shape: bf16[2,16,64], index: 1, kind: input, shape index: {}]
  %s2 = inlined_call_operand.hbm [shape: bf16[16,8,64], index: 2, kind: input, shape index: {}]
  %s3 = inlined_call_operand.hbm [shape: bf16[2,64,384], index: 3, kind: input, shape index: {}]
  %s4 = inlined_call_operand.vmem [shape: f32[2,1,384], index: 4, kind: input, shape index: {}]
  %s5 = inlined_call_operand.vmem [shape: f32[2,1,384], index: 5, kind: input, shape index: {}]
  %s6 = inlined_call_operand.hbm [shape: bf16[32,384], index: 6, kind: input, shape index: {}]
  %s7 = inlined_call_operand.hbm [shape: bf16[64,384], index: 7, kind: input, shape index: {}]
  %s8 = inlined_call_operand.hbm [shape: bf16[64,128], index: 8, kind: input, shape index: {}]
  %s9 = inlined_call_operand.vmem [shape: f32[1,128], index: 9, kind: input, shape index: {}]
  %s10 = inlined_call_operand.hbm [shape: bf16[128,256], index: 10, kind: input, shape index: {}]
  %s11 = inlined_call_operand.vmem [shape: f32[1,256], index: 11, kind: input, shape index: {}]
  %s12 = inlined_call_operand.hbm [shape: bf16[256,256], index: 12, kind: input, shape index: {}]
  %s13 = inlined_call_operand.vmem [shape: f32[1,256], index: 13, kind: input, shape index: {}]
  %s14 = inlined_call_operand.hbm [shape: f32[16,256], index: 14, kind: output, shape index: {0}]
  %s15 = inlined_call_operand.hbm [shape: f32[2,2,16,64], index: 15, kind: output, shape index: {1}]
  %16 = xla_tuple %s14, %s15
  %s17 = sld [smem:[#allocation0]]
  $region137: #{tpu_custom_call.1} parent=0
    _
  %s19 = ssub.s32 1, %s17
  %s20 = scalar_select 0, %s19, %s17
  $region1: #{tpu_custom_call.1} parent=0
    #allocation3 [shape = 'u8[4096]{0}', space=vmem, size = 0x1000, scoped, tag = 'input window, operand 0, single buffered']
    #allocation4 [shape = 's32[2]{0}', space=sflag, size = 0x8, scoped, tag = 'scoped memory for tpu_custom_call.1']
    #allocation5 [shape = 's32[2]{0}', space=sflag, size = 0x8, scoped, tag = 'scoped memory for tpu_custom_call.1']
    #allocation6 [shape = 'u8[8192]{0}', space=vmem, size = 0x2000, scoped, tag = 'input window, operand 1, single buffered']
    #allocation7 [shape = 's32[1]{0}', space=sflag, size = 0x4, scoped, tag = 'scoped memory for tpu_custom_call.1']
    #allocation8 [shape = 'u8[32768]{0}', space=vmem, size = 0x8000, scoped, tag = 'input window, operand 2, single buffered']
    #allocation9 [shape = 'u8[98304]{0}', space=vmem, size = 0x18000, scoped, tag = 'input window, operand 3, single buffered']
    #allocation10 [shape = 's32[1]{0}', space=sflag, size = 0x4, scoped, tag = 'scoped memory for tpu_custom_call.1']
    #allocation11 [shape = 'u8[24576]{0}', space=vmem, size = 0x6000, scoped, tag = 'input window, operand 6, single buffered']
    #allocation12 [shape = 'u8[49152]{0}', space=vmem, size = 0xc000, scoped, tag = 'input window, operand 7, single buffered']
    #allocation13 [shape = 's32[1]{0}', space=sflag, size = 0x4, scoped, tag = 'scoped memory for tpu_custom_call.1']
    #allocation14 [shape = 'u8[16384]{0}', space=vmem, size = 0x4000, scoped, tag = 'input window, operand 8, single buffered']
    #allocation15 [shape = 'u8[65536]{0}', space=vmem, size = 0x10000, scoped, tag = 'input window, operand 10, single buffered']
    #allocation16 [shape = 's32[1]{0}', space=sflag, size = 0x4, scoped, tag = 'scoped memory for tpu_custom_call.1']
    #allocation17 [shape = 'u8[131072]{0}', space=vmem, size = 0x20000, scoped, tag = 'input window, operand 12']
    #allocation18 [shape = 'u8[16384]{0}', space=vmem, size = 0x4000, scoped, tag = 'output window, operand 0']
    #allocation19 [shape = 'u8[32768]{0}', space=vmem, size = 0x8000, scoped, tag = 'output window, operand 1']
    #allocation20 [shape = 's32[2]{0}', space=sflag, size = 0x8, scoped, tag = 'scoped memory for tpu_custom_call.1']
    %21 = vsyncpa [#allocation4], 0
    %22 = vsyncpa [#allocation7], 0
    %23 = vsyncpa [#allocation10], 0
    %24 = vsyncpa [#allocation13], 0
    %25 = vsyncpa [#allocation16], 0
    %26 = vsyncpa [#allocation5], 0
    %s27 = scalar_lea.sflag [#allocation5], 1
    %28 = vsyncpa %s27, 0
    %29 = vsyncpa [#allocation20], 0
    %s30 = scalar_lea.sflag [#allocation20], 1
    %31 = vsyncpa %s30, 0
    loop: start=0, step=1, limit=4
    $region2: #{tpu_custom_call.1} parent=1 // loop_pre_header
      _
    $region3: #{tpu_custom_call.1} parent=1 // loop_header
      %s33 = sphi 0, %s37
      %p34 = scmp.ge.s32.totalorder %s33, 4
      %s40 = sphi 0, %s52
      %s41 = sphi 0, %s48
      %s42 = sphi 0, %s40
      %s43 = sphi 0, %s41
      %s44 = sphi 0, %s42
      %s45 = sphi 0, %s43
      %s53 = sphi 0, %s53
      %s55 = sphi 0, %s53
      %s56 = sphi 0, %s55
      %s70 = sphi 0, %s56
      %s74 = sphi 0, %s74
      %s76 = sphi 0, %s74
      %s77 = sphi 0, %s76
      %s91 = sphi 0, %s77
      %s95 = sphi 0, %s95
      %s97 = sphi 0, %s95
      %s98 = sphi 0, %s97
      %s112 = sphi 0, %s98
      %s116 = sphi 0, %s116
      %s118 = sphi 0, %s116
      %s119 = sphi 0, %s118
      %s133 = sphi 0, %s119
      %s137 = sphi 0, %s137
      %s139 = sphi 0, %s137
      %s140 = sphi 0, %s139
      %s154 = sphi 0, %s140
      %s158 = sphi 0, %s158
      %s160 = sphi 0, %s158
      %s161 = sphi 0, %s160
      %s175 = sphi 0, %s161
      %s179 = sphi 0, %s179
      %s181 = sphi 0, %s179
      %s182 = sphi 0, %s181
      %s196 = sphi 0, %s182
      %s200 = sphi 0, %s200
      %s202 = sphi 0, %s200
      %s203 = sphi 0, %s202
      %s217 = sphi 0, %s203
      %s221 = sphi 0, %s221
      %s223 = sphi 0, %s221
      %s224 = sphi 0, %s223
      %s238 = sphi 0, %s224
      %s242 = sphi 0, %s242
      %s244 = sphi 0, %s242
      %s245 = sphi 0, %s244
      %s259 = sphi 0, %s245
      %s263 = sphi 0, %s263
      %s265 = sphi 0, %s263
      %s266 = sphi 0, %s265
      %s280 = sphi 0, %s266
      %s284 = sphi 0, %s284
      %s286 = sphi 0, %s284
      %s287 = sphi 0, %s286
      %s301 = sphi 0, %s287
      %s309 = sphi 0, %s311
      %s312 = sphi 0, %s309
      %s313 = sphi 0, %s312
      %s329 = sphi 0, %s313
      %s337 = sphi 0, %s339
      %s340 = sphi 0, %s337
      %s341 = sphi 0, %s340
      %s357 = sphi 0, %s341
      %s365 = sphi 0, %s367
      %s368 = sphi 0, %s365
      %s369 = sphi 0, %s368
      %s385 = sphi 0, %s369
      %s391 = sphi 0, %s393
      %s394 = sphi 0, %s391
      %s395 = sphi 0, %s394
      %s411 = sphi 0, %s395
    $region4: #{tpu_custom_call.1} parent=1 // loop_header_branch
      %36 = sbr.rel (%p34) target = $region8
    $region5: #{tpu_custom_call.1} parent=1 // loop_body
      %s38 = ssub.s32 %s33, 1
      %s39 = ssub.s32 %s33, 2
      %s46 = sadd.s32 1, %s41
      %p47 = scmp.ge.s32.totalorder %s46, 1
      %s48 = scalar_select %p47, 0, %s46
      %s49 = sadd.s32 1, %s40
      %s50 = scalar_select %p47, %s49, %s40
      %p51 = scmp.ge.s32.totalorder %s50, 2
      %s52 = scalar_select %p51, 0, %s50
      %s54 = sadd.s32 %s53, 1
      %p57 = scmp.eq.s32.totalorder %s33, 1
      %p58 = scmp.ne.s32.totalorder %s53, %s55
      %p59 = scmp.eq.s32.totalorder %s33, 0
      %p60 = por %p58, %p59
      %p61 = scmp.ne.s32.totalorder %s53, %s55
      %p62 = scmp.eq.s32.totalorder %s38, 1
      %p63 = por %p61, %p62
      %p64 = scmp.ne.s32.totalorder %s55, %s56
      %p65 = scmp.eq.s32.totalorder %s38, 0
      %p66 = por %p64, %p65
      %p67 = scmp.ne.s32.totalorder %s55, %s56
      %p68 = scmp.eq.s32.totalorder %s39, 1
      %p69 = por %p67, %p68
      %p71 = scmp.ne.s32.totalorder %s56, %s70
      %p72 = scmp.eq.s32.totalorder %s39, 0
      %p73 = por %p71, %p72
      %s75 = sadd.s32 %s74, 1
      %p78 = scmp.eq.s32.totalorder %s33, 1
      %p79 = scmp.ne.s32.totalorder %s74, %s76
      %p80 = scmp.eq.s32.totalorder %s33, 0
      %p81 = por %p79, %p80
      %p82 = scmp.ne.s32.totalorder %s74, %s76
      %p83 = scmp.eq.s32.totalorder %s38, 1
      %p84 = por %p82, %p83
      %p85 = scmp.ne.s32.totalorder %s76, %s77
      %p86 = scmp.eq.s32.totalorder %s38, 0
      %p87 = por %p85, %p86
      %p88 = scmp.ne.s32.totalorder %s76, %s77
      %p89 = scmp.eq.s32.totalorder %s39, 1
      %p90 = por %p88, %p89
      %p92 = scmp.ne.s32.totalorder %s77, %s91
      %p93 = scmp.eq.s32.totalorder %s39, 0
      %p94 = por %p92, %p93
      %s96 = sadd.s32 %s95, 1
      %p99 = scmp.eq.s32.totalorder %s33, 1
      %p100 = scmp.ne.s32.totalorder %s95, %s97
      %p101 = scmp.eq.s32.totalorder %s33, 0
      %p102 = por %p100, %p101
      %p103 = scmp.ne.s32.totalorder %s95, %s97
      %p104 = scmp.eq.s32.totalorder %s38, 1
      %p105 = por %p103, %p104
      %p106 = scmp.ne.s32.totalorder %s97, %s98
      %p107 = scmp.eq.s32.totalorder %s38, 0
      %p108 = por %p106, %p107
      %p109 = scmp.ne.s32.totalorder %s97, %s98
      %p110 = scmp.eq.s32.totalorder %s39, 1
      %p111 = por %p109, %p110
      %p113 = scmp.ne.s32.totalorder %s98, %s112
      %p114 = scmp.eq.s32.totalorder %s39, 0
      %p115 = por %p113, %p114
      %s117 = sadd.s32 %s116, 1
      %p120 = scmp.eq.s32.totalorder %s33, 1
      %p121 = scmp.ne.s32.totalorder %s116, %s118
      %p122 = scmp.eq.s32.totalorder %s33, 0
      %p123 = por %p121, %p122
      %p124 = scmp.ne.s32.totalorder %s116, %s118
      %p125 = scmp.eq.s32.totalorder %s38, 1
      %p126 = por %p124, %p125
      %p127 = scmp.ne.s32.totalorder %s118, %s119
      %p128 = scmp.eq.s32.totalorder %s38, 0
      %p129 = por %p127, %p128
      %p130 = scmp.ne.s32.totalorder %s118, %s119
      %p131 = scmp.eq.s32.totalorder %s39, 1
      %p132 = por %p130, %p131
      %p134 = scmp.ne.s32.totalorder %s119, %s133
      %p135 = scmp.eq.s32.totalorder %s39, 0
      %p136 = por %p134, %p135
      %s138 = sadd.s32 %s137, 1
      %p141 = scmp.eq.s32.totalorder %s33, 1
      %p142 = scmp.ne.s32.totalorder %s137, %s139
      %p143 = scmp.eq.s32.totalorder %s33, 0
      %p144 = por %p142, %p143
      %p145 = scmp.ne.s32.totalorder %s137, %s139
      %p146 = scmp.eq.s32.totalorder %s38, 1
      %p147 = por %p145, %p146
      %p148 = scmp.ne.s32.totalorder %s139, %s140
      %p149 = scmp.eq.s32.totalorder %s38, 0
      %p150 = por %p148, %p149
      %p151 = scmp.ne.s32.totalorder %s139, %s140
      %p152 = scmp.eq.s32.totalorder %s39, 1
      %p153 = por %p151, %p152
      %p155 = scmp.ne.s32.totalorder %s140, %s154
      %p156 = scmp.eq.s32.totalorder %s39, 0
      %p157 = por %p155, %p156
      %s159 = sadd.s32 %s158, 1
      %p162 = scmp.eq.s32.totalorder %s33, 1
      %p163 = scmp.ne.s32.totalorder %s158, %s160
      %p164 = scmp.eq.s32.totalorder %s33, 0
      %p165 = por %p163, %p164
      %p166 = scmp.ne.s32.totalorder %s158, %s160
      %p167 = scmp.eq.s32.totalorder %s38, 1
      %p168 = por %p166, %p167
      %p169 = scmp.ne.s32.totalorder %s160, %s161
      %p170 = scmp.eq.s32.totalorder %s38, 0
      %p171 = por %p169, %p170
      %p172 = scmp.ne.s32.totalorder %s160, %s161
      %p173 = scmp.eq.s32.totalorder %s39, 1
      %p174 = por %p172, %p173
      %p176 = scmp.ne.s32.totalorder %s161, %s175
      %p177 = scmp.eq.s32.totalorder %s39, 0
      %p178 = por %p176, %p177
      %s180 = sadd.s32 %s179, 1
      %p183 = scmp.eq.s32.totalorder %s33, 1
      %p184 = scmp.ne.s32.totalorder %s179, %s181
      %p185 = scmp.eq.s32.totalorder %s33, 0
      %p186 = por %p184, %p185
      %p187 = scmp.ne.s32.totalorder %s179, %s181
      %p188 = scmp.eq.s32.totalorder %s38, 1
      %p189 = por %p187, %p188
      %p190 = scmp.ne.s32.totalorder %s181, %s182
      %p191 = scmp.eq.s32.totalorder %s38, 0
      %p192 = por %p190, %p191
      %p193 = scmp.ne.s32.totalorder %s181, %s182
      %p194 = scmp.eq.s32.totalorder %s39, 1
      %p195 = por %p193, %p194
      %p197 = scmp.ne.s32.totalorder %s182, %s196
      %p198 = scmp.eq.s32.totalorder %s39, 0
      %p199 = por %p197, %p198
      %s201 = sadd.s32 %s200, 1
      %p204 = scmp.eq.s32.totalorder %s33, 1
      %p205 = scmp.ne.s32.totalorder %s200, %s202
      %p206 = scmp.eq.s32.totalorder %s33, 0
      %p207 = por %p205, %p206
      %p208 = scmp.ne.s32.totalorder %s200, %s202
      %p209 = scmp.eq.s32.totalorder %s38, 1
      %p210 = por %p208, %p209
      %p211 = scmp.ne.s32.totalorder %s202, %s203
      %p212 = scmp.eq.s32.totalorder %s38, 0
      %p213 = por %p211, %p212
      %p214 = scmp.ne.s32.totalorder %s202, %s203
      %p215 = scmp.eq.s32.totalorder %s39, 1
      %p216 = por %p214, %p215
      %p218 = scmp.ne.s32.totalorder %s203, %s217
      %p219 = scmp.eq.s32.totalorder %s39, 0
      %p220 = por %p218, %p219
      %s222 = sadd.s32 %s221, 1
      %p225 = scmp.eq.s32.totalorder %s33, 1
      %p226 = scmp.ne.s32.totalorder %s221, %s223
      %p227 = scmp.eq.s32.totalorder %s33, 0
      %p228 = por %p226, %p227
      %p229 = scmp.ne.s32.totalorder %s221, %s223
      %p230 = scmp.eq.s32.totalorder %s38, 1
      %p231 = por %p229, %p230
      %p232 = scmp.ne.s32.totalorder %s223, %s224
      %p233 = scmp.eq.s32.totalorder %s38, 0
      %p234 = por %p232, %p233
      %p235 = scmp.ne.s32.totalorder %s223, %s224
      %p236 = scmp.eq.s32.totalorder %s39, 1
      %p237 = por %p235, %p236
      %p239 = scmp.ne.s32.totalorder %s224, %s238
      %p240 = scmp.eq.s32.totalorder %s39, 0
      %p241 = por %p239, %p240
      %s243 = sadd.s32 %s242, 1
      %p246 = scmp.eq.s32.totalorder %s33, 1
      %p247 = scmp.ne.s32.totalorder %s242, %s244
      %p248 = scmp.eq.s32.totalorder %s33, 0
      %p249 = por %p247, %p248
      %p250 = scmp.ne.s32.totalorder %s242, %s244
      %p251 = scmp.eq.s32.totalorder %s38, 1
      %p252 = por %p250, %p251
      %p253 = scmp.ne.s32.totalorder %s244, %s245
      %p254 = scmp.eq.s32.totalorder %s38, 0
      %p255 = por %p253, %p254
      %p256 = scmp.ne.s32.totalorder %s244, %s245
      %p257 = scmp.eq.s32.totalorder %s39, 1
      %p258 = por %p256, %p257
      %p260 = scmp.ne.s32.totalorder %s245, %s259
      %p261 = scmp.eq.s32.totalorder %s39, 0
      %p262 = por %p260, %p261
      %s264 = sadd.s32 %s263, 1
      %p267 = scmp.eq.s32.totalorder %s33, 1
      %p268 = scmp.ne.s32.totalorder %s263, %s265
      %p269 = scmp.eq.s32.totalorder %s33, 0
      %p270 = por %p268, %p269
      %p271 = scmp.ne.s32.totalorder %s263, %s265
      %p272 = scmp.eq.s32.totalorder %s38, 1
      %p273 = por %p271, %p272
      %p274 = scmp.ne.s32.totalorder %s265, %s266
      %p275 = scmp.eq.s32.totalorder %s38, 0
      %p276 = por %p274, %p275
      %p277 = scmp.ne.s32.totalorder %s265, %s266
      %p278 = scmp.eq.s32.totalorder %s39, 1
      %p279 = por %p277, %p278
      %p281 = scmp.ne.s32.totalorder %s266, %s280
      %p282 = scmp.eq.s32.totalorder %s39, 0
      %p283 = por %p281, %p282
      %s285 = sadd.s32 %s284, 1
      %p288 = scmp.eq.s32.totalorder %s33, 1
      %p289 = scmp.ne.s32.totalorder %s284, %s286
      %p290 = scmp.eq.s32.totalorder %s33, 0
      %p291 = por %p289, %p290
      %p292 = scmp.ne.s32.totalorder %s284, %s286
      %p293 = scmp.eq.s32.totalorder %s38, 1
      %p294 = por %p292, %p293
      %p295 = scmp.ne.s32.totalorder %s286, %s287
      %p296 = scmp.eq.s32.totalorder %s38, 0
      %p297 = por %p295, %p296
      %p298 = scmp.ne.s32.totalorder %s286, %s287
      %p299 = scmp.eq.s32.totalorder %s39, 1
      %p300 = por %p298, %p299
      %p302 = scmp.ne.s32.totalorder %s287, %s301
      %p303 = scmp.eq.s32.totalorder %s39, 0
      %p304 = por %p302, %p303
      %s305 = sadd.s32 %s40, %s41
      %s306 = sadd.s32 %s52, %s48
      %s307 = ssub.s32 %s305, %s306
      %p308 = scmp.eq.s32.totalorder %s307, 0
      %s310 = sadd.s32 %s309, 1
      %s311 = scalar_select %p308, %s309, %s310
      %p314 = pneg %p308
      %p315 = scmp.eq.s32.totalorder %s33, 1
      %p316 = por %p314, %p315
      %p317 = scmp.ne.s32.totalorder %s309, %s312
      %p318 = scmp.eq.s32.totalorder %s33, 0
      %p319 = por %p317, %p318
      %p320 = scmp.ne.s32.totalorder %s309, %s312
      %p321 = scmp.eq.s32.totalorder %s38, 1
      %p322 = por %p320, %p321
      %p323 = scmp.ne.s32.totalorder %s312, %s313
      %p324 = scmp.eq.s32.totalorder %s38, 0
      %p325 = por %p323, %p324
      %p326 = scmp.ne.s32.totalorder %s312, %s313
      %p327 = scmp.eq.s32.totalorder %s39, 1
      %p328 = por %p326, %p327
      %p330 = scmp.ne.s32.totalorder %s313, %s329
      %p331 = scmp.eq.s32.totalorder %s39, 0
      %p332 = por %p330, %p331
      %s333 = sadd.s32 %s40, %s41
      %s334 = sadd.s32 %s52, %s48
      %s335 = ssub.s32 %s333, %s334
      %p336 = scmp.eq.s32.totalorder %s335, 0
      %s338 = sadd.s32 %s337, 1
      %s339 = scalar_select %p336, %s337, %s338
      %p342 = pneg %p336
      %p343 = scmp.eq.s32.totalorder %s33, 1
      %p344 = por %p342, %p343
      %p345 = scmp.ne.s32.totalorder %s337, %s340
      %p346 = scmp.eq.s32.totalorder %s33, 0
      %p347 = por %p345, %p346
      %p348 = scmp.ne.s32.totalorder %s337, %s340
      %p349 = scmp.eq.s32.totalorder %s38, 1
      %p350 = por %p348, %p349
      %p351 = scmp.ne.s32.totalorder %s340, %s341
      %p352 = scmp.eq.s32.totalorder %s38, 0
      %p353 = por %p351, %p352
      %p354 = scmp.ne.s32.totalorder %s340, %s341
      %p355 = scmp.eq.s32.totalorder %s39, 1
      %p356 = por %p354, %p355
      %p358 = scmp.ne.s32.totalorder %s341, %s357
      %p359 = scmp.eq.s32.totalorder %s39, 0
      %p360 = por %p358, %p359
      %s361 = sadd.s32 %s40, %s41
      %s362 = sadd.s32 %s52, %s48
      %s363 = ssub.s32 %s361, %s362
      %p364 = scmp.eq.s32.totalorder %s363, 0
      %s366 = sadd.s32 %s365, 1
      %s367 = scalar_select %p364, %s365, %s366
      %p370 = pneg %p364
      %p371 = scmp.eq.s32.totalorder %s33, 1
      %p372 = por %p370, %p371
      %p373 = scmp.ne.s32.totalorder %s365, %s368
      %p374 = scmp.eq.s32.totalorder %s33, 0
      %p375 = por %p373, %p374
      %p376 = scmp.ne.s32.totalorder %s365, %s368
      %p377 = scmp.eq.s32.totalorder %s38, 1
      %p378 = por %p376, %p377
      %p379 = scmp.ne.s32.totalorder %s368, %s369
      %p380 = scmp.eq.s32.totalorder %s38, 0
      %p381 = por %p379, %p380
      %p382 = scmp.ne.s32.totalorder %s368, %s369
      %p383 = scmp.eq.s32.totalorder %s39, 1
      %p384 = por %p382, %p383
      %p386 = scmp.ne.s32.totalorder %s369, %s385
      %p387 = scmp.eq.s32.totalorder %s39, 0
      %p388 = por %p386, %p387
      %s389 = ssub.s32 %s40, %s52
      %p390 = scmp.eq.s32.totalorder %s389, 0
      %s392 = sadd.s32 %s391, 1
      %s393 = scalar_select %p390, %s391, %s392
      %p396 = pneg %p390
      %p397 = scmp.eq.s32.totalorder %s33, 1
      %p398 = por %p396, %p397
      %p399 = scmp.ne.s32.totalorder %s391, %s394
      %p400 = scmp.eq.s32.totalorder %s33, 0
      %p401 = por %p399, %p400
      %p402 = scmp.ne.s32.totalorder %s391, %s394
      %p403 = scmp.eq.s32.totalorder %s38, 1
      %p404 = por %p402, %p403
      %p405 = scmp.ne.s32.totalorder %s394, %s395
      %p406 = scmp.eq.s32.totalorder %s38, 0
      %p407 = por %p405, %p406
      %p408 = scmp.ne.s32.totalorder %s394, %s395
      %p409 = scmp.eq.s32.totalorder %s39, 1
      %p410 = por %p408, %p409
      %p412 = scmp.ne.s32.totalorder %s395, %s411
      %p413 = scmp.eq.s32.totalorder %s39, 0
      %p414 = por %p412, %p413
      %p415 = scmp.le.s32.totalorder 1, %s33
      %p416 = scmp.lt.s32.totalorder %s33, 3
      %p417 = pnand %p415, %p416
      %p418 = pneg %p417
      // Predicated region
      $region9: #{tpu_custom_call.1} parent=5 // pred_check
        _
      $region10: #{tpu_custom_call.1} parent=5 // pred_check_branch
        %420 = sbr.rel (%p417) target = $region12
      $region11: #{tpu_custom_call.1} parent=5 // pred_region
        %s421 = ssub.s32 %s33, 1
        // Predicated region
        $region13: #{tpu_custom_call.1} parent=11 // pred_check
          %p422 = pneg %p66
        $region14: #{tpu_custom_call.1} parent=11 // pred_check_branch
          %424 = sbr.rel (%p422) target = $region16
        $region15: #{tpu_custom_call.1} parent=11 // pred_region
          %s426 = ssub.s32 128, 128
          %427 = vsyncadd [#allocation4], %s426
          %s428 = sshll.u32 [#allocation3], 4
          %s429 = int_to_ptr.vmem [resolvable:$true] %s428
          %434 = dma.hbm_to_vmem [thread:$0]  %s0, 128, %s429, [#allocation4], 64, 64, 4
        $region16: #{tpu_custom_call.1} parent=11 // pred_fallthru
          _
        // Predicated region
        $region17: #{tpu_custom_call.1} parent=11 // pred_check
          %p435 = pneg %p87
        $region18: #{tpu_custom_call.1} parent=11 // pred_check_branch
          %437 = sbr.rel (%p435) target = $region20
        $region19: #{tpu_custom_call.1} parent=11 // pred_region
          %s439 = ssub.s32 256, 256
          %440 = vsyncadd [#allocation7], %s439
          %s441 = sshll.u32 [#allocation6], 4
          %s442 = int_to_ptr.vmem [resolvable:$true] %s441
          %447 = dma.hbm_to_vmem [thread:$0]  %s1, 256, %s442, [#allocation7], 64, 64, 4
        $region20: #{tpu_custom_call.1} parent=11 // pred_fallthru
          _
        // Predicated region
        $region21: #{tpu_custom_call.1} parent=11 // pred_check
          %p448 = pneg %p108
        $region22: #{tpu_custom_call.1} parent=11 // pred_check_branch
          %450 = sbr.rel (%p448) target = $region24
        $region23: #{tpu_custom_call.1} parent=11 // pred_region
          %s452 = ssub.s32 1024, 1024
          %453 = vsyncadd [#allocation7], %s452
          %s454 = sshll.u32 [#allocation8], 4
          %s455 = int_to_ptr.vmem [resolvable:$true] %s454
          %460 = dma.hbm_to_vmem [thread:$0]  %s2, 1024, %s455, [#allocation7], 64, 64, 4
        $region24: #{tpu_custom_call.1} parent=11 // pred_fallthru
          _
        // Predicated region
        $region25: #{tpu_custom_call.1} parent=11 // pred_check
          %p461 = pneg %p129
        $region26: #{tpu_custom_call.1} parent=11 // pred_check_branch
          %463 = sbr.rel (%p461) target = $region28
        $region27: #{tpu_custom_call.1} parent=11 // pred_region
          %s465 = ssub.s32 3072, 3072
          %466 = vsyncadd [#allocation10], %s465
          %s467 = sshll.u32 [#allocation9], 4
          %s468 = int_to_ptr.vmem [resolvable:$true] %s467
          %473 = dma.hbm_to_vmem [thread:$0]  %s3, 3072, %s468, [#allocation10], 192, 192, 12
        $region28: #{tpu_custom_call.1} parent=11 // pred_fallthru
          _
        // Predicated region
        $region29: #{tpu_custom_call.1} parent=11 // pred_check
          %p474 = pneg %p150
        $region30: #{tpu_custom_call.1} parent=11 // pred_check_branch
          %476 = sbr.rel (%p474) target = $region32
        $region31: #{tpu_custom_call.1} parent=11 // pred_region
          _
        $region32: #{tpu_custom_call.1} parent=11 // pred_fallthru
          _
        // Predicated region
        $region33: #{tpu_custom_call.1} parent=11 // pred_check
          %p477 = pneg %p171
        $region34: #{tpu_custom_call.1} parent=11 // pred_check_branch
          %479 = sbr.rel (%p477) target = $region36
        $region35: #{tpu_custom_call.1} parent=11 // pred_region
          _
        $region36: #{tpu_custom_call.1} parent=11 // pred_fallthru
          _
        // Predicated region
        $region37: #{tpu_custom_call.1} parent=11 // pred_check
          %p480 = pneg %p192
        $region38: #{tpu_custom_call.1} parent=11 // pred_check_branch
          %482 = sbr.rel (%p480) target = $region40
        $region39: #{tpu_custom_call.1} parent=11 // pred_region
          %s484 = ssub.s32 768, 768
          %485 = vsyncadd [#allocation10], %s484
          %s486 = sshll.u32 [#allocation11], 4
          %s487 = int_to_ptr.vmem [resolvable:$true] %s486
          %492 = dma.hbm_to_vmem [thread:$0]  %s6, 768, %s487, [#allocation10], 192, 192, 12
        $region40: #{tpu_custom_call.1} parent=11 // pred_fallthru
          _
        // Predicated region
        $region41: #{tpu_custom_call.1} parent=11 // pred_check
          %p493 = pneg %p213
        $region42: #{tpu_custom_call.1} parent=11 // pred_check_branch
          %495 = sbr.rel (%p493) target = $region44
        $region43: #{tpu_custom_call.1} parent=11 // pred_region
          %s497 = ssub.s32 1536, 1536
          %498 = vsyncadd [#allocation13], %s497
          %s499 = sshll.u32 [#allocation12], 4
          %s500 = int_to_ptr.vmem [resolvable:$true] %s499
          %505 = dma.hbm_to_vmem [thread:$0]  %s7, 1536, %s500, [#allocation13], 192, 192, 12
        $region44: #{tpu_custom_call.1} parent=11 // pred_fallthru
          _
        // Predicated region
        $region45: #{tpu_custom_call.1} parent=11 // pred_check
          %p506 = pneg %p234
        $region46: #{tpu_custom_call.1} parent=11 // pred_check_branch
          %508 = sbr.rel (%p506) target = $region48
        $region47: #{tpu_custom_call.1} parent=11 // pred_region
          %s510 = ssub.s32 512, 512
          %511 = vsyncadd [#allocation13], %s510
          %s512 = sshll.u32 [#allocation14], 4
          %s513 = int_to_ptr.vmem [resolvable:$true] %s512
          %518 = dma.hbm_to_vmem [thread:$0]  %s8, 512, %s513, [#allocation13], 64, 64, 4
        $region48: #{tpu_custom_call.1} parent=11 // pred_fallthru
          _
        // Predicated region
        $region49: #{tpu_custom_call.1} parent=11 // pred_check
          %p519 = pneg %p255
        $region50: #{tpu_custom_call.1} parent=11 // pred_check_branch
          %521 = sbr.rel (%p519) target = $region52
        $region51: #{tpu_custom_call.1} parent=11 // pred_region
          _
        $region52: #{tpu_custom_call.1} parent=11 // pred_fallthru
          _
        // Predicated region
        $region53: #{tpu_custom_call.1} parent=11 // pred_check
          %p522 = pneg %p276
        $region54: #{tpu_custom_call.1} parent=11 // pred_check_branch
          %524 = sbr.rel (%p522) target = $region56
        $region55: #{tpu_custom_call.1} parent=11 // pred_region
          %s526 = ssub.s32 2048, 2048
          %527 = vsyncadd [#allocation16], %s526
          %s528 = sshll.u32 [#allocation15], 4
          %s529 = int_to_ptr.vmem [resolvable:$true] %s528
          %534 = dma.hbm_to_vmem [thread:$0]  %s10, 2048, %s529, [#allocation16], 128, 128, 8
        $region56: #{tpu_custom_call.1} parent=11 // pred_fallthru
          _
        // Predicated region
        $region57: #{tpu_custom_call.1} parent=11 // pred_check
          %p535 = pneg %p297
        $region58: #{tpu_custom_call.1} parent=11 // pred_check_branch
          %537 = sbr.rel (%p535) target = $region60
        $region59: #{tpu_custom_call.1} parent=11 // pred_region
          _
        $region60: #{tpu_custom_call.1} parent=11 // pred_fallthru
          _
      $region12: #{tpu_custom_call.1} parent=5 // pred_fallthru
        _
      %p538 = scmp.lt.s32.totalorder %s33, 2
      // Predicated region
      $region61: #{tpu_custom_call.1} parent=5 // pred_check
        %p539 = pneg %p538
      $region62: #{tpu_custom_call.1} parent=5 // pred_check_branch
        %541 = sbr.rel (%p539) target = $region64
      $region63: #{tpu_custom_call.1} parent=5 // pred_region
        // Predicated region
        $region65: #{tpu_custom_call.1} parent=63 // pred_check
          %p542 = pneg %p319
        $region66: #{tpu_custom_call.1} parent=63 // pred_check_branch
          %544 = sbr.rel (%p542) target = $region68
        $region67: #{tpu_custom_call.1} parent=63 // pred_region
          %s545 = sand.u32 %s33, 1
          %s546 = scalar_lea.sflag [#allocation4], %s545
          %s547 = sand.u32 %s309, 1
          %s548 = smul.addr %s547, 128
          %s549 = scalar_lea.vmem [#allocation17], %s548
          %s550 = sadd.s32 %s40, %s41
          %s552 = ssub.s32 2048, 2048
          %553 = vsyncadd %s546, %s552
          %s554 = smul.addr %s550, 64
          %s555 = scalar_lea.hbm %s12, %s554
          %s556 = sshll.u32 %s549, 4
          %s557 = int_to_ptr.vmem [resolvable:$true] %s556
          %562 = dma.hbm_to_vmem [thread:$0]  %s555, 2048, %s557, %s546, 128, 64, 4
        $region68: #{tpu_custom_call.1} parent=63 // pred_fallthru
          _
        // Predicated region
        $region69: #{tpu_custom_call.1} parent=63 // pred_check
          %p563 = pneg %p347
        $region70: #{tpu_custom_call.1} parent=63 // pred_check_branch
          %565 = sbr.rel (%p563) target = $region72
        $region71: #{tpu_custom_call.1} parent=63 // pred_region
          %s566 = sadd.s32 %s40, %s41
          %p567 = scmp.lt.s32.totalorder %s566, 1
          %s568 = scalar_select %p567, %s566, 1
          %s569 = scalar_lea.vmem %s13, %s568
          %s570 = sadd.s32 %s40, %s41
        $region72: #{tpu_custom_call.1} parent=63 // pred_fallthru
          _
      $region64: #{tpu_custom_call.1} parent=5 // pred_fallthru
        _
      %p571 = scmp.le.s32.totalorder 1, %s33
      %p572 = scmp.lt.s32.totalorder %s33, 3
      %p573 = pnand %p571, %p572
      %p574 = pneg %p573
      // Predicated region
      $region73: #{tpu_custom_call.1} parent=5 // pred_check
        _
      $region74: #{tpu_custom_call.1} parent=5 // pred_check_branch
        %576 = sbr.rel (%p573) target = $region76
      $region75: #{tpu_custom_call.1} parent=5 // pred_region
        %s577 = ssub.s32 %s33, 1
        // Predicated region
        $region77: #{tpu_custom_call.1} parent=75 // pred_check
          %p578 = pneg %p66
        $region78: #{tpu_custom_call.1} parent=75 // pred_check_branch
          %580 = sbr.rel (%p578) target = $region80
        $region79: #{tpu_custom_call.1} parent=75 // pred_region
          %581 = dma.done [#allocation4], 128
        $region80: #{tpu_custom_call.1} parent=75 // pred_fallthru
          _
        // Predicated region
        $region81: #{tpu_custom_call.1} parent=75 // pred_check
          %p582 = pneg %p87
        $region82: #{tpu_custom_call.1} parent=75 // pred_check_branch
          %584 = sbr.rel (%p582) target = $region84
        $region83: #{tpu_custom_call.1} parent=75 // pred_region
          %585 = dma.done [#allocation7], 256
        $region84: #{tpu_custom_call.1} parent=75 // pred_fallthru
          _
        // Predicated region
        $region85: #{tpu_custom_call.1} parent=75 // pred_check
          %p586 = pneg %p108
        $region86: #{tpu_custom_call.1} parent=75 // pred_check_branch
          %588 = sbr.rel (%p586) target = $region88
        $region87: #{tpu_custom_call.1} parent=75 // pred_region
          %589 = dma.done [#allocation7], 1024
        $region88: #{tpu_custom_call.1} parent=75 // pred_fallthru
          _
        // Predicated region
        $region89: #{tpu_custom_call.1} parent=75 // pred_check
          %p590 = pneg %p129
        $region90: #{tpu_custom_call.1} parent=75 // pred_check_branch
          %592 = sbr.rel (%p590) target = $region92
        $region91: #{tpu_custom_call.1} parent=75 // pred_region
          %593 = dma.done [#allocation10], 3072
        $region92: #{tpu_custom_call.1} parent=75 // pred_fallthru
          _
        // Predicated region
        $region93: #{tpu_custom_call.1} parent=75 // pred_check
          %p594 = pneg %p192
        $region94: #{tpu_custom_call.1} parent=75 // pred_check_branch
          %596 = sbr.rel (%p594) target = $region96
        $region95: #{tpu_custom_call.1} parent=75 // pred_region
          %597 = dma.done [#allocation10], 768
        $region96: #{tpu_custom_call.1} parent=75 // pred_fallthru
          _
        // Predicated region
        $region97: #{tpu_custom_call.1} parent=75 // pred_check
          %p598 = pneg %p213
        $region98: #{tpu_custom_call.1} parent=75 // pred_check_branch
          %600 = sbr.rel (%p598) target = $region100
        $region99: #{tpu_custom_call.1} parent=75 // pred_region
          %601 = dma.done [#allocation13], 1536
        $region100: #{tpu_custom_call.1} parent=75 // pred_fallthru
          _
        // Predicated region
        $region101: #{tpu_custom_call.1} parent=75 // pred_check
          %p602 = pneg %p234
        $region102: #{tpu_custom_call.1} parent=75 // pred_check_branch
          %604 = sbr.rel (%p602) target = $region104
        $region103: #{tpu_custom_call.1} parent=75 // pred_region
          %605 = dma.done [#allocation13], 512
        $region104: #{tpu_custom_call.1} parent=75 // pred_fallthru
          _
        // Predicated region
        $region105: #{tpu_custom_call.1} parent=75 // pred_check
          %p606 = pneg %p276
        $region106: #{tpu_custom_call.1} parent=75 // pred_check_branch
          %608 = sbr.rel (%p606) target = $region108
        $region107: #{tpu_custom_call.1} parent=75 // pred_region
          %609 = dma.done [#allocation16], 2048
        $region108: #{tpu_custom_call.1} parent=75 // pred_fallthru
          _
        %s610 = sand.u32 %s38, 1
        %s611 = scalar_lea.sflag [#allocation4], %s610
        %s612 = sand.u32 %s312, 1
        %s613 = smul.addr %s612, 128
        %s614 = scalar_lea.vmem [#allocation17], %s613
        // Predicated region
        $region109: #{tpu_custom_call.1} parent=75 // pred_check
          %p615 = pneg %p325
        $region110: #{tpu_custom_call.1} parent=75 // pred_check_branch
          %617 = sbr.rel (%p615) target = $region112
        $region111: #{tpu_custom_call.1} parent=75 // pred_region
          %618 = dma.done %s611, 2048
        $region112: #{tpu_custom_call.1} parent=75 // pred_fallthru
          _
        %p619 = pneg %p66
        %p620 = pneg %p63
        %p621 = pneg %p87
        %p622 = pneg %p84
        %p623 = pneg %p108
        %p624 = pneg %p105
        %p625 = pneg %p129
        %p626 = pneg %p126
        %p627 = pneg %p150
        %p628 = pneg %p147
        %p629 = pneg %p171
        %p630 = pneg %p168
        %p631 = pneg %p192
        %p632 = pneg %p189
        %p633 = pneg %p213
        %p634 = pneg %p210
        %p635 = pneg %p234
        %p636 = pneg %p231
        %p637 = pneg %p255
        %p638 = pneg %p252
        %p639 = pneg %p276
        %p640 = pneg %p273
        %p641 = pneg %p297
        %p642 = pneg %p294
        %s643 = sand.u32 %s38, 1
        %s644 = scalar_lea.sflag [#allocation4], %s643
        %s645 = sand.u32 %s312, 1
        %s646 = smul.addr %s645, 128
        %s647 = scalar_lea.vmem [#allocation17], %s646
        %p648 = pneg %p325
        %p649 = pneg %p322
        %s650 = sadd.s32 %s42, %s43
        %p651 = scmp.lt.s32.totalorder %s650, 1
        %s652 = scalar_select %p651, %s650, 1
        %s653 = scalar_lea.vmem %s13, %s652
        %p654 = pneg %p353
        %p655 = pneg %p350
        %p656 = pneg %p381
        %p657 = pneg %p378
        %s658 = sand.u32 %s368, 1
        %s659 = scalar_lea.sflag [#allocation5], %s658
        %s660 = sand.u32 %s368, 1
        %s661 = smul.addr %s660, 16
        %s662 = scalar_lea.vmem [#allocation18], %s661
        %p663 = pneg %p407
        %p664 = pneg %p404
        %s665 = sand.u32 %s394, 1
        %s666 = scalar_lea.sflag [#allocation20], %s665
        %s667 = sand.u32 %s394, 1
        %s668 = smul.addr %s667, 32
        %s669 = scalar_lea.vmem [#allocation19], %s668
        %s670 = sadd.s32 %s42, %s43
        %s671 = sadd.s32 %s42, %s43
        %p672 = scmp.lt.s32.totalorder %s671, 1
        %s673 = scalar_select %p672, %s671, 1
        %s674 = scalar_lea.vmem %s13, %s673
        %s675 = sadd.s32 %s42, %s43
        %s676 = sadd.s32 %s42, %s43
        %p678 = scmp.eq.s32.totalorder %s43, 0
        // Predicated region
        $region113: #{tpu_custom_call.1} parent=75 // pred_check
          %p679 = pneg %p678
        $region114: #{tpu_custom_call.1} parent=75 // pred_check_branch
          %681 = sbr.rel (%p679) target = $region116
        $region115: #{tpu_custom_call.1} parent=75 // pred_region
          %v682 = vld [vmem:[#allocation3] sm:$0xf]
          %v683 = vld [vmem:[#allocation3 + $0x4] sm:$0xf]
          %v684 = vld [vmem:[#allocation8] sm:$0xf]
          %v685 = vld [vmem:[#allocation8 + $0x4] sm:$0xf]
          %v686 = vld [vmem:[#allocation8 + $0x8] sm:$0xf]
          %v687 = vld [vmem:[#allocation8 + $0xc] sm:$0xf]
          %v688 = vld [vmem:[#allocation8 + $0x10] sm:$0xf]
          %v689 = vld [vmem:[#allocation8 + $0x14] sm:$0xf]
          %v690 = vld [vmem:[#allocation8 + $0x18] sm:$0xf]
          %v691 = vld [vmem:[#allocation8 + $0x1c] sm:$0xf]
          %v692 = vld [vmem:[#allocation8 + $0x20] sm:$0xf]
          %v693 = vld [vmem:[#allocation8 + $0x24] sm:$0xf]
          %v694 = vld [vmem:[#allocation8 + $0x28] sm:$0xf]
          %v695 = vld [vmem:[#allocation8 + $0x2c] sm:$0xf]
          %v696 = vld [vmem:[#allocation8 + $0x30] sm:$0xf]
          %v697 = vld [vmem:[#allocation8 + $0x34] sm:$0xf]
          %v698 = vld [vmem:[#allocation8 + $0x38] sm:$0xf]
          %v699 = vld [vmem:[#allocation8 + $0x3c] sm:$0xf]
          %v700 = vunpack.c.l.bf16 %v684
          %v701 = vunpack.c.l.bf16 %v685
          %v702 = vunpack.c.l.bf16 %v686
          %v703 = vunpack.c.l.bf16 %v687
          %v704 = vunpack.c.l.bf16 %v688
          %v705 = vunpack.c.l.bf16 %v689
          %v706 = vunpack.c.l.bf16 %v690
          %v707 = vunpack.c.l.bf16 %v691
          %v708 = vunpack.c.l.bf16 %v692
          %v709 = vunpack.c.l.bf16 %v693
          %v710 = vunpack.c.l.bf16 %v694
          %v711 = vunpack.c.l.bf16 %v695
          %v712 = vunpack.c.l.bf16 %v696
          %v713 = vunpack.c.l.bf16 %v697
          %v714 = vunpack.c.l.bf16 %v698
          %v715 = vunpack.c.l.bf16 %v699
          %v716 = vld [vmem:[#allocation6] sm:$0xf]
          %v717 = vld [vmem:[#allocation6 + $0x4] sm:$0xf]
          %v718 = vunpack.c.l.bf16 %v716
          %v719 = vunpack.c.l.bf16 %v717
          %v722 = vcombine.high %v718, %v718
          %v724 = vunpack.c.l.s4 1966171168
          %v725 = vunpack.c.0.s8 %v724
          %v726 = vlaneseq
          %v727 = vshrl.u32 %v726, 7
          %v728 = vsub.s32 %v725, %v727
          %v729 = vrot.slane %v718, %v728
          %v731 = vunpack.c.l.s4 1966171168
          %v732 = vunpack.c.0.s8 %v731
          %v733 = vlaneseq
          %v734 = vshrl.u32 %v733, 7
          %v735 = vsub.s32 %v732, %v734
          %v736 = vrot.slane %v722, %v735
          %v737 = vcombine.high %v729, %v729
          %v738 = vcombine.high %v736, %v736
          %v740 = vunpack.c.l.s4 1966171168
          %v741 = vunpack.c.0.s8 %v740
          %v742 = vlaneseq
          %v743 = vshrl.u32 %v742, 7
          %v744 = vsub.s32 %v741, %v743
          %v745 = vrot.slane %v729, %v744
          %v747 = vunpack.c.l.s4 1966171168
          %v748 = vunpack.c.0.s8 %v747
          %v749 = vlaneseq
          %v750 = vshrl.u32 %v749, 7
          %v751 = vsub.s32 %v748, %v750
          %v752 = vrot.slane %v736, %v751
          %v754 = vunpack.c.l.s4 1966171168
          %v755 = vunpack.c.0.s8 %v754
          %v756 = vlaneseq
          %v757 = vshrl.u32 %v756, 7
          %v758 = vsub.s32 %v755, %v757
          %v759 = vrot.slane %v737, %v758
          %v761 = vunpack.c.l.s4 1966171168
          %v762 = vunpack.c.0.s8 %v761
          %v763 = vlaneseq
          %v764 = vshrl.u32 %v763, 7
          %v765 = vsub.s32 %v762, %v764
          %v766 = vrot.slane %v738, %v765
          %v767 = vcombine.high %v745, %v745
          %v768 = vcombine.high %v752, %v752
          %v769 = vcombine.high %v759, %v759
          %v770 = vcombine.high %v766, %v766
          %v771 = vcombine.high %v719, %v719
          %v773 = vunpack.c.l.s4 1966171168
          %v774 = vunpack.c.0.s8 %v773
          %v775 = vlaneseq
          %v776 = vshrl.u32 %v775, 7
          %v777 = vsub.s32 %v774, %v776
          %v778 = vrot.slane %v719, %v777
          %v780 = vunpack.c.l.s4 1966171168
          %v781 = vunpack.c.0.s8 %v780
          %v782 = vlaneseq
          %v783 = vshrl.u32 %v782, 7
          %v784 = vsub.s32 %v781, %v783
          %v785 = vrot.slane %v771, %v784
          %v786 = vcombine.high %v778, %v778
          %v787 = vcombine.high %v785, %v785
          %v789 = vunpack.c.l.s4 1966171168
          %v790 = vunpack.c.0.s8 %v789
          %v791 = vlaneseq
          %v792 = vshrl.u32 %v791, 7
          %v793 = vsub.s32 %v790, %v792
          %v794 = vrot.slane %v778, %v793
          %v796 = vunpack.c.l.s4 1966171168
          %v797 = vunpack.c.0.s8 %v796
          %v798 = vlaneseq
          %v799 = vshrl.u32 %v798, 7
          %v800 = vsub.s32 %v797, %v799
          %v801 = vrot.slane %v785, %v800
          %v803 = vunpack.c.l.s4 1966171168
          %v804 = vunpack.c.0.s8 %v803
          %v805 = vlaneseq
          %v806 = vshrl.u32 %v805, 7
          %v807 = vsub.s32 %v804, %v806
          %v808 = vrot.slane %v786, %v807
          %v810 = vunpack.c.l.s4 1966171168
          %v811 = vunpack.c.0.s8 %v810
          %v812 = vlaneseq
          %v813 = vshrl.u32 %v812, 7
          %v814 = vsub.s32 %v811, %v813
          %v815 = vrot.slane %v787, %v814
          %v816 = vcombine.high %v794, %v794
          %v817 = vcombine.high %v801, %v801
          %v818 = vcombine.high %v808, %v808
          %v819 = vcombine.high %v815, %v815
          %v820 = vlaneseq
          %v821 = vshrl.u32 %v820, 7
          %v822 = vsub.s32 0, %v821
          %v823 = vrot.slane %v745, %v822
          %v824 = vlaneseq
          %v825 = vshrl.u32 %v824, 7
          %v826 = vsub.s32 0, %v825
          %v827 = vrot.slane %v759, %v826
          %v828 = vlaneseq
          %v829 = vshrl.u32 %v828, 7
          %v830 = vsub.s32 0, %v829
          %v831 = vrot.slane %v767, %v830
          %v832 = vlaneseq
          %v833 = vshrl.u32 %v832, 7
          %v834 = vsub.s32 0, %v833
          %v835 = vrot.slane %v769, %v834
          %v836 = vlaneseq
          %v837 = vshrl.u32 %v836, 7
          %v838 = vsub.s32 0, %v837
          %v839 = vrot.slane %v752, %v838
          %v840 = vlaneseq
          %v841 = vshrl.u32 %v840, 7
          %v842 = vsub.s32 0, %v841
          %v843 = vrot.slane %v766, %v842
          %v844 = vlaneseq
          %v845 = vshrl.u32 %v844, 7
          %v846 = vsub.s32 0, %v845
          %v847 = vrot.slane %v768, %v846
          %v848 = vlaneseq
          %v849 = vshrl.u32 %v848, 7
          %v850 = vsub.s32 0, %v849
          %v851 = vrot.slane %v770, %v850
          %v852 = vlaneseq
          %v853 = vshrl.u32 %v852, 7
          %v854 = vsub.s32 0, %v853
          %v855 = vrot.slane %v794, %v854
          %v856 = vlaneseq
          %v857 = vshrl.u32 %v856, 7
          %v858 = vsub.s32 0, %v857
          %v859 = vrot.slane %v808, %v858
          %v860 = vlaneseq
          %v861 = vshrl.u32 %v860, 7
          %v862 = vsub.s32 0, %v861
          %v863 = vrot.slane %v816, %v862
          %v864 = vlaneseq
          %v865 = vshrl.u32 %v864, 7
          %v866 = vsub.s32 0, %v865
          %v867 = vrot.slane %v818, %v866
          %v868 = vlaneseq
          %v869 = vshrl.u32 %v868, 7
          %v870 = vsub.s32 0, %v869
          %v871 = vrot.slane %v801, %v870
          %v872 = vlaneseq
          %v873 = vshrl.u32 %v872, 7
          %v874 = vsub.s32 0, %v873
          %v875 = vrot.slane %v815, %v874
          %v876 = vlaneseq
          %v877 = vshrl.u32 %v876, 7
          %v878 = vsub.s32 0, %v877
          %v879 = vrot.slane %v817, %v878
          %v880 = vlaneseq
          %v881 = vshrl.u32 %v880, 7
          %v882 = vsub.s32 0, %v881
          %v883 = vrot.slane %v819, %v882
          %v900 = vmul.f32 %v700, %v823
          %v901 = vmul.f32 %v701, %v827
          %v902 = vmul.f32 %v702, %v831
          %v903 = vmul.f32 %v703, %v835
          %v904 = vmul.f32 %v704, %v839
          %v905 = vmul.f32 %v705, %v843
          %v906 = vmul.f32 %v706, %v847
          %v907 = vmul.f32 %v707, %v851
          %v908 = vmul.f32 %v708, %v855
          %v909 = vmul.f32 %v709, %v859
          %v910 = vmul.f32 %v710, %v863
          %v911 = vmul.f32 %v711, %v867
          %v912 = vmul.f32 %v712, %v871
          %v913 = vmul.f32 %v713, %v875
          %v914 = vmul.f32 %v714, %v879
          %v915 = vmul.f32 %v715, %v883
          %vm916 = vcmask 523264
          %v917 = vsel %vm916, %v900, 0.0
          %918 = vadd.xlane.f32.xlu0 %v917
          %v919 = vpop.xlane.xlu0 %918
          %v920 = vsel %vm916, %v901, 0.0
          %921 = vadd.xlane.f32.xlu0 %v920
          %v922 = vpop.xlane.xlu0 %921
          %v923 = vsel %vm916, %v902, 0.0
          %924 = vadd.xlane.f32.xlu0 %v923
          %v925 = vpop.xlane.xlu0 %924
          %v926 = vsel %vm916, %v903, 0.0
          %927 = vadd.xlane.f32.xlu0 %v926
          %v928 = vpop.xlane.xlu0 %927
          %v929 = vsel %vm916, %v904, 0.0
          %930 = vadd.xlane.f32.xlu0 %v929
          %v931 = vpop.xlane.xlu0 %930
          %v932 = vsel %vm916, %v905, 0.0
          %933 = vadd.xlane.f32.xlu0 %v932
          %v934 = vpop.xlane.xlu0 %933
          %v935 = vsel %vm916, %v906, 0.0
          %936 = vadd.xlane.f32.xlu0 %v935
          %v937 = vpop.xlane.xlu0 %936
          %v938 = vsel %vm916, %v907, 0.0
          %939 = vadd.xlane.f32.xlu0 %v938
          %v940 = vpop.xlane.xlu0 %939
          %v941 = vsel %vm916, %v908, 0.0
          %942 = vadd.xlane.f32.xlu0 %v941
          %v943 = vpop.xlane.xlu0 %942
          %v944 = vsel %vm916, %v909, 0.0
          %945 = vadd.xlane.f32.xlu0 %v944
          %v946 = vpop.xlane.xlu0 %945
          %v947 = vsel %vm916, %v910, 0.0
          %948 = vadd.xlane.f32.xlu0 %v947
          %v949 = vpop.xlane.xlu0 %948
          %v950 = vsel %vm916, %v911, 0.0
          %951 = vadd.xlane.f32.xlu0 %v950
          %v952 = vpop.xlane.xlu0 %951
          %v953 = vsel %vm916, %v912, 0.0
          %954 = vadd.xlane.f32.xlu0 %v953
          %v955 = vpop.xlane.xlu0 %954
          %v956 = vsel %vm916, %v913, 0.0
          %957 = vadd.xlane.f32.xlu0 %v956
          %v958 = vpop.xlane.xlu0 %957
          %v959 = vsel %vm916, %v914, 0.0
          %960 = vadd.xlane.f32.xlu0 %v959
          %v961 = vpop.xlane.xlu0 %960
          %v962 = vsel %vm916, %v915, 0.0
          %963 = vadd.xlane.f32.xlu0 %v962
          %v964 = vpop.xlane.xlu0 %963
          %v981 = vlaneseq
          %v982 = vand.u32 %v981, 127
          %v983 = vlaneseq
          %v984 = vshrl.u32 %v983, 7
          %v985 = vsub.s32 %v982, %v984
          %v986 = vrot.slane %v919, %v985
          %v987 = vlaneseq
          %v988 = vshrl.u32 %v987, 7
          %v989 = vsub.s32 %v982, %v988
          %v990 = vrot.slane %v922, %v989
          %v991 = vlaneseq
          %v992 = vshrl.u32 %v991, 7
          %v993 = vsub.s32 %v982, %v992
          %v994 = vrot.slane %v925, %v993
          %v995 = vlaneseq
          %v996 = vshrl.u32 %v995, 7
          %v997 = vsub.s32 %v982, %v996
          %v998 = vrot.slane %v928, %v997
          %v999 = vlaneseq
          %v1000 = vshrl.u32 %v999, 7
          %v1001 = vsub.s32 %v982, %v1000
          %v1002 = vrot.slane %v931, %v1001
          %v1003 = vlaneseq
          %v1004 = vshrl.u32 %v1003, 7
          %v1005 = vsub.s32 %v982, %v1004
          %v1006 = vrot.slane %v934, %v1005
          %v1007 = vlaneseq
          %v1008 = vshrl.u32 %v1007, 7
          %v1009 = vsub.s32 %v982, %v1008
          %v1010 = vrot.slane %v937, %v1009
          %v1011 = vlaneseq
          %v1012 = vshrl.u32 %v1011, 7
          %v1013 = vsub.s32 %v982, %v1012
          %v1014 = vrot.slane %v940, %v1013
          %v1015 = vlaneseq
          %v1016 = vshrl.u32 %v1015, 7
          %v1017 = vsub.s32 %v982, %v1016
          %v1018 = vrot.slane %v943, %v1017
          %v1019 = vlaneseq
          %v1020 = vshrl.u32 %v1019, 7
          %v1021 = vsub.s32 %v982, %v1020
          %v1022 = vrot.slane %v946, %v1021
          %v1023 = vlaneseq
          %v1024 = vshrl.u32 %v1023, 7
          %v1025 = vsub.s32 %v982, %v1024
          %v1026 = vrot.slane %v949, %v1025
          %v1027 = vlaneseq
          %v1028 = vshrl.u32 %v1027, 7
          %v1029 = vsub.s32 %v982, %v1028
          %v1030 = vrot.slane %v952, %v1029
          %v1031 = vlaneseq
          %v1032 = vshrl.u32 %v1031, 7
          %v1033 = vsub.s32 %v982, %v1032
          %v1034 = vrot.slane %v955, %v1033
          %v1035 = vlaneseq
          %v1036 = vshrl.u32 %v1035, 7
          %v1037 = vsub.s32 %v982, %v1036
          %v1038 = vrot.slane %v958, %v1037
          %v1039 = vlaneseq
          %v1040 = vshrl.u32 %v1039, 7
          %v1041 = vsub.s32 %v982, %v1040
          %v1042 = vrot.slane %v961, %v1041
          %v1043 = vlaneseq
          %v1044 = vshrl.u32 %v1043, 7
          %v1045 = vsub.s32 %v982, %v1044
          %v1046 = vrot.slane %v964, %v1045
          %vm1047 = vcmask 1041409
          %v1048 = vsel %vm1047, %v990, %v986
          %vm1049 = vcmask 1042434
          %v1050 = vsel %vm1049, %v994, %v1048
          %vm1051 = vcmask 1043459
          %v1052 = vsel %vm1051, %v998, %v1050
          %vm1053 = vcmask 1044484
          %v1054 = vsel %vm1053, %v1002, %v1052
          %vm1055 = vcmask 1045509
          %v1056 = vsel %vm1055, %v1006, %v1054
          %vm1057 = vcmask 1046534
          %v1058 = vsel %vm1057, %v1010, %v1056
          %vm1059 = vcmask 1047559
          %v1060 = vsel %vm1059, %v1014, %v1058
          %v1061 = vsel %vm1047, %v1022, %v1018
          %v1062 = vsel %vm1049, %v1026, %v1061
          %v1063 = vsel %vm1051, %v1030, %v1062
          %v1064 = vsel %vm1053, %v1034, %v1063
          %v1065 = vsel %vm1055, %v1038, %v1064
          %v1066 = vsel %vm1057, %v1042, %v1065
          %v1067 = vsel %vm1059, %v1046, %v1066
          %vm1070 = vcmask 64512
          %v1071 = vsel %vm1070, %v1060, -inf
          %1072 = vmax.xlane.f32.xlu0 %v1071
          %v1073 = vpop.xlane.xlu0 %1072
          %v1074 = vsel %vm1070, %v1067, -inf
          %1075 = vmax.xlane.f32.xlu0 %v1074
          %v1076 = vpop.xlane.xlu0 %1075
          %v1079 = vlaneseq
          %v1080 = vshrl.u32 %v1079, 7
          %v1081 = vsub.s32 0, %v1080
          %v1082 = vrot.slane %v1073, %v1081
          %v1083 = vlaneseq
          %v1084 = vshrl.u32 %v1083, 7
          %v1085 = vsub.s32 1, %v1084
          %v1086 = vrot.slane %v1073, %v1085
          %v1087 = vlaneseq
          %v1088 = vshrl.u32 %v1087, 7
          %v1089 = vsub.s32 2, %v1088
          %v1090 = vrot.slane %v1073, %v1089
          %v1091 = vlaneseq
          %v1092 = vshrl.u32 %v1091, 7
          %v1093 = vsub.s32 3, %v1092
          %v1094 = vrot.slane %v1073, %v1093
          %v1095 = vlaneseq
          %v1096 = vshrl.u32 %v1095, 7
          %v1097 = vsub.s32 4, %v1096
          %v1098 = vrot.slane %v1073, %v1097
          %v1099 = vlaneseq
          %v1100 = vshrl.u32 %v1099, 7
          %v1101 = vsub.s32 5, %v1100
          %v1102 = vrot.slane %v1073, %v1101
          %v1103 = vlaneseq
          %v1104 = vshrl.u32 %v1103, 7
          %v1105 = vsub.s32 6, %v1104
          %v1106 = vrot.slane %v1073, %v1105
          %v1107 = vlaneseq
          %v1108 = vshrl.u32 %v1107, 7
          %v1109 = vsub.s32 7, %v1108
          %v1110 = vrot.slane %v1073, %v1109
          %v1111 = vlaneseq
          %v1112 = vshrl.u32 %v1111, 7
          %v1113 = vsub.s32 0, %v1112
          %v1114 = vrot.slane %v1076, %v1113
          %v1115 = vlaneseq
          %v1116 = vshrl.u32 %v1115, 7
          %v1117 = vsub.s32 1, %v1116
          %v1118 = vrot.slane %v1076, %v1117
          %v1119 = vlaneseq
          %v1120 = vshrl.u32 %v1119, 7
          %v1121 = vsub.s32 2, %v1120
          %v1122 = vrot.slane %v1076, %v1121
          %v1123 = vlaneseq
          %v1124 = vshrl.u32 %v1123, 7
          %v1125 = vsub.s32 3, %v1124
          %v1126 = vrot.slane %v1076, %v1125
          %v1127 = vlaneseq
          %v1128 = vshrl.u32 %v1127, 7
          %v1129 = vsub.s32 4, %v1128
          %v1130 = vrot.slane %v1076, %v1129
          %v1131 = vlaneseq
          %v1132 = vshrl.u32 %v1131, 7
          %v1133 = vsub.s32 5, %v1132
          %v1134 = vrot.slane %v1076, %v1133
          %v1135 = vlaneseq
          %v1136 = vshrl.u32 %v1135, 7
          %v1137 = vsub.s32 6, %v1136
          %v1138 = vrot.slane %v1076, %v1137
          %v1139 = vlaneseq
          %v1140 = vshrl.u32 %v1139, 7
          %v1141 = vsub.s32 7, %v1140
          %v1142 = vrot.slane %v1076, %v1141
          %v1159 = vsub.f32 %v919, %v1082
          %v1160 = vsub.f32 %v922, %v1086
          %v1161 = vsub.f32 %v925, %v1090
          %v1162 = vsub.f32 %v928, %v1094
          %v1163 = vsub.f32 %v931, %v1098
          %v1164 = vsub.f32 %v934, %v1102
          %v1165 = vsub.f32 %v937, %v1106
          %v1166 = vsub.f32 %v940, %v1110
          %v1167 = vsub.f32 %v943, %v1114
          %v1168 = vsub.f32 %v946, %v1118
          %v1169 = vsub.f32 %v949, %v1122
          %v1170 = vsub.f32 %v952, %v1126
          %v1171 = vsub.f32 %v955, %v1130
          %v1172 = vsub.f32 %v958, %v1134
          %v1173 = vsub.f32 %v961, %v1138
          %v1174 = vsub.f32 %v964, %v1142
          %v1175 = vmul.f32 %v1159, 1.442695
          %v1176 = vpow.pop %v1175
          %v1177 = vmul.f32 %v1160, 1.442695
          %v1178 = vpow.pop %v1177
          %v1179 = vmul.f32 %v1161, 1.442695
          %v1180 = vpow.pop %v1179
          %v1181 = vmul.f32 %v1162, 1.442695
          %v1182 = vpow.pop %v1181
          %v1183 = vmul.f32 %v1163, 1.442695
          %v1184 = vpow.pop %v1183
          %v1185 = vmul.f32 %v1164, 1.442695
          %v1186 = vpow.pop %v1185
          %v1187 = vmul.f32 %v1165, 1.442695
          %v1188 = vpow.pop %v1187
          %v1189 = vmul.f32 %v1166, 1.442695
          %v1190 = vpow.pop %v1189
          %v1191 = vmul.f32 %v1167, 1.442695
          %v1192 = vpow.pop %v1191
          %v1193 = vmul.f32 %v1168, 1.442695
          %v1194 = vpow.pop %v1193
          %v1195 = vmul.f32 %v1169, 1.442695
          %v1196 = vpow.pop %v1195
          %v1197 = vmul.f32 %v1170, 1.442695
          %v1198 = vpow.pop %v1197
          %v1199 = vmul.f32 %v1171, 1.442695
          %v1200 = vpow.pop %v1199
          %v1201 = vmul.f32 %v1172, 1.442695
          %v1202 = vpow.pop %v1201
          %v1203 = vmul.f32 %v1173, 1.442695
          %v1204 = vpow.pop %v1203
          %v1205 = vmul.f32 %v1174, 1.442695
          %v1206 = vpow.pop %v1205
          %1223 = vset.pattern.permute.xlu0 0
          %1224 = vperm.xlu0 %1223, %v1176
          %v1225 = vpop.permute.xlu0 %1224
          %1226 = vset.pattern.permute.xlu0 0
          %1227 = vperm.xlu0 %1226, %v1178
          %v1228 = vpop.permute.xlu0 %1227
          %1229 = vset.pattern.permute.xlu0 0
          %1230 = vperm.xlu0 %1229, %v1180
          %v1231 = vpop.permute.xlu0 %1230
          %1232 = vset.pattern.permute.xlu0 0
          %1233 = vperm.xlu0 %1232, %v1182
          %v1234 = vpop.permute.xlu0 %1233
          %1235 = vset.pattern.permute.xlu0 0
          %1236 = vperm.xlu0 %1235, %v1184
          %v1237 = vpop.permute.xlu0 %1236
          %1238 = vset.pattern.permute.xlu0 0
          %1239 = vperm.xlu0 %1238, %v1186
          %v1240 = vpop.permute.xlu0 %1239
          %1241 = vset.pattern.permute.xlu0 0
          %1242 = vperm.xlu0 %1241, %v1188
          %v1243 = vpop.permute.xlu0 %1242
          %1244 = vset.pattern.permute.xlu0 0
          %1245 = vperm.xlu0 %1244, %v1190
          %v1246 = vpop.permute.xlu0 %1245
          %1247 = vset.pattern.permute.xlu0 0
          %1248 = vperm.xlu0 %1247, %v1192
          %v1249 = vpop.permute.xlu0 %1248
          %1250 = vset.pattern.permute.xlu0 0
          %1251 = vperm.xlu0 %1250, %v1194
          %v1252 = vpop.permute.xlu0 %1251
          %1253 = vset.pattern.permute.xlu0 0
          %1254 = vperm.xlu0 %1253, %v1196
          %v1255 = vpop.permute.xlu0 %1254
          %1256 = vset.pattern.permute.xlu0 0
          %1257 = vperm.xlu0 %1256, %v1198
          %v1258 = vpop.permute.xlu0 %1257
          %1259 = vset.pattern.permute.xlu0 0
          %1260 = vperm.xlu0 %1259, %v1200
          %v1261 = vpop.permute.xlu0 %1260
          %1262 = vset.pattern.permute.xlu0 0
          %1263 = vperm.xlu0 %1262, %v1202
          %v1264 = vpop.permute.xlu0 %1263
          %1265 = vset.pattern.permute.xlu0 0
          %1266 = vperm.xlu0 %1265, %v1204
          %v1267 = vpop.permute.xlu0 %1266
          %1268 = vset.pattern.permute.xlu0 0
          %1269 = vperm.xlu0 %1268, %v1206
          %v1270 = vpop.permute.xlu0 %1269
          %v1271 = vlaneseq
          %v1272 = vshrl.u32 %v1271, 7
          %v1273 = vsub.s32 %v982, %v1272
          %v1274 = vrot.slane %v1225, %v1273
          %v1275 = vlaneseq
          %v1276 = vshrl.u32 %v1275, 7
          %v1277 = vsub.s32 %v982, %v1276
          %v1278 = vrot.slane %v1228, %v1277
          %v1279 = vlaneseq
          %v1280 = vshrl.u32 %v1279, 7
          %v1281 = vsub.s32 %v982, %v1280
          %v1282 = vrot.slane %v1231, %v1281
          %v1283 = vlaneseq
          %v1284 = vshrl.u32 %v1283, 7
          %v1285 = vsub.s32 %v982, %v1284
          %v1286 = vrot.slane %v1234, %v1285
          %v1287 = vlaneseq
          %v1288 = vshrl.u32 %v1287, 7
          %v1289 = vsub.s32 %v982, %v1288
          %v1290 = vrot.slane %v1237, %v1289
          %v1291 = vlaneseq
          %v1292 = vshrl.u32 %v1291, 7
          %v1293 = vsub.s32 %v982, %v1292
          %v1294 = vrot.slane %v1240, %v1293
          %v1295 = vlaneseq
          %v1296 = vshrl.u32 %v1295, 7
          %v1297 = vsub.s32 %v982, %v1296
          %v1298 = vrot.slane %v1243, %v1297
          %v1299 = vlaneseq
          %v1300 = vshrl.u32 %v1299, 7
          %v1301 = vsub.s32 %v982, %v1300
          %v1302 = vrot.slane %v1246, %v1301
          %v1303 = vlaneseq
          %v1304 = vshrl.u32 %v1303, 7
          %v1305 = vsub.s32 %v982, %v1304
          %v1306 = vrot.slane %v1249, %v1305
          %v1307 = vlaneseq
          %v1308 = vshrl.u32 %v1307, 7
          %v1309 = vsub.s32 %v982, %v1308
          %v1310 = vrot.slane %v1252, %v1309
          %v1311 = vlaneseq
          %v1312 = vshrl.u32 %v1311, 7
          %v1313 = vsub.s32 %v982, %v1312
          %v1314 = vrot.slane %v1255, %v1313
          %v1315 = vlaneseq
          %v1316 = vshrl.u32 %v1315, 7
          %v1317 = vsub.s32 %v982, %v1316
          %v1318 = vrot.slane %v1258, %v1317
          %v1319 = vlaneseq
          %v1320 = vshrl.u32 %v1319, 7
          %v1321 = vsub.s32 %v982, %v1320
          %v1322 = vrot.slane %v1261, %v1321
          %v1323 = vlaneseq
          %v1324 = vshrl.u32 %v1323, 7
          %v1325 = vsub.s32 %v982, %v1324
          %v1326 = vrot.slane %v1264, %v1325
          %v1327 = vlaneseq
          %v1328 = vshrl.u32 %v1327, 7
          %v1329 = vsub.s32 %v982, %v1328
          %v1330 = vrot.slane %v1267, %v1329
          %v1331 = vlaneseq
          %v1332 = vshrl.u32 %v1331, 7
          %v1333 = vsub.s32 %v982, %v1332
          %v1334 = vrot.slane %v1270, %v1333
          %v1335 = vsel %vm1047, %v1278, %v1274
          %v1336 = vsel %vm1049, %v1282, %v1335
          %v1337 = vsel %vm1051, %v1286, %v1336
          %v1338 = vsel %vm1053, %v1290, %v1337
          %v1339 = vsel %vm1055, %v1294, %v1338
          %v1340 = vsel %vm1057, %v1298, %v1339
          %v1341 = vsel %vm1059, %v1302, %v1340
          %v1342 = vsel %vm1047, %v1310, %v1306
          %v1343 = vsel %vm1049, %v1314, %v1342
          %v1344 = vsel %vm1051, %v1318, %v1343
          %v1345 = vsel %vm1053, %v1322, %v1344
          %v1346 = vsel %vm1055, %v1326, %v1345
          %v1347 = vsel %vm1057, %v1330, %v1346
          %v1348 = vsel %vm1059, %v1334, %v1347
          %v1351 = vsel %vm1070, %v1341, 0.0
          %1352 = vadd.xlane.f32.xlu0 %v1351
          %v1353 = vpop.xlane.xlu0 %1352
          %v1354 = vsel %vm1070, %v1348, 0.0
          %1355 = vadd.xlane.f32.xlu0 %v1354
          %v1356 = vpop.xlane.xlu0 %1355
          %v1357 = vrcp.pop %v1353
          %v1358 = vrcp.pop %v1356
          %v1361 = vlaneseq
          %v1362 = vshrl.u32 %v1361, 7
          %v1363 = vsub.s32 0, %v1362
          %v1364 = vrot.slane %v1357, %v1363
          %v1365 = vlaneseq
          %v1366 = vshrl.u32 %v1365, 7
          %v1367 = vsub.s32 1, %v1366
          %v1368 = vrot.slane %v1357, %v1367
          %v1369 = vlaneseq
          %v1370 = vshrl.u32 %v1369, 7
          %v1371 = vsub.s32 2, %v1370
          %v1372 = vrot.slane %v1357, %v1371
          %v1373 = vlaneseq
          %v1374 = vshrl.u32 %v1373, 7
          %v1375 = vsub.s32 3, %v1374
          %v1376 = vrot.slane %v1357, %v1375
          %v1377 = vlaneseq
          %v1378 = vshrl.u32 %v1377, 7
          %v1379 = vsub.s32 4, %v1378
          %v1380 = vrot.slane %v1357, %v1379
          %v1381 = vlaneseq
          %v1382 = vshrl.u32 %v1381, 7
          %v1383 = vsub.s32 5, %v1382
          %v1384 = vrot.slane %v1357, %v1383
          %v1385 = vlaneseq
          %v1386 = vshrl.u32 %v1385, 7
          %v1387 = vsub.s32 6, %v1386
          %v1388 = vrot.slane %v1357, %v1387
          %v1389 = vlaneseq
          %v1390 = vshrl.u32 %v1389, 7
          %v1391 = vsub.s32 7, %v1390
          %v1392 = vrot.slane %v1357, %v1391
          %v1393 = vlaneseq
          %v1394 = vshrl.u32 %v1393, 7
          %v1395 = vsub.s32 0, %v1394
          %v1396 = vrot.slane %v1358, %v1395
          %v1397 = vlaneseq
          %v1398 = vshrl.u32 %v1397, 7
          %v1399 = vsub.s32 1, %v1398
          %v1400 = vrot.slane %v1358, %v1399
          %v1401 = vlaneseq
          %v1402 = vshrl.u32 %v1401, 7
          %v1403 = vsub.s32 2, %v1402
          %v1404 = vrot.slane %v1358, %v1403
          %v1405 = vlaneseq
          %v1406 = vshrl.u32 %v1405, 7
          %v1407 = vsub.s32 3, %v1406
          %v1408 = vrot.slane %v1358, %v1407
          %v1409 = vlaneseq
          %v1410 = vshrl.u32 %v1409, 7
          %v1411 = vsub.s32 4, %v1410
          %v1412 = vrot.slane %v1358, %v1411
          %v1413 = vlaneseq
          %v1414 = vshrl.u32 %v1413, 7
          %v1415 = vsub.s32 5, %v1414
          %v1416 = vrot.slane %v1358, %v1415
          %v1417 = vlaneseq
          %v1418 = vshrl.u32 %v1417, 7
          %v1419 = vsub.s32 6, %v1418
          %v1420 = vrot.slane %v1358, %v1419
          %v1421 = vlaneseq
          %v1422 = vshrl.u32 %v1421, 7
          %v1423 = vsub.s32 7, %v1422
          %v1424 = vrot.slane %v1358, %v1423
          %v1441 = vmul.f32 %v1176, %v1364
          %v1442 = vmul.f32 %v1178, %v1368
          %v1443 = vmul.f32 %v1180, %v1372
          %v1444 = vmul.f32 %v1182, %v1376
          %v1445 = vmul.f32 %v1184, %v1380
          %v1446 = vmul.f32 %v1186, %v1384
          %v1447 = vmul.f32 %v1188, %v1388
          %v1448 = vmul.f32 %v1190, %v1392
          %v1449 = vmul.f32 %v1192, %v1396
          %v1450 = vmul.f32 %v1194, %v1400
          %v1451 = vmul.f32 %v1196, %v1404
          %v1452 = vmul.f32 %v1198, %v1408
          %v1453 = vmul.f32 %v1200, %v1412
          %v1454 = vmul.f32 %v1202, %v1416
          %v1455 = vmul.f32 %v1204, %v1420
          %v1456 = vmul.f32 %v1206, %v1424
          %1458 = vset.pattern.permute.xlu0 0
          %1459 = vperm.xlu0 %1458, %v1441
          %v1460 = vpop.permute.xlu0 %1459
          %1463 = vset.pattern.permute.xlu0 0
          %1464 = vperm.xlu0 %1463, %v1442
          %v1465 = vpop.permute.xlu0 %1464
          %1468 = vset.pattern.permute.xlu0 0
          %1469 = vperm.xlu0 %1468, %v1443
          %v1470 = vpop.permute.xlu0 %1469
          %1473 = vset.pattern.permute.xlu0 0
          %1474 = vperm.xlu0 %1473, %v1444
          %v1475 = vpop.permute.xlu0 %1474
          %1478 = vset.pattern.permute.xlu0 0
          %1479 = vperm.xlu0 %1478, %v1445
          %v1480 = vpop.permute.xlu0 %1479
          %1483 = vset.pattern.permute.xlu0 0
          %1484 = vperm.xlu0 %1483, %v1446
          %v1485 = vpop.permute.xlu0 %1484
          %1488 = vset.pattern.permute.xlu0 0
          %1489 = vperm.xlu0 %1488, %v1447
          %v1490 = vpop.permute.xlu0 %1489
          %1493 = vset.pattern.permute.xlu0 0
          %1494 = vperm.xlu0 %1493, %v1448
          %v1495 = vpop.permute.xlu0 %1494
          %1498 = vset.pattern.permute.xlu0 0
          %1499 = vperm.xlu0 %1498, %v1449
          %v1500 = vpop.permute.xlu0 %1499
          %1503 = vset.pattern.permute.xlu0 0
          %1504 = vperm.xlu0 %1503, %v1450
          %v1505 = vpop.permute.xlu0 %1504
          %1508 = vset.pattern.permute.xlu0 0
          %1509 = vperm.xlu0 %1508, %v1451
          %v1510 = vpop.permute.xlu0 %1509
          %1513 = vset.pattern.permute.xlu0 0
          %1514 = vperm.xlu0 %1513, %v1452
          %v1515 = vpop.permute.xlu0 %1514
          %1518 = vset.pattern.permute.xlu0 0
          %1519 = vperm.xlu0 %1518, %v1453
          %v1520 = vpop.permute.xlu0 %1519
          %1523 = vset.pattern.permute.xlu0 0
          %1524 = vperm.xlu0 %1523, %v1454
          %v1525 = vpop.permute.xlu0 %1524
          %1528 = vset.pattern.permute.xlu0 0
          %1529 = vperm.xlu0 %1528, %v1455
          %v1530 = vpop.permute.xlu0 %1529
          %1533 = vset.pattern.permute.xlu0 0
          %1534 = vperm.xlu0 %1533, %v1456
          %v1535 = vpop.permute.xlu0 %1534
          %v1537 = vmul.f32 %v1460, %v700
          %v1538 = vmul.f32 %v1465, %v701
          %v1539 = vmul.f32 %v1470, %v702
          %v1540 = vmul.f32 %v1475, %v703
          %v1541 = vmul.f32 %v1480, %v704
          %v1542 = vmul.f32 %v1485, %v705
          %v1543 = vmul.f32 %v1490, %v706
          %v1544 = vmul.f32 %v1495, %v707
          %v1545 = vmul.f32 %v1500, %v708
          %v1546 = vmul.f32 %v1505, %v709
          %v1547 = vmul.f32 %v1510, %v710
          %v1548 = vmul.f32 %v1515, %v711
          %v1549 = vmul.f32 %v1520, %v712
          %v1550 = vmul.f32 %v1525, %v713
          %v1551 = vmul.f32 %v1530, %v714
          %v1552 = vmul.f32 %v1535, %v715
          %v1553 = vsel %vm916, %v1537, 0.0
          %v1554 = vrot.slane %v1553, 4
          %v1555 = vadd.f32 %v1553, %v1554
          %v1556 = vrot.slane %v1555, 2
          %v1557 = vadd.f32 %v1555, %v1556
          %v1558 = vrot.slane %v1557, 1
          %v1559 = vadd.f32 %v1557, %v1558
          %v1560 = vsel %vm916, %v1538, 0.0
          %v1561 = vrot.slane %v1560, 4
          %v1562 = vadd.f32 %v1560, %v1561
          %v1563 = vrot.slane %v1562, 2
          %v1564 = vadd.f32 %v1562, %v1563
          %v1565 = vrot.slane %v1564, 1
          %v1566 = vadd.f32 %v1564, %v1565
          %v1567 = vsel %vm916, %v1539, 0.0
          %v1568 = vrot.slane %v1567, 4
          %v1569 = vadd.f32 %v1567, %v1568
          %v1570 = vrot.slane %v1569, 2
          %v1571 = vadd.f32 %v1569, %v1570
          %v1572 = vrot.slane %v1571, 1
          %v1573 = vadd.f32 %v1571, %v1572
          %v1574 = vsel %vm916, %v1540, 0.0
          %v1575 = vrot.slane %v1574, 4
          %v1576 = vadd.f32 %v1574, %v1575
          %v1577 = vrot.slane %v1576, 2
          %v1578 = vadd.f32 %v1576, %v1577
          %v1579 = vrot.slane %v1578, 1
          %v1580 = vadd.f32 %v1578, %v1579
          %v1581 = vsel %vm916, %v1541, 0.0
          %v1582 = vrot.slane %v1581, 4
          %v1583 = vadd.f32 %v1581, %v1582
          %v1584 = vrot.slane %v1583, 2
          %v1585 = vadd.f32 %v1583, %v1584
          %v1586 = vrot.slane %v1585, 1
          %v1587 = vadd.f32 %v1585, %v1586
          %v1588 = vsel %vm916, %v1542, 0.0
          %v1589 = vrot.slane %v1588, 4
          %v1590 = vadd.f32 %v1588, %v1589
          %v1591 = vrot.slane %v1590, 2
          %v1592 = vadd.f32 %v1590, %v1591
          %v1593 = vrot.slane %v1592, 1
          %v1594 = vadd.f32 %v1592, %v1593
          %v1595 = vsel %vm916, %v1543, 0.0
          %v1596 = vrot.slane %v1595, 4
          %v1597 = vadd.f32 %v1595, %v1596
          %v1598 = vrot.slane %v1597, 2
          %v1599 = vadd.f32 %v1597, %v1598
          %v1600 = vrot.slane %v1599, 1
          %v1601 = vadd.f32 %v1599, %v1600
          %v1602 = vsel %vm916, %v1544, 0.0
          %v1603 = vrot.slane %v1602, 4
          %v1604 = vadd.f32 %v1602, %v1603
          %v1605 = vrot.slane %v1604, 2
          %v1606 = vadd.f32 %v1604, %v1605
          %v1607 = vrot.slane %v1606, 1
          %v1608 = vadd.f32 %v1606, %v1607
          %v1609 = vsel %vm916, %v1545, 0.0
          %v1610 = vrot.slane %v1609, 4
          %v1611 = vadd.f32 %v1609, %v1610
          %v1612 = vrot.slane %v1611, 2
          %v1613 = vadd.f32 %v1611, %v1612
          %v1614 = vrot.slane %v1613, 1
          %v1615 = vadd.f32 %v1613, %v1614
          %v1616 = vsel %vm916, %v1546, 0.0
          %v1617 = vrot.slane %v1616, 4
          %v1618 = vadd.f32 %v1616, %v1617
          %v1619 = vrot.slane %v1618, 2
          %v1620 = vadd.f32 %v1618, %v1619
          %v1621 = vrot.slane %v1620, 1
          %v1622 = vadd.f32 %v1620, %v1621
          %v1623 = vsel %vm916, %v1547, 0.0
          %v1624 = vrot.slane %v1623, 4
          %v1625 = vadd.f32 %v1623, %v1624
          %v1626 = vrot.slane %v1625, 2
          %v1627 = vadd.f32 %v1625, %v1626
          %v1628 = vrot.slane %v1627, 1
          %v1629 = vadd.f32 %v1627, %v1628
          %v1630 = vsel %vm916, %v1548, 0.0
          %v1631 = vrot.slane %v1630, 4
          %v1632 = vadd.f32 %v1630, %v1631
          %v1633 = vrot.slane %v1632, 2
          %v1634 = vadd.f32 %v1632, %v1633
          %v1635 = vrot.slane %v1634, 1
          %v1636 = vadd.f32 %v1634, %v1635
          %v1637 = vsel %vm916, %v1549, 0.0
          %v1638 = vrot.slane %v1637, 4
          %v1639 = vadd.f32 %v1637, %v1638
          %v1640 = vrot.slane %v1639, 2
          %v1641 = vadd.f32 %v1639, %v1640
          %v1642 = vrot.slane %v1641, 1
          %v1643 = vadd.f32 %v1641, %v1642
          %v1644 = vsel %vm916, %v1550, 0.0
          %v1645 = vrot.slane %v1644, 4
          %v1646 = vadd.f32 %v1644, %v1645
          %v1647 = vrot.slane %v1646, 2
          %v1648 = vadd.f32 %v1646, %v1647
          %v1649 = vrot.slane %v1648, 1
          %v1650 = vadd.f32 %v1648, %v1649
          %v1651 = vsel %vm916, %v1551, 0.0
          %v1652 = vrot.slane %v1651, 4
          %v1653 = vadd.f32 %v1651, %v1652
          %v1654 = vrot.slane %v1653, 2
          %v1655 = vadd.f32 %v1653, %v1654
          %v1656 = vrot.slane %v1655, 1
          %v1657 = vadd.f32 %v1655, %v1656
          %v1658 = vsel %vm916, %v1552, 0.0
          %v1659 = vrot.slane %v1658, 4
          %v1660 = vadd.f32 %v1658, %v1659
          %v1661 = vrot.slane %v1660, 2
          %v1662 = vadd.f32 %v1660, %v1661
          %v1663 = vrot.slane %v1662, 1
          %v1664 = vadd.f32 %v1662, %v1663
          %v1665 = vld [vmem:[#allocation11] sm:$0xff]
          %v1666 = vld [vmem:[#allocation11 + $0x8] sm:$0xf]
          %v1667 = vld [vmem:[#allocation11 + $0xc] sm:$0xff]
          %v1668 = vld [vmem:[#allocation11 + $0x14] sm:$0xf]
          %v1669 = vld [vmem:[#allocation11 + $0x18] sm:$0xff]
          %v1670 = vld [vmem:[#allocation11 + $0x20] sm:$0xf]
          %v1671 = vld [vmem:[#allocation11 + $0x24] sm:$0xff]
          %v1672 = vld [vmem:[#allocation11 + $0x2c] sm:$0xf]
          %v1673 = vld [vmem:[%s4] sm:$0x7]
          %v1675 = vlaneseq
          %v1676 = vshrl.u32 %v1675, 7
          %v1677 = vsub.s32 0, %v1676
          %v1678 = vrot.slane %v1673, %v1677
          %v1679 = vlaneseq
          %v1680 = vshrl.u32 %v1679, 7
          %v1681 = vsub.s32 1, %v1680
          %v1682 = vrot.slane %v1673, %v1681
          %v1683 = vlaneseq
          %v1684 = vshrl.u32 %v1683, 7
          %v1685 = vsub.s32 2, %v1684
          %v1686 = vrot.slane %v1673, %v1685
          %v1692 = vunpack.c.l.b16 %v682
          %v1693 = vunpack.c.l.b16 %v683
          %v1694 = vpack.c.b16 %v1693, %v1692
          %v1703 = vunpack.c.l.b16 %v1665
          %v1704 = vunpack.c.h.b16 %v1665
          %v1705 = vunpack.c.l.b16 %v1666
          %v1706 = vunpack.c.l.b16 %v1667
          %v1707 = vunpack.c.h.b16 %v1667
          %v1708 = vunpack.c.l.b16 %v1668
          %v1709 = vunpack.c.l.b16 %v1669
          %v1710 = vunpack.c.h.b16 %v1669
          %v1711 = vunpack.c.l.b16 %v1670
          %v1712 = vunpack.c.l.b16 %v1671
          %v1713 = vunpack.c.h.b16 %v1671
          %v1714 = vunpack.c.l.b16 %v1672
          %v1715 = vpack.c.b16 %v1706, %v1703
          %v1716 = vpack.c.b16 %v1707, %v1704
          %v1717 = vpack.c.b16 %v1708, %v1705
          %v1718 = vpack.c.b16 %v1712, %v1709
          %v1719 = vpack.c.b16 %v1713, %v1710
          %v1720 = vpack.c.b16 %v1714, %v1711
          %vm1727 = vcmask 261120
          %v1729 = vsel %vm1727, %v1694, 0
          %1731 = vmatprep.subr.bf16.mxu0 %v1716
          %1732 = vmatpush1.bf16.msra.mxu0 %v1715
          %1733 = vmatprep.subr.bf16.mxu0 %v1719
          %1734 = vmatpush1.bf16.msra.mxu0 %v1718
          %1735 = vmatprep.subr.bf16.mxu0 0
          %1736 = vmatpush1.bf16.msra.mxu0 0
          %1737 = vmatprep.subr.bf16.mxu0 0
          %1738 = vmatpush1.bf16.msra.mxu0 0
          %1739 = vmatprep.subr.bf16.mxu0 0
          %1740 = vmatpush1.bf16.msra.mxu0 0
          %1741 = vmatprep.subr.bf16.mxu0 0
          %1742 = vmatpush1.bf16.msra.mxu0 0
          %1743 = vmatprep.subr.bf16.mxu0 0
          %1744 = vmatpush1.bf16.msra.mxu0 0
          %1745 = vmatprep.subr.bf16.mxu0 0
          %1746 = vmatpush1.bf16.msra.mxu0 0
          %1747 = vmatprep.subr.bf16.mxu0 0
          %1748 = vmatpush1.bf16.msra.mxu0 0
          %1749 = vmatprep.subr.bf16.mxu0 0
          %1750 = vmatpush1.bf16.msra.mxu0 0
          %1751 = vmatprep.subr.bf16.mxu0 0
          %1752 = vmatpush1.bf16.msra.mxu0 0
          %1753 = vmatprep.subr.bf16.mxu0 0
          %1754 = vmatpush1.bf16.msra.mxu0 0
          %1755 = vmatprep.subr.bf16.mxu0 0
          %1756 = vmatpush1.bf16.msra.mxu0 0
          %1757 = vmatprep.subr.bf16.mxu0 0
          %1758 = vmatpush1.bf16.msra.mxu0 0
          %1759 = vmatprep.subr.bf16.mxu0 0
          %1760 = vmatpush1.bf16.msra.mxu0 0
          %1761 = vmatprep.subr.bf16.mxu0 0
          %1762 = vmatpush1.bf16.msra.mxu0 0
          %1763 = vmatprep.mubr.bf16.mxu0 0
          %1764 = vmatmul.mubr.bf16.gmra.mrb[0].mxu0 %v1729
          %v1765 = vpop.f32.mrb[0].mxu0
          %v1766 = vadd.f32 %v1678, %v1765
          %v1767 = vpop.f32.mrb[0].mxu0
          %v1768 = vadd.f32 %v1682, %v1767
          %v1769 = vpop.f32.mrb[0].mxu0
          %v1770 = vadd.f32 %v1678, %v1769
          %v1771 = vpop.f32.mrb[0].mxu0
          %v1772 = vadd.f32 %v1682, %v1771
          %1773 = vdwg.mxu0
          %1774 = vmatprep.subr.bf16.mxu0 0
          %1775 = vmatpush1.bf16.msra.mxu0 %v1717
          %1776 = vmatprep.subr.bf16.mxu0 0
          %1777 = vmatpush1.bf16.msra.mxu0 %v1720
          %1778 = vmatprep.subr.bf16.mxu0 0
          %1779 = vmatpush1.bf16.msra.mxu0 0
          %1780 = vmatprep.subr.bf16.mxu0 0
          %1781 = vmatpush1.bf16.msra.mxu0 0
          %1782 = vmatprep.subr.bf16.mxu0 0
          %1783 = vmatpush1.bf16.msra.mxu0 0
          %1784 = vmatprep.subr.bf16.mxu0 0
          %1785 = vmatpush1.bf16.msra.mxu0 0
          %1786 = vmatprep.subr.bf16.mxu0 0
          %1787 = vmatpush1.bf16.msra.mxu0 0
          %1788 = vmatprep.subr.bf16.mxu0 0
          %1789 = vmatpush1.bf16.msra.mxu0 0
          %1790 = vmatprep.subr.bf16.mxu0 0
          %1791 = vmatpush1.bf16.msra.mxu0 0
          %1792 = vmatprep.subr.bf16.mxu0 0
          %1793 = vmatpush1.bf16.msra.mxu0 0
          %1794 = vmatprep.subr.bf16.mxu0 0
          %1795 = vmatpush1.bf16.msra.mxu0 0
          %1796 = vmatprep.subr.bf16.mxu0 0
          %1797 = vmatpush1.bf16.msra.mxu0 0
          %1798 = vmatprep.subr.bf16.mxu0 0
          %1799 = vmatpush1.bf16.msra.mxu0 0
          %1800 = vmatprep.subr.bf16.mxu0 0
          %1801 = vmatpush1.bf16.msra.mxu0 0
          %1802 = vmatprep.subr.bf16.mxu0 0
          %1803 = vmatpush1.bf16.msra.mxu0 0
          %1804 = vmatprep.subr.bf16.mxu0 0
          %1805 = vmatpush1.bf16.msra.mxu0 0
          %1806 = vmatprep.mubr.bf16.mxu0 0
          %1807 = vmatmul.mubr.bf16.gmra.mrb[0].mxu0 %v1729
          %v1808 = vpop.f32.mrb[0].mxu0
          %v1809 = vadd.f32 %v1686, %v1808
          %v1810 = vpop.f32.mrb[0].mxu0
          %v1811 = vpop.f32.mrb[0].mxu0
          %v1812 = vadd.f32 %v1686, %v1811
          %v1813 = vpop.f32.mrb[0].mxu0
          %1814 = vdwg.mxu0
          %v1815 = vpack.c.bf16 %v1559, %v1559
          %v1816 = vpack.c.bf16 %v1566, %v1566
          %v1817 = vpack.c.bf16 %v1573, %v1573
          %v1818 = vpack.c.bf16 %v1580, %v1580
          %v1819 = vpack.c.bf16 %v1587, %v1587
          %v1820 = vpack.c.bf16 %v1594, %v1594
          %v1821 = vpack.c.bf16 %v1601, %v1601
          %v1822 = vpack.c.bf16 %v1608, %v1608
          %v1823 = vpack.c.bf16 %v1615, %v1615
          %v1824 = vpack.c.bf16 %v1622, %v1622
          %v1825 = vpack.c.bf16 %v1629, %v1629
          %v1826 = vpack.c.bf16 %v1636, %v1636
          %v1827 = vpack.c.bf16 %v1643, %v1643
          %v1828 = vpack.c.bf16 %v1650, %v1650
          %v1829 = vpack.c.bf16 %v1657, %v1657
          %v1830 = vpack.c.bf16 %v1664, %v1664
          %v1831 = vld [vmem:[#allocation9] sm:$0xff]
          %v1832 = vld [vmem:[#allocation9 + $0x8] sm:$0xf]
          %v1833 = vld [vmem:[#allocation9 + $0xc] sm:$0xff]
          %v1834 = vld [vmem:[#allocation9 + $0x14] sm:$0xf]
          %v1835 = vld [vmem:[#allocation9 + $0x18] sm:$0xff]
          %v1836 = vld [vmem:[#allocation9 + $0x20] sm:$0xf]
          %v1837 = vld [vmem:[#allocation9 + $0x24] sm:$0xff]
          %v1838 = vld [vmem:[#allocation9 + $0x2c] sm:$0xf]
          %v1839 = vld [vmem:[#allocation9 + $0x30] sm:$0xff]
          %v1840 = vld [vmem:[#allocation9 + $0x38] sm:$0xf]
          %v1841 = vld [vmem:[#allocation9 + $0x3c] sm:$0xff]
          %v1842 = vld [vmem:[#allocation9 + $0x44] sm:$0xf]
          %v1843 = vld [vmem:[#allocation9 + $0x48] sm:$0xff]
          %v1844 = vld [vmem:[#allocation9 + $0x50] sm:$0xf]
          %v1845 = vld [vmem:[#allocation9 + $0x54] sm:$0xff]
          %v1846 = vld [vmem:[#allocation9 + $0x5c] sm:$0xf]
          %v1847 = vld [vmem:[%s5] sm:$0x7]
          %v1849 = vlaneseq
          %v1850 = vshrl.u32 %v1849, 7
          %v1851 = vsub.s32 0, %v1850
          %v1852 = vrot.slane %v1847, %v1851
          %v1853 = vlaneseq
          %v1854 = vshrl.u32 %v1853, 7
          %v1855 = vsub.s32 1, %v1854
          %v1856 = vrot.slane %v1847, %v1855
          %v1857 = vlaneseq
          %v1858 = vshrl.u32 %v1857, 7
          %v1859 = vsub.s32 2, %v1858
          %v1860 = vrot.slane %v1847, %v1859
          %v1880 = vunpack.c.l.b16 %v1815
          %v1881 = vunpack.c.l.b16 %v1816
          %v1882 = vunpack.c.l.b16 %v1817
          %v1883 = vunpack.c.l.b16 %v1818
          %v1884 = vunpack.c.l.b16 %v1819
          %v1885 = vunpack.c.l.b16 %v1820
          %v1886 = vunpack.c.l.b16 %v1821
          %v1887 = vunpack.c.l.b16 %v1822
          %v1888 = vunpack.c.l.b16 %v1823
          %v1889 = vunpack.c.l.b16 %v1824
          %v1890 = vunpack.c.l.b16 %v1825
          %v1891 = vunpack.c.l.b16 %v1826
          %v1892 = vunpack.c.l.b16 %v1827
          %v1893 = vunpack.c.l.b16 %v1828
          %v1894 = vunpack.c.l.b16 %v1829
          %v1895 = vunpack.c.l.b16 %v1830
          %v1896 = vsel %vm1047, %v1881, %v1880
          %v1897 = vsel %vm1049, %v1882, %v1896
          %v1898 = vsel %vm1051, %v1883, %v1897
          %v1899 = vsel %vm1053, %v1884, %v1898
          %v1900 = vsel %vm1055, %v1885, %v1899
          %v1901 = vsel %vm1057, %v1886, %v1900
          %v1902 = vsel %vm1059, %v1887, %v1901
          %v1903 = vsel %vm1047, %v1889, %v1888
          %v1904 = vsel %vm1049, %v1890, %v1903
          %v1905 = vsel %vm1051, %v1891, %v1904
          %v1906 = vsel %vm1053, %v1892, %v1905
          %v1907 = vsel %vm1055, %v1893, %v1906
          %v1908 = vsel %vm1057, %v1894, %v1907
          %v1909 = vsel %vm1059, %v1895, %v1908
          %v1910 = vpack.c.b16 %v1909, %v1902
          %v1927 = vunpack.c.l.b16 %v1831
          %v1928 = vunpack.c.h.b16 %v1831
          %v1929 = vunpack.c.l.b16 %v1832
          %v1930 = vunpack.c.l.b16 %v1833
          %v1931 = vunpack.c.h.b16 %v1833
          %v1932 = vunpack.c.l.b16 %v1834
          %v1933 = vunpack.c.l.b16 %v1835
          %v1934 = vunpack.c.h.b16 %v1835
          %v1935 = vunpack.c.l.b16 %v1836
          %v1936 = vunpack.c.l.b16 %v1837
          %v1937 = vunpack.c.h.b16 %v1837
          %v1938 = vunpack.c.l.b16 %v1838
          %v1939 = vunpack.c.l.b16 %v1839
          %v1940 = vunpack.c.h.b16 %v1839
          %v1941 = vunpack.c.l.b16 %v1840
          %v1942 = vunpack.c.l.b16 %v1841
          %v1943 = vunpack.c.h.b16 %v1841
          %v1944 = vunpack.c.l.b16 %v1842
          %v1945 = vunpack.c.l.b16 %v1843
          %v1946 = vunpack.c.h.b16 %v1843
          %v1947 = vunpack.c.l.b16 %v1844
          %v1948 = vunpack.c.l.b16 %v1845
          %v1949 = vunpack.c.h.b16 %v1845
          %v1950 = vunpack.c.l.b16 %v1846
          %v1951 = vpack.c.b16 %v1930, %v1927
          %v1952 = vpack.c.b16 %v1931, %v1928
          %v1953 = vpack.c.b16 %v1932, %v1929
          %v1954 = vpack.c.b16 %v1936, %v1933
          %v1955 = vpack.c.b16 %v1937, %v1934
          %v1956 = vpack.c.b16 %v1938, %v1935
          %v1957 = vpack.c.b16 %v1942, %v1939
          %v1958 = vpack.c.b16 %v1943, %v1940
          %v1959 = vpack.c.b16 %v1944, %v1941
          %v1960 = vpack.c.b16 %v1948, %v1945
          %v1961 = vpack.c.b16 %v1949, %v1946
          %v1962 = vpack.c.b16 %v1950, %v1947
          %v1976 = vsel %vm916, %v1910, 0
          %1978 = vmatprep.subr.bf16.mxu0 %v1952
          %1979 = vmatpush1.bf16.msra.mxu0 %v1951
          %1980 = vmatprep.subr.bf16.mxu0 %v1955
          %1981 = vmatpush1.bf16.msra.mxu0 %v1954
          %1982 = vmatprep.subr.bf16.mxu0 %v1958
          %1983 = vmatpush1.bf16.msra.mxu0 %v1957
          %1984 = vmatprep.subr.bf16.mxu0 %v1961
          %1985 = vmatpush1.bf16.msra.mxu0 %v1960
          %1986 = vmatprep.subr.bf16.mxu0 0
          %1987 = vmatpush1.bf16.msra.mxu0 0
          %1988 = vmatprep.subr.bf16.mxu0 0
          %1989 = vmatpush1.bf16.msra.mxu0 0
          %1990 = vmatprep.subr.bf16.mxu0 0
          %1991 = vmatpush1.bf16.msra.mxu0 0
          %1992 = vmatprep.subr.bf16.mxu0 0
          %1993 = vmatpush1.bf16.msra.mxu0 0
          %1994 = vmatprep.subr.bf16.mxu0 0
          %1995 = vmatpush1.bf16.msra.mxu0 0
          %1996 = vmatprep.subr.bf16.mxu0 0
          %1997 = vmatpush1.bf16.msra.mxu0 0
          %1998 = vmatprep.subr.bf16.mxu0 0
          %1999 = vmatpush1.bf16.msra.mxu0 0
          %2000 = vmatprep.subr.bf16.mxu0 0
          %2001 = vmatpush1.bf16.msra.mxu0 0
          %2002 = vmatprep.subr.bf16.mxu0 0
          %2003 = vmatpush1.bf16.msra.mxu0 0
          %2004 = vmatprep.subr.bf16.mxu0 0
          %2005 = vmatpush1.bf16.msra.mxu0 0
          %2006 = vmatprep.subr.bf16.mxu0 0
          %2007 = vmatpush1.bf16.msra.mxu0 0
          %2008 = vmatprep.subr.bf16.mxu0 0
          %2009 = vmatpush1.bf16.msra.mxu0 0
          %2010 = vmatprep.mubr.bf16.mxu0 0
          %2011 = vmatmul.mubr.bf16.gmra.mrb[0].mxu0 %v1976
          %v2012 = vpop.f32.mrb[0].mxu0
          %v2013 = vadd.f32 %v1852, %v2012
          %v2014 = vpop.f32.mrb[0].mxu0
          %v2015 = vadd.f32 %v1856, %v2014
          %v2016 = vpop.f32.mrb[0].mxu0
          %v2017 = vadd.f32 %v1852, %v2016
          %v2018 = vpop.f32.mrb[0].mxu0
          %v2019 = vadd.f32 %v1856, %v2018
          %2020 = vdwg.mxu0
          %2021 = vmatprep.subr.bf16.mxu0 0
          %2022 = vmatpush1.bf16.msra.mxu0 %v1953
          %2023 = vmatprep.subr.bf16.mxu0 0
          %2024 = vmatpush1.bf16.msra.mxu0 %v1956
          %2025 = vmatprep.subr.bf16.mxu0 0
          %2026 = vmatpush1.bf16.msra.mxu0 %v1959
          %2027 = vmatprep.subr.bf16.mxu0 0
          %2028 = vmatpush1.bf16.msra.mxu0 %v1962
          %2029 = vmatprep.subr.bf16.mxu0 0
          %2030 = vmatpush1.bf16.msra.mxu0 0
          %2031 = vmatprep.subr.bf16.mxu0 0
          %2032 = vmatpush1.bf16.msra.mxu0 0
          %2033 = vmatprep.subr.bf16.mxu0 0
          %2034 = vmatpush1.bf16.msra.mxu0 0
          %2035 = vmatprep.subr.bf16.mxu0 0
          %2036 = vmatpush1.bf16.msra.mxu0 0
          %2037 = vmatprep.subr.bf16.mxu0 0
          %2038 = vmatpush1.bf16.msra.mxu0 0
          %2039 = vmatprep.subr.bf16.mxu0 0
          %2040 = vmatpush1.bf16.msra.mxu0 0
          %2041 = vmatprep.subr.bf16.mxu0 0
          %2042 = vmatpush1.bf16.msra.mxu0 0
          %2043 = vmatprep.subr.bf16.mxu0 0
          %2044 = vmatpush1.bf16.msra.mxu0 0
          %2045 = vmatprep.subr.bf16.mxu0 0
          %2046 = vmatpush1.bf16.msra.mxu0 0
          %2047 = vmatprep.subr.bf16.mxu0 0
          %2048 = vmatpush1.bf16.msra.mxu0 0
          %2049 = vmatprep.subr.bf16.mxu0 0
          %2050 = vmatpush1.bf16.msra.mxu0 0
          %2051 = vmatprep.subr.bf16.mxu0 0
          %2052 = vmatpush1.bf16.msra.mxu0 0
          %2053 = vmatprep.mubr.bf16.mxu0 0
          %2054 = vmatmul.mubr.bf16.gmra.mrb[0].mxu0 %v1976
          %v2055 = vpop.f32.mrb[0].mxu0
          %v2056 = vadd.f32 %v1860, %v2055
          %v2057 = vpop.f32.mrb[0].mxu0
          %v2058 = vpop.f32.mrb[0].mxu0
          %v2059 = vadd.f32 %v1860, %v2058
          %v2060 = vpop.f32.mrb[0].mxu0
          %2061 = vdwg.mxu0
          %v2062 = vadd.f32 %v1766, %v2013
          %v2063 = vadd.f32 %v1770, %v2017
          %v2064 = vxor.u32 %v2062, 2147483648
          %v2065 = vxor.u32 %v2063, 2147483648
          %v2066 = vmul.f32 %v2064, 1.442695
          %v2067 = vpow.pop %v2066
          %v2068 = vmul.f32 %v2065, 1.442695
          %v2069 = vpow.pop %v2068
          %v2070 = vadd.f32 %v2067, 1.0
          %v2071 = vadd.f32 %v2069, 1.0
          %v2072 = vrcp.pop %v2070
          %v2073 = vmul.f32 1.0, %v2072
          %v2074 = vrcp.pop %v2071
          %v2075 = vmul.f32 1.0, %v2074
          %v2076 = vadd.f32 %v1768, %v2015
          %v2077 = vadd.f32 %v1772, %v2019
          %v2078 = vxor.u32 %v2076, 2147483648
          %v2079 = vxor.u32 %v2077, 2147483648
          %v2080 = vmul.f32 %v2078, 1.442695
          %v2081 = vpow.pop %v2080
          %v2082 = vmul.f32 %v2079, 1.442695
          %v2083 = vpow.pop %v2082
          %v2084 = vadd.f32 %v2081, 1.0
          %v2085 = vadd.f32 %v2083, 1.0
          %v2086 = vrcp.pop %v2084
          %v2087 = vmul.f32 1.0, %v2086
          %v2088 = vrcp.pop %v2085
          %v2089 = vmul.f32 1.0, %v2088
          %v2090 = vmul.f32 %v2073, %v2056
          %v2091 = vmul.f32 %v2075, %v2059
          %v2092 = vadd.f32 %v1809, %v2090
          %v2093 = vadd.f32 %v1812, %v2091
          %v2094 = vtanh.pop %v2092
          %v2095 = vtanh.pop %v2093
          %v2096 = vsub.f32 1.0, %v2087
          %v2097 = vsub.f32 1.0, %v2089
          %v2098 = vmul.f32 %v2096, %v2094
          %v2099 = vmul.f32 %v2097, %v2095
          %v2116 = vsel %vm1047, %v1566, %v1559
          %v2117 = vsel %vm1049, %v1573, %v2116
          %v2118 = vsel %vm1051, %v1580, %v2117
          %v2119 = vsel %vm1053, %v1587, %v2118
          %v2120 = vsel %vm1055, %v1594, %v2119
          %v2121 = vsel %vm1057, %v1601, %v2120
          %v2122 = vsel %vm1059, %v1608, %v2121
          %v2123 = vsel %vm1047, %v1622, %v1615
          %v2124 = vsel %vm1049, %v1629, %v2123
          %v2125 = vsel %vm1051, %v1636, %v2124
          %v2126 = vsel %vm1053, %v1643, %v2125
          %v2127 = vsel %vm1055, %v1650, %v2126
          %v2128 = vsel %vm1057, %v1657, %v2127
          %v2129 = vsel %vm1059, %v1664, %v2128
          %v2132 = vmul.f32 %v2087, %v2122
          %v2133 = vmul.f32 %v2089, %v2129
          %v2134 = vadd.f32 %v2098, %v2132
          %v2135 = vadd.f32 %v2099, %v2133
          %2136 = vst.msk [vmem:[%s669] sm:$0xff] %vm916, %v2134
          %2137 = vst.msk [vmem:[%s669 + $0x8] sm:$0xff] %vm916, %v2135
          %v2138 = vpack.c.bf16 %v2135, %v2134
          %s2139 = scalar_lea.vmem [#allocation6], 8
          %v2140 = vld [vmem:[%s2139] sm:$0xf]
          %v2141 = vld [vmem:[%s2139 + $0x4] sm:$0xf]
          %v2142 = vunpack.c.l.bf16 %v2140
          %v2143 = vunpack.c.l.bf16 %v2141
          %v2146 = vcombine.high %v2142, %v2142
          %v2148 = vunpack.c.l.s4 1966171168
          %v2149 = vunpack.c.0.s8 %v2148
          %v2150 = vlaneseq
          %v2151 = vshrl.u32 %v2150, 7
          %v2152 = vsub.s32 %v2149, %v2151
          %v2153 = vrot.slane %v2142, %v2152
          %v2155 = vunpack.c.l.s4 1966171168
          %v2156 = vunpack.c.0.s8 %v2155
          %v2157 = vlaneseq
          %v2158 = vshrl.u32 %v2157, 7
          %v2159 = vsub.s32 %v2156, %v2158
          %v2160 = vrot.slane %v2146, %v2159
          %v2161 = vcombine.high %v2153, %v2153
          %v2162 = vcombine.high %v2160, %v2160
          %v2164 = vunpack.c.l.s4 1966171168
          %v2165 = vunpack.c.0.s8 %v2164
          %v2166 = vlaneseq
          %v2167 = vshrl.u32 %v2166, 7
          %v2168 = vsub.s32 %v2165, %v2167
          %v2169 = vrot.slane %v2153, %v2168
          %v2171 = vunpack.c.l.s4 1966171168
          %v2172 = vunpack.c.0.s8 %v2171
          %v2173 = vlaneseq
          %v2174 = vshrl.u32 %v2173, 7
          %v2175 = vsub.s32 %v2172, %v2174
          %v2176 = vrot.slane %v2160, %v2175
          %v2178 = vunpack.c.l.s4 1966171168
          %v2179 = vunpack.c.0.s8 %v2178
          %v2180 = vlaneseq
          %v2181 = vshrl.u32 %v2180, 7
          %v2182 = vsub.s32 %v2179, %v2181
          %v2183 = vrot.slane %v2161, %v2182
          %v2185 = vunpack.c.l.s4 1966171168
          %v2186 = vunpack.c.0.s8 %v2185
          %v2187 = vlaneseq
          %v2188 = vshrl.u32 %v2187, 7
          %v2189 = vsub.s32 %v2186, %v2188
          %v2190 = vrot.slane %v2162, %v2189
          %v2191 = vcombine.high %v2169, %v2169
          %v2192 = vcombine.high %v2176, %v2176
          %v2193 = vcombine.high %v2183, %v2183
          %v2194 = vcombine.high %v2190, %v2190
          %v2195 = vcombine.high %v2143, %v2143
          %v2197 = vunpack.c.l.s4 1966171168
          %v2198 = vunpack.c.0.s8 %v2197
          %v2199 = vlaneseq
          %v2200 = vshrl.u32 %v2199, 7
          %v2201 = vsub.s32 %v2198, %v2200
          %v2202 = vrot.slane %v2143, %v2201
          %v2204 = vunpack.c.l.s4 1966171168
          %v2205 = vunpack.c.0.s8 %v2204
          %v2206 = vlaneseq
          %v2207 = vshrl.u32 %v2206, 7
          %v2208 = vsub.s32 %v2205, %v2207
          %v2209 = vrot.slane %v2195, %v2208
          %v2210 = vcombine.high %v2202, %v2202
          %v2211 = vcombine.high %v2209, %v2209
          %v2213 = vunpack.c.l.s4 1966171168
          %v2214 = vunpack.c.0.s8 %v2213
          %v2215 = vlaneseq
          %v2216 = vshrl.u32 %v2215, 7
          %v2217 = vsub.s32 %v2214, %v2216
          %v2218 = vrot.slane %v2202, %v2217
          %v2220 = vunpack.c.l.s4 1966171168
          %v2221 = vunpack.c.0.s8 %v2220
          %v2222 = vlaneseq
          %v2223 = vshrl.u32 %v2222, 7
          %v2224 = vsub.s32 %v2221, %v2223
          %v2225 = vrot.slane %v2209, %v2224
          %v2227 = vunpack.c.l.s4 1966171168
          %v2228 = vunpack.c.0.s8 %v2227
          %v2229 = vlaneseq
          %v2230 = vshrl.u32 %v2229, 7
          %v2231 = vsub.s32 %v2228, %v2230
          %v2232 = vrot.slane %v2210, %v2231
          %v2234 = vunpack.c.l.s4 1966171168
          %v2235 = vunpack.c.0.s8 %v2234
          %v2236 = vlaneseq
          %v2237 = vshrl.u32 %v2236, 7
          %v2238 = vsub.s32 %v2235, %v2237
          %v2239 = vrot.slane %v2211, %v2238
          %v2240 = vcombine.high %v2218, %v2218
          %v2241 = vcombine.high %v2225, %v2225
          %v2242 = vcombine.high %v2232, %v2232
          %v2243 = vcombine.high %v2239, %v2239
          %v2244 = vlaneseq
          %v2245 = vshrl.u32 %v2244, 7
          %v2246 = vsub.s32 0, %v2245
          %v2247 = vrot.slane %v2169, %v2246
          %v2248 = vlaneseq
          %v2249 = vshrl.u32 %v2248, 7
          %v2250 = vsub.s32 0, %v2249
          %v2251 = vrot.slane %v2183, %v2250
          %v2252 = vlaneseq
          %v2253 = vshrl.u32 %v2252, 7
          %v2254 = vsub.s32 0, %v2253
          %v2255 = vrot.slane %v2191, %v2254
          %v2256 = vlaneseq
          %v2257 = vshrl.u32 %v2256, 7
          %v2258 = vsub.s32 0, %v2257
          %v2259 = vrot.slane %v2193, %v2258
          %v2260 = vlaneseq
          %v2261 = vshrl.u32 %v2260, 7
          %v2262 = vsub.s32 0, %v2261
          %v2263 = vrot.slane %v2176, %v2262
          %v2264 = vlaneseq
          %v2265 = vshrl.u32 %v2264, 7
          %v2266 = vsub.s32 0, %v2265
          %v2267 = vrot.slane %v2190, %v2266
          %v2268 = vlaneseq
          %v2269 = vshrl.u32 %v2268, 7
          %v2270 = vsub.s32 0, %v2269
          %v2271 = vrot.slane %v2192, %v2270
          %v2272 = vlaneseq
          %v2273 = vshrl.u32 %v2272, 7
          %v2274 = vsub.s32 0, %v2273
          %v2275 = vrot.slane %v2194, %v2274
          %v2276 = vlaneseq
          %v2277 = vshrl.u32 %v2276, 7
          %v2278 = vsub.s32 0, %v2277
          %v2279 = vrot.slane %v2218, %v2278
          %v2280 = vlaneseq
          %v2281 = vshrl.u32 %v2280, 7
          %v2282 = vsub.s32 0, %v2281
          %v2283 = vrot.slane %v2232, %v2282
          %v2284 = vlaneseq
          %v2285 = vshrl.u32 %v2284, 7
          %v2286 = vsub.s32 0, %v2285
          %v2287 = vrot.slane %v2240, %v2286
          %v2288 = vlaneseq
          %v2289 = vshrl.u32 %v2288, 7
          %v2290 = vsub.s32 0, %v2289
          %v2291 = vrot.slane %v2242, %v2290
          %v2292 = vlaneseq
          %v2293 = vshrl.u32 %v2292, 7
          %v2294 = vsub.s32 0, %v2293
          %v2295 = vrot.slane %v2225, %v2294
          %v2296 = vlaneseq
          %v2297 = vshrl.u32 %v2296, 7
          %v2298 = vsub.s32 0, %v2297
          %v2299 = vrot.slane %v2239, %v2298
          %v2300 = vlaneseq
          %v2301 = vshrl.u32 %v2300, 7
          %v2302 = vsub.s32 0, %v2301
          %v2303 = vrot.slane %v2241, %v2302
          %v2304 = vlaneseq
          %v2305 = vshrl.u32 %v2304, 7
          %v2306 = vsub.s32 0, %v2305
          %v2307 = vrot.slane %v2243, %v2306
          %v2324 = vmul.f32 %v700, %v2247
          %v2325 = vmul.f32 %v701, %v2251
          %v2326 = vmul.f32 %v702, %v2255
          %v2327 = vmul.f32 %v703, %v2259
          %v2328 = vmul.f32 %v704, %v2263
          %v2329 = vmul.f32 %v705, %v2267
          %v2330 = vmul.f32 %v706, %v2271
          %v2331 = vmul.f32 %v707, %v2275
          %v2332 = vmul.f32 %v708, %v2279
          %v2333 = vmul.f32 %v709, %v2283
          %v2334 = vmul.f32 %v710, %v2287
          %v2335 = vmul.f32 %v711, %v2291
          %v2336 = vmul.f32 %v712, %v2295
          %v2337 = vmul.f32 %v713, %v2299
          %v2338 = vmul.f32 %v714, %v2303
          %v2339 = vmul.f32 %v715, %v2307
          %v2340 = vsel %vm916, %v2324, 0.0
          %2341 = vadd.xlane.f32.xlu0 %v2340
          %v2342 = vpop.xlane.xlu0 %2341
          %v2343 = vsel %vm916, %v2325, 0.0
          %2344 = vadd.xlane.f32.xlu0 %v2343
          %v2345 = vpop.xlane.xlu0 %2344
          %v2346 = vsel %vm916, %v2326, 0.0
          %2347 = vadd.xlane.f32.xlu0 %v2346
          %v2348 = vpop.xlane.xlu0 %2347
          %v2349 = vsel %vm916, %v2327, 0.0
          %2350 = vadd.xlane.f32.xlu0 %v2349
          %v2351 = vpop.xlane.xlu0 %2350
          %v2352 = vsel %vm916, %v2328, 0.0
          %2353 = vadd.xlane.f32.xlu0 %v2352
          %v2354 = vpop.xlane.xlu0 %2353
          %v2355 = vsel %vm916, %v2329, 0.0
          %2356 = vadd.xlane.f32.xlu0 %v2355
          %v2357 = vpop.xlane.xlu0 %2356
          %v2358 = vsel %vm916, %v2330, 0.0
          %2359 = vadd.xlane.f32.xlu0 %v2358
          %v2360 = vpop.xlane.xlu0 %2359
          %v2361 = vsel %vm916, %v2331, 0.0
          %2362 = vadd.xlane.f32.xlu0 %v2361
          %v2363 = vpop.xlane.xlu0 %2362
          %v2364 = vsel %vm916, %v2332, 0.0
          %2365 = vadd.xlane.f32.xlu0 %v2364
          %v2366 = vpop.xlane.xlu0 %2365
          %v2367 = vsel %vm916, %v2333, 0.0
          %2368 = vadd.xlane.f32.xlu0 %v2367
          %v2369 = vpop.xlane.xlu0 %2368
          %v2370 = vsel %vm916, %v2334, 0.0
          %2371 = vadd.xlane.f32.xlu0 %v2370
          %v2372 = vpop.xlane.xlu0 %2371
          %v2373 = vsel %vm916, %v2335, 0.0
          %2374 = vadd.xlane.f32.xlu0 %v2373
          %v2375 = vpop.xlane.xlu0 %2374
          %v2376 = vsel %vm916, %v2336, 0.0
          %2377 = vadd.xlane.f32.xlu0 %v2376
          %v2378 = vpop.xlane.xlu0 %2377
          %v2379 = vsel %vm916, %v2337, 0.0
          %2380 = vadd.xlane.f32.xlu0 %v2379
          %v2381 = vpop.xlane.xlu0 %2380
          %v2382 = vsel %vm916, %v2338, 0.0
          %2383 = vadd.xlane.f32.xlu0 %v2382
          %v2384 = vpop.xlane.xlu0 %2383
          %v2385 = vsel %vm916, %v2339, 0.0
          %2386 = vadd.xlane.f32.xlu0 %v2385
          %v2387 = vpop.xlane.xlu0 %2386
          %v2404 = vlaneseq
          %v2405 = vshrl.u32 %v2404, 7
          %v2406 = vsub.s32 %v982, %v2405
          %v2407 = vrot.slane %v2342, %v2406
          %v2408 = vlaneseq
          %v2409 = vshrl.u32 %v2408, 7
          %v2410 = vsub.s32 %v982, %v2409
          %v2411 = vrot.slane %v2345, %v2410
          %v2412 = vlaneseq
          %v2413 = vshrl.u32 %v2412, 7
          %v2414 = vsub.s32 %v982, %v2413
          %v2415 = vrot.slane %v2348, %v2414
          %v2416 = vlaneseq
          %v2417 = vshrl.u32 %v2416, 7
          %v2418 = vsub.s32 %v982, %v2417
          %v2419 = vrot.slane %v2351, %v2418
          %v2420 = vlaneseq
          %v2421 = vshrl.u32 %v2420, 7
          %v2422 = vsub.s32 %v982, %v2421
          %v2423 = vrot.slane %v2354, %v2422
          %v2424 = vlaneseq
          %v2425 = vshrl.u32 %v2424, 7
          %v2426 = vsub.s32 %v982, %v2425
          %v2427 = vrot.slane %v2357, %v2426
          %v2428 = vlaneseq
          %v2429 = vshrl.u32 %v2428, 7
          %v2430 = vsub.s32 %v982, %v2429
          %v2431 = vrot.slane %v2360, %v2430
          %v2432 = vlaneseq
          %v2433 = vshrl.u32 %v2432, 7
          %v2434 = vsub.s32 %v982, %v2433
          %v2435 = vrot.slane %v2363, %v2434
          %v2436 = vlaneseq
          %v2437 = vshrl.u32 %v2436, 7
          %v2438 = vsub.s32 %v982, %v2437
          %v2439 = vrot.slane %v2366, %v2438
          %v2440 = vlaneseq
          %v2441 = vshrl.u32 %v2440, 7
          %v2442 = vsub.s32 %v982, %v2441
          %v2443 = vrot.slane %v2369, %v2442
          %v2444 = vlaneseq
          %v2445 = vshrl.u32 %v2444, 7
          %v2446 = vsub.s32 %v982, %v2445
          %v2447 = vrot.slane %v2372, %v2446
          %v2448 = vlaneseq
          %v2449 = vshrl.u32 %v2448, 7
          %v2450 = vsub.s32 %v982, %v2449
          %v2451 = vrot.slane %v2375, %v2450
          %v2452 = vlaneseq
          %v2453 = vshrl.u32 %v2452, 7
          %v2454 = vsub.s32 %v982, %v2453
          %v2455 = vrot.slane %v2378, %v2454
          %v2456 = vlaneseq
          %v2457 = vshrl.u32 %v2456, 7
          %v2458 = vsub.s32 %v982, %v2457
          %v2459 = vrot.slane %v2381, %v2458
          %v2460 = vlaneseq
          %v2461 = vshrl.u32 %v2460, 7
          %v2462 = vsub.s32 %v982, %v2461
          %v2463 = vrot.slane %v2384, %v2462
          %v2464 = vlaneseq
          %v2465 = vshrl.u32 %v2464, 7
          %v2466 = vsub.s32 %v982, %v2465
          %v2467 = vrot.slane %v2387, %v2466
          %v2468 = vsel %vm1047, %v2411, %v2407
          %v2469 = vsel %vm1049, %v2415, %v2468
          %v2470 = vsel %vm1051, %v2419, %v2469
          %v2471 = vsel %vm1053, %v2423, %v2470
          %v2472 = vsel %vm1055, %v2427, %v2471
          %v2473 = vsel %vm1057, %v2431, %v2472
          %v2474 = vsel %vm1059, %v2435, %v2473
          %v2475 = vsel %vm1047, %v2443, %v2439
          %v2476 = vsel %vm1049, %v2447, %v2475
          %v2477 = vsel %vm1051, %v2451, %v2476
          %v2478 = vsel %vm1053, %v2455, %v2477
          %v2479 = vsel %vm1055, %v2459, %v2478
          %v2480 = vsel %vm1057, %v2463, %v2479
          %v2481 = vsel %vm1059, %v2467, %v2480
          %v2484 = vsel %vm1070, %v2474, -inf
          %2485 = vmax.xlane.f32.xlu0 %v2484
          %v2486 = vpop.xlane.xlu0 %2485
          %v2487 = vsel %vm1070, %v2481, -inf
          %2488 = vmax.xlane.f32.xlu0 %v2487
          %v2489 = vpop.xlane.xlu0 %2488
          %v2492 = vlaneseq
          %v2493 = vshrl.u32 %v2492, 7
          %v2494 = vsub.s32 0, %v2493
          %v2495 = vrot.slane %v2486, %v2494
          %v2496 = vlaneseq
          %v2497 = vshrl.u32 %v2496, 7
          %v2498 = vsub.s32 1, %v2497
          %v2499 = vrot.slane %v2486, %v2498
          %v2500 = vlaneseq
          %v2501 = vshrl.u32 %v2500, 7
          %v2502 = vsub.s32 2, %v2501
          %v2503 = vrot.slane %v2486, %v2502
          %v2504 = vlaneseq
          %v2505 = vshrl.u32 %v2504, 7
          %v2506 = vsub.s32 3, %v2505
          %v2507 = vrot.slane %v2486, %v2506
          %v2508 = vlaneseq
          %v2509 = vshrl.u32 %v2508, 7
          %v2510 = vsub.s32 4, %v2509
          %v2511 = vrot.slane %v2486, %v2510
          %v2512 = vlaneseq
          %v2513 = vshrl.u32 %v2512, 7
          %v2514 = vsub.s32 5, %v2513
          %v2515 = vrot.slane %v2486, %v2514
          %v2516 = vlaneseq
          %v2517 = vshrl.u32 %v2516, 7
          %v2518 = vsub.s32 6, %v2517
          %v2519 = vrot.slane %v2486, %v2518
          %v2520 = vlaneseq
          %v2521 = vshrl.u32 %v2520, 7
          %v2522 = vsub.s32 7, %v2521
          %v2523 = vrot.slane %v2486, %v2522
          %v2524 = vlaneseq
          %v2525 = vshrl.u32 %v2524, 7
          %v2526 = vsub.s32 0, %v2525
          %v2527 = vrot.slane %v2489, %v2526
          %v2528 = vlaneseq
          %v2529 = vshrl.u32 %v2528, 7
          %v2530 = vsub.s32 1, %v2529
          %v2531 = vrot.slane %v2489, %v2530
          %v2532 = vlaneseq
          %v2533 = vshrl.u32 %v2532, 7
          %v2534 = vsub.s32 2, %v2533
          %v2535 = vrot.slane %v2489, %v2534
          %v2536 = vlaneseq
          %v2537 = vshrl.u32 %v2536, 7
          %v2538 = vsub.s32 3, %v2537
          %v2539 = vrot.slane %v2489, %v2538
          %v2540 = vlaneseq
          %v2541 = vshrl.u32 %v2540, 7
          %v2542 = vsub.s32 4, %v2541
          %v2543 = vrot.slane %v2489, %v2542
          %v2544 = vlaneseq
          %v2545 = vshrl.u32 %v2544, 7
          %v2546 = vsub.s32 5, %v2545
          %v2547 = vrot.slane %v2489, %v2546
          %v2548 = vlaneseq
          %v2549 = vshrl.u32 %v2548, 7
          %v2550 = vsub.s32 6, %v2549
          %v2551 = vrot.slane %v2489, %v2550
          %v2552 = vlaneseq
          %v2553 = vshrl.u32 %v2552, 7
          %v2554 = vsub.s32 7, %v2553
          %v2555 = vrot.slane %v2489, %v2554
          %v2572 = vsub.f32 %v2342, %v2495
          %v2573 = vsub.f32 %v2345, %v2499
          %v2574 = vsub.f32 %v2348, %v2503
          %v2575 = vsub.f32 %v2351, %v2507
          %v2576 = vsub.f32 %v2354, %v2511
          %v2577 = vsub.f32 %v2357, %v2515
          %v2578 = vsub.f32 %v2360, %v2519
          %v2579 = vsub.f32 %v2363, %v2523
          %v2580 = vsub.f32 %v2366, %v2527
          %v2581 = vsub.f32 %v2369, %v2531
          %v2582 = vsub.f32 %v2372, %v2535
          %v2583 = vsub.f32 %v2375, %v2539
          %v2584 = vsub.f32 %v2378, %v2543
          %v2585 = vsub.f32 %v2381, %v2547
          %v2586 = vsub.f32 %v2384, %v2551
          %v2587 = vsub.f32 %v2387, %v2555
          %v2588 = vmul.f32 %v2572, 1.442695
          %v2589 = vpow.pop %v2588
          %v2590 = vmul.f32 %v2573, 1.442695
          %v2591 = vpow.pop %v2590
          %v2592 = vmul.f32 %v2574, 1.442695
          %v2593 = vpow.pop %v2592
          %v2594 = vmul.f32 %v2575, 1.442695
          %v2595 = vpow.pop %v2594
          %v2596 = vmul.f32 %v2576, 1.442695
          %v2597 = vpow.pop %v2596
          %v2598 = vmul.f32 %v2577, 1.442695
          %v2599 = vpow.pop %v2598
          %v2600 = vmul.f32 %v2578, 1.442695
          %v2601 = vpow.pop %v2600
          %v2602 = vmul.f32 %v2579, 1.442695
          %v2603 = vpow.pop %v2602
          %v2604 = vmul.f32 %v2580, 1.442695
          %v2605 = vpow.pop %v2604
          %v2606 = vmul.f32 %v2581, 1.442695
          %v2607 = vpow.pop %v2606
          %v2608 = vmul.f32 %v2582, 1.442695
          %v2609 = vpow.pop %v2608
          %v2610 = vmul.f32 %v2583, 1.442695
          %v2611 = vpow.pop %v2610
          %v2612 = vmul.f32 %v2584, 1.442695
          %v2613 = vpow.pop %v2612
          %v2614 = vmul.f32 %v2585, 1.442695
          %v2615 = vpow.pop %v2614
          %v2616 = vmul.f32 %v2586, 1.442695
          %v2617 = vpow.pop %v2616
          %v2618 = vmul.f32 %v2587, 1.442695
          %v2619 = vpow.pop %v2618
          %2636 = vset.pattern.permute.xlu0 0
          %2637 = vperm.xlu0 %2636, %v2589
          %v2638 = vpop.permute.xlu0 %2637
          %2639 = vset.pattern.permute.xlu0 0
          %2640 = vperm.xlu0 %2639, %v2591
          %v2641 = vpop.permute.xlu0 %2640
          %2642 = vset.pattern.permute.xlu0 0
          %2643 = vperm.xlu0 %2642, %v2593
          %v2644 = vpop.permute.xlu0 %2643
          %2645 = vset.pattern.permute.xlu0 0
          %2646 = vperm.xlu0 %2645, %v2595
          %v2647 = vpop.permute.xlu0 %2646
          %2648 = vset.pattern.permute.xlu0 0
          %2649 = vperm.xlu0 %2648, %v2597
          %v2650 = vpop.permute.xlu0 %2649
          %2651 = vset.pattern.permute.xlu0 0
          %2652 = vperm.xlu0 %2651, %v2599
          %v2653 = vpop.permute.xlu0 %2652
          %2654 = vset.pattern.permute.xlu0 0
          %2655 = vperm.xlu0 %2654, %v2601
          %v2656 = vpop.permute.xlu0 %2655
          %2657 = vset.pattern.permute.xlu0 0
          %2658 = vperm.xlu0 %2657, %v2603
          %v2659 = vpop.permute.xlu0 %2658
          %2660 = vset.pattern.permute.xlu0 0
          %2661 = vperm.xlu0 %2660, %v2605
          %v2662 = vpop.permute.xlu0 %2661
          %2663 = vset.pattern.permute.xlu0 0
          %2664 = vperm.xlu0 %2663, %v2607
          %v2665 = vpop.permute.xlu0 %2664
          %2666 = vset.pattern.permute.xlu0 0
          %2667 = vperm.xlu0 %2666, %v2609
          %v2668 = vpop.permute.xlu0 %2667
          %2669 = vset.pattern.permute.xlu0 0
          %2670 = vperm.xlu0 %2669, %v2611
          %v2671 = vpop.permute.xlu0 %2670
          %2672 = vset.pattern.permute.xlu0 0
          %2673 = vperm.xlu0 %2672, %v2613
          %v2674 = vpop.permute.xlu0 %2673
          %2675 = vset.pattern.permute.xlu0 0
          %2676 = vperm.xlu0 %2675, %v2615
          %v2677 = vpop.permute.xlu0 %2676
          %2678 = vset.pattern.permute.xlu0 0
          %2679 = vperm.xlu0 %2678, %v2617
          %v2680 = vpop.permute.xlu0 %2679
          %2681 = vset.pattern.permute.xlu0 0
          %2682 = vperm.xlu0 %2681, %v2619
          %v2683 = vpop.permute.xlu0 %2682
          %v2684 = vlaneseq
          %v2685 = vshrl.u32 %v2684, 7
          %v2686 = vsub.s32 %v982, %v2685
          %v2687 = vrot.slane %v2638, %v2686
          %v2688 = vlaneseq
          %v2689 = vshrl.u32 %v2688, 7
          %v2690 = vsub.s32 %v982, %v2689
          %v2691 = vrot.slane %v2641, %v2690
          %v2692 = vlaneseq
          %v2693 = vshrl.u32 %v2692, 7
          %v2694 = vsub.s32 %v982, %v2693
          %v2695 = vrot.slane %v2644, %v2694
          %v2696 = vlaneseq
          %v2697 = vshrl.u32 %v2696, 7
          %v2698 = vsub.s32 %v982, %v2697
          %v2699 = vrot.slane %v2647, %v2698
          %v2700 = vlaneseq
          %v2701 = vshrl.u32 %v2700, 7
          %v2702 = vsub.s32 %v982, %v2701
          %v2703 = vrot.slane %v2650, %v2702
          %v2704 = vlaneseq
          %v2705 = vshrl.u32 %v2704, 7
          %v2706 = vsub.s32 %v982, %v2705
          %v2707 = vrot.slane %v2653, %v2706
          %v2708 = vlaneseq
          %v2709 = vshrl.u32 %v2708, 7
          %v2710 = vsub.s32 %v982, %v2709
          %v2711 = vrot.slane %v2656, %v2710
          %v2712 = vlaneseq
          %v2713 = vshrl.u32 %v2712, 7
          %v2714 = vsub.s32 %v982, %v2713
          %v2715 = vrot.slane %v2659, %v2714
          %v2716 = vlaneseq
          %v2717 = vshrl.u32 %v2716, 7
          %v2718 = vsub.s32 %v982, %v2717
          %v2719 = vrot.slane %v2662, %v2718
          %v2720 = vlaneseq
          %v2721 = vshrl.u32 %v2720, 7
          %v2722 = vsub.s32 %v982, %v2721
          %v2723 = vrot.slane %v2665, %v2722
          %v2724 = vlaneseq
          %v2725 = vshrl.u32 %v2724, 7
          %v2726 = vsub.s32 %v982, %v2725
          %v2727 = vrot.slane %v2668, %v2726
          %v2728 = vlaneseq
          %v2729 = vshrl.u32 %v2728, 7
          %v2730 = vsub.s32 %v982, %v2729
          %v2731 = vrot.slane %v2671, %v2730
          %v2732 = vlaneseq
          %v2733 = vshrl.u32 %v2732, 7
          %v2734 = vsub.s32 %v982, %v2733
          %v2735 = vrot.slane %v2674, %v2734
          %v2736 = vlaneseq
          %v2737 = vshrl.u32 %v2736, 7
          %v2738 = vsub.s32 %v982, %v2737
          %v2739 = vrot.slane %v2677, %v2738
          %v2740 = vlaneseq
          %v2741 = vshrl.u32 %v2740, 7
          %v2742 = vsub.s32 %v982, %v2741
          %v2743 = vrot.slane %v2680, %v2742
          %v2744 = vlaneseq
          %v2745 = vshrl.u32 %v2744, 7
          %v2746 = vsub.s32 %v982, %v2745
          %v2747 = vrot.slane %v2683, %v2746
          %v2748 = vsel %vm1047, %v2691, %v2687
          %v2749 = vsel %vm1049, %v2695, %v2748
          %v2750 = vsel %vm1051, %v2699, %v2749
          %v2751 = vsel %vm1053, %v2703, %v2750
          %v2752 = vsel %vm1055, %v2707, %v2751
          %v2753 = vsel %vm1057, %v2711, %v2752
          %v2754 = vsel %vm1059, %v2715, %v2753
          %v2755 = vsel %vm1047, %v2723, %v2719
          %v2756 = vsel %vm1049, %v2727, %v2755
          %v2757 = vsel %vm1051, %v2731, %v2756
          %v2758 = vsel %vm1053, %v2735, %v2757
          %v2759 = vsel %vm1055, %v2739, %v2758
          %v2760 = vsel %vm1057, %v2743, %v2759
          %v2761 = vsel %vm1059, %v2747, %v2760
          %v2764 = vsel %vm1070, %v2754, 0.0
          %2765 = vadd.xlane.f32.xlu0 %v2764
          %v2766 = vpop.xlane.xlu0 %2765
          %v2767 = vsel %vm1070, %v2761, 0.0
          %2768 = vadd.xlane.f32.xlu0 %v2767
          %v2769 = vpop.xlane.xlu0 %2768
          %v2770 = vrcp.pop %v2766
          %v2771 = vrcp.pop %v2769
          %v2774 = vlaneseq
          %v2775 = vshrl.u32 %v2774, 7
          %v2776 = vsub.s32 0, %v2775
          %v2777 = vrot.slane %v2770, %v2776
          %v2778 = vlaneseq
          %v2779 = vshrl.u32 %v2778, 7
          %v2780 = vsub.s32 1, %v2779
          %v2781 = vrot.slane %v2770, %v2780
          %v2782 = vlaneseq
          %v2783 = vshrl.u32 %v2782, 7
          %v2784 = vsub.s32 2, %v2783
          %v2785 = vrot.slane %v2770, %v2784
          %v2786 = vlaneseq
          %v2787 = vshrl.u32 %v2786, 7
          %v2788 = vsub.s32 3, %v2787
          %v2789 = vrot.slane %v2770, %v2788
          %v2790 = vlaneseq
          %v2791 = vshrl.u32 %v2790, 7
          %v2792 = vsub.s32 4, %v2791
          %v2793 = vrot.slane %v2770, %v2792
          %v2794 = vlaneseq
          %v2795 = vshrl.u32 %v2794, 7
          %v2796 = vsub.s32 5, %v2795
          %v2797 = vrot.slane %v2770, %v2796
          %v2798 = vlaneseq
          %v2799 = vshrl.u32 %v2798, 7
          %v2800 = vsub.s32 6, %v2799
          %v2801 = vrot.slane %v2770, %v2800
          %v2802 = vlaneseq
          %v2803 = vshrl.u32 %v2802, 7
          %v2804 = vsub.s32 7, %v2803
          %v2805 = vrot.slane %v2770, %v2804
          %v2806 = vlaneseq
          %v2807 = vshrl.u32 %v2806, 7
          %v2808 = vsub.s32 0, %v2807
          %v2809 = vrot.slane %v2771, %v2808
          %v2810 = vlaneseq
          %v2811 = vshrl.u32 %v2810, 7
          %v2812 = vsub.s32 1, %v2811
          %v2813 = vrot.slane %v2771, %v2812
          %v2814 = vlaneseq
          %v2815 = vshrl.u32 %v2814, 7
          %v2816 = vsub.s32 2, %v2815
          %v2817 = vrot.slane %v2771, %v2816
          %v2818 = vlaneseq
          %v2819 = vshrl.u32 %v2818, 7
          %v2820 = vsub.s32 3, %v2819
          %v2821 = vrot.slane %v2771, %v2820
          %v2822 = vlaneseq
          %v2823 = vshrl.u32 %v2822, 7
          %v2824 = vsub.s32 4, %v2823
          %v2825 = vrot.slane %v2771, %v2824
          %v2826 = vlaneseq
          %v2827 = vshrl.u32 %v2826, 7
          %v2828 = vsub.s32 5, %v2827
          %v2829 = vrot.slane %v2771, %v2828
          %v2830 = vlaneseq
          %v2831 = vshrl.u32 %v2830, 7
          %v2832 = vsub.s32 6, %v2831
          %v2833 = vrot.slane %v2771, %v2832
          %v2834 = vlaneseq
          %v2835 = vshrl.u32 %v2834, 7
          %v2836 = vsub.s32 7, %v2835
          %v2837 = vrot.slane %v2771, %v2836
          %v2854 = vmul.f32 %v2589, %v2777
          %v2855 = vmul.f32 %v2591, %v2781
          %v2856 = vmul.f32 %v2593, %v2785
          %v2857 = vmul.f32 %v2595, %v2789
          %v2858 = vmul.f32 %v2597, %v2793
          %v2859 = vmul.f32 %v2599, %v2797
          %v2860 = vmul.f32 %v2601, %v2801
          %v2861 = vmul.f32 %v2603, %v2805
          %v2862 = vmul.f32 %v2605, %v2809
          %v2863 = vmul.f32 %v2607, %v2813
          %v2864 = vmul.f32 %v2609, %v2817
          %v2865 = vmul.f32 %v2611, %v2821
          %v2866 = vmul.f32 %v2613, %v2825
          %v2867 = vmul.f32 %v2615, %v2829
          %v2868 = vmul.f32 %v2617, %v2833
          %v2869 = vmul.f32 %v2619, %v2837
          %2871 = vset.pattern.permute.xlu0 0
          %2872 = vperm.xlu0 %2871, %v2854
          %v2873 = vpop.permute.xlu0 %2872
          %2876 = vset.pattern.permute.xlu0 0
          %2877 = vperm.xlu0 %2876, %v2855
          %v2878 = vpop.permute.xlu0 %2877
          %2881 = vset.pattern.permute.xlu0 0
          %2882 = vperm.xlu0 %2881, %v2856
          %v2883 = vpop.permute.xlu0 %2882
          %2886 = vset.pattern.permute.xlu0 0
          %2887 = vperm.xlu0 %2886, %v2857
          %v2888 = vpop.permute.xlu0 %2887
          %2891 = vset.pattern.permute.xlu0 0
          %2892 = vperm.xlu0 %2891, %v2858
          %v2893 = vpop.permute.xlu0 %2892
          %2896 = vset.pattern.permute.xlu0 0
          %2897 = vperm.xlu0 %2896, %v2859
          %v2898 = vpop.permute.xlu0 %2897
          %2901 = vset.pattern.permute.xlu0 0
          %2902 = vperm.xlu0 %2901, %v2860
          %v2903 = vpop.permute.xlu0 %2902
          %2906 = vset.pattern.permute.xlu0 0
          %2907 = vperm.xlu0 %2906, %v2861
          %v2908 = vpop.permute.xlu0 %2907
          %2911 = vset.pattern.permute.xlu0 0
          %2912 = vperm.xlu0 %2911, %v2862
          %v2913 = vpop.permute.xlu0 %2912
          %2916 = vset.pattern.permute.xlu0 0
          %2917 = vperm.xlu0 %2916, %v2863
          %v2918 = vpop.permute.xlu0 %2917
          %2921 = vset.pattern.permute.xlu0 0
          %2922 = vperm.xlu0 %2921, %v2864
          %v2923 = vpop.permute.xlu0 %2922
          %2926 = vset.pattern.permute.xlu0 0
          %2927 = vperm.xlu0 %2926, %v2865
          %v2928 = vpop.permute.xlu0 %2927
          %2931 = vset.pattern.permute.xlu0 0
          %2932 = vperm.xlu0 %2931, %v2866
          %v2933 = vpop.permute.xlu0 %2932
          %2936 = vset.pattern.permute.xlu0 0
          %2937 = vperm.xlu0 %2936, %v2867
          %v2938 = vpop.permute.xlu0 %2937
          %2941 = vset.pattern.permute.xlu0 0
          %2942 = vperm.xlu0 %2941, %v2868
          %v2943 = vpop.permute.xlu0 %2942
          %2946 = vset.pattern.permute.xlu0 0
          %2947 = vperm.xlu0 %2946, %v2869
          %v2948 = vpop.permute.xlu0 %2947
          %v2950 = vmul.f32 %v2873, %v700
          %v2951 = vmul.f32 %v2878, %v701
          %v2952 = vmul.f32 %v2883, %v702
          %v2953 = vmul.f32 %v2888, %v703
          %v2954 = vmul.f32 %v2893, %v704
          %v2955 = vmul.f32 %v2898, %v705
          %v2956 = vmul.f32 %v2903, %v706
          %v2957 = vmul.f32 %v2908, %v707
          %v2958 = vmul.f32 %v2913, %v708
          %v2959 = vmul.f32 %v2918, %v709
          %v2960 = vmul.f32 %v2923, %v710
          %v2961 = vmul.f32 %v2928, %v711
          %v2962 = vmul.f32 %v2933, %v712
          %v2963 = vmul.f32 %v2938, %v713
          %v2964 = vmul.f32 %v2943, %v714
          %v2965 = vmul.f32 %v2948, %v715
          %v2966 = vsel %vm916, %v2950, 0.0
          %v2967 = vrot.slane %v2966, 4
          %v2968 = vadd.f32 %v2966, %v2967
          %v2969 = vrot.slane %v2968, 2
          %v2970 = vadd.f32 %v2968, %v2969
          %v2971 = vrot.slane %v2970, 1
          %v2972 = vadd.f32 %v2970, %v2971
          %v2973 = vsel %vm916, %v2951, 0.0
          %v2974 = vrot.slane %v2973, 4
          %v2975 = vadd.f32 %v2973, %v2974
          %v2976 = vrot.slane %v2975, 2
          %v2977 = vadd.f32 %v2975, %v2976
          %v2978 = vrot.slane %v2977, 1
          %v2979 = vadd.f32 %v2977, %v2978
          %v2980 = vsel %vm916, %v2952, 0.0
          %v2981 = vrot.slane %v2980, 4
          %v2982 = vadd.f32 %v2980, %v2981
          %v2983 = vrot.slane %v2982, 2
          %v2984 = vadd.f32 %v2982, %v2983
          %v2985 = vrot.slane %v2984, 1
          %v2986 = vadd.f32 %v2984, %v2985
          %v2987 = vsel %vm916, %v2953, 0.0
          %v2988 = vrot.slane %v2987, 4
          %v2989 = vadd.f32 %v2987, %v2988
          %v2990 = vrot.slane %v2989, 2
          %v2991 = vadd.f32 %v2989, %v2990
          %v2992 = vrot.slane %v2991, 1
          %v2993 = vadd.f32 %v2991, %v2992
          %v2994 = vsel %vm916, %v2954, 0.0
          %v2995 = vrot.slane %v2994, 4
          %v2996 = vadd.f32 %v2994, %v2995
          %v2997 = vrot.slane %v2996, 2
          %v2998 = vadd.f32 %v2996, %v2997
          %v2999 = vrot.slane %v2998, 1
          %v3000 = vadd.f32 %v2998, %v2999
          %v3001 = vsel %vm916, %v2955, 0.0
          %v3002 = vrot.slane %v3001, 4
          %v3003 = vadd.f32 %v3001, %v3002
          %v3004 = vrot.slane %v3003, 2
          %v3005 = vadd.f32 %v3003, %v3004
          %v3006 = vrot.slane %v3005, 1
          %v3007 = vadd.f32 %v3005, %v3006
          %v3008 = vsel %vm916, %v2956, 0.0
          %v3009 = vrot.slane %v3008, 4
          %v3010 = vadd.f32 %v3008, %v3009
          %v3011 = vrot.slane %v3010, 2
          %v3012 = vadd.f32 %v3010, %v3011
          %v3013 = vrot.slane %v3012, 1
          %v3014 = vadd.f32 %v3012, %v3013
          %v3015 = vsel %vm916, %v2957, 0.0
          %v3016 = vrot.slane %v3015, 4
          %v3017 = vadd.f32 %v3015, %v3016
          %v3018 = vrot.slane %v3017, 2
          %v3019 = vadd.f32 %v3017, %v3018
          %v3020 = vrot.slane %v3019, 1
          %v3021 = vadd.f32 %v3019, %v3020
          %v3022 = vsel %vm916, %v2958, 0.0
          %v3023 = vrot.slane %v3022, 4
          %v3024 = vadd.f32 %v3022, %v3023
          %v3025 = vrot.slane %v3024, 2
          %v3026 = vadd.f32 %v3024, %v3025
          %v3027 = vrot.slane %v3026, 1
          %v3028 = vadd.f32 %v3026, %v3027
          %v3029 = vsel %vm916, %v2959, 0.0
          %v3030 = vrot.slane %v3029, 4
          %v3031 = vadd.f32 %v3029, %v3030
          %v3032 = vrot.slane %v3031, 2
          %v3033 = vadd.f32 %v3031, %v3032
          %v3034 = vrot.slane %v3033, 1
          %v3035 = vadd.f32 %v3033, %v3034
          %v3036 = vsel %vm916, %v2960, 0.0
          %v3037 = vrot.slane %v3036, 4
          %v3038 = vadd.f32 %v3036, %v3037
          %v3039 = vrot.slane %v3038, 2
          %v3040 = vadd.f32 %v3038, %v3039
          %v3041 = vrot.slane %v3040, 1
          %v3042 = vadd.f32 %v3040, %v3041
          %v3043 = vsel %vm916, %v2961, 0.0
          %v3044 = vrot.slane %v3043, 4
          %v3045 = vadd.f32 %v3043, %v3044
          %v3046 = vrot.slane %v3045, 2
          %v3047 = vadd.f32 %v3045, %v3046
          %v3048 = vrot.slane %v3047, 1
          %v3049 = vadd.f32 %v3047, %v3048
          %v3050 = vsel %vm916, %v2962, 0.0
          %v3051 = vrot.slane %v3050, 4
          %v3052 = vadd.f32 %v3050, %v3051
          %v3053 = vrot.slane %v3052, 2
          %v3054 = vadd.f32 %v3052, %v3053
          %v3055 = vrot.slane %v3054, 1
          %v3056 = vadd.f32 %v3054, %v3055
          %v3057 = vsel %vm916, %v2963, 0.0
          %v3058 = vrot.slane %v3057, 4
          %v3059 = vadd.f32 %v3057, %v3058
          %v3060 = vrot.slane %v3059, 2
          %v3061 = vadd.f32 %v3059, %v3060
          %v3062 = vrot.slane %v3061, 1
          %v3063 = vadd.f32 %v3061, %v3062
          %v3064 = vsel %vm916, %v2964, 0.0
          %v3065 = vrot.slane %v3064, 4
          %v3066 = vadd.f32 %v3064, %v3065
          %v3067 = vrot.slane %v3066, 2
          %v3068 = vadd.f32 %v3066, %v3067
          %v3069 = vrot.slane %v3068, 1
          %v3070 = vadd.f32 %v3068, %v3069
          %v3071 = vsel %vm916, %v2965, 0.0
          %v3072 = vrot.slane %v3071, 4
          %v3073 = vadd.f32 %v3071, %v3072
          %v3074 = vrot.slane %v3073, 2
          %v3075 = vadd.f32 %v3073, %v3074
          %v3076 = vrot.slane %v3075, 1
          %v3077 = vadd.f32 %v3075, %v3076
          %v3078 = vld [vmem:[#allocation12] sm:$0xff]
          %v3079 = vld [vmem:[#allocation12 + $0x8] sm:$0xf]
          %v3080 = vld [vmem:[#allocation12 + $0xc] sm:$0xff]
          %v3081 = vld [vmem:[#allocation12 + $0x14] sm:$0xf]
          %v3082 = vld [vmem:[#allocation12 + $0x18] sm:$0xff]
          %v3083 = vld [vmem:[#allocation12 + $0x20] sm:$0xf]
          %v3084 = vld [vmem:[#allocation12 + $0x24] sm:$0xff]
          %v3085 = vld [vmem:[#allocation12 + $0x2c] sm:$0xf]
          %v3086 = vld [vmem:[#allocation12 + $0x30] sm:$0xff]
          %v3087 = vld [vmem:[#allocation12 + $0x38] sm:$0xf]
          %v3088 = vld [vmem:[#allocation12 + $0x3c] sm:$0xff]
          %v3089 = vld [vmem:[#allocation12 + $0x44] sm:$0xf]
          %v3090 = vld [vmem:[#allocation12 + $0x48] sm:$0xff]
          %v3091 = vld [vmem:[#allocation12 + $0x50] sm:$0xf]
          %v3092 = vld [vmem:[#allocation12 + $0x54] sm:$0xff]
          %v3093 = vld [vmem:[#allocation12 + $0x5c] sm:$0xf]
          %s3094 = scalar_lea.vmem %s4, 3
          %v3095 = vld [vmem:[%s3094] sm:$0x7]
          %v3097 = vlaneseq
          %v3098 = vshrl.u32 %v3097, 7
          %v3099 = vsub.s32 0, %v3098
          %v3100 = vrot.slane %v3095, %v3099
          %v3101 = vlaneseq
          %v3102 = vshrl.u32 %v3101, 7
          %v3103 = vsub.s32 1, %v3102
          %v3104 = vrot.slane %v3095, %v3103
          %v3105 = vlaneseq
          %v3106 = vshrl.u32 %v3105, 7
          %v3107 = vsub.s32 2, %v3106
          %v3108 = vrot.slane %v3095, %v3107
          %v3128 = vunpack.c.l.b16 %v3078
          %v3129 = vunpack.c.h.b16 %v3078
          %v3130 = vunpack.c.l.b16 %v3079
          %v3131 = vunpack.c.l.b16 %v3080
          %v3132 = vunpack.c.h.b16 %v3080
          %v3133 = vunpack.c.l.b16 %v3081
          %v3134 = vunpack.c.l.b16 %v3082
          %v3135 = vunpack.c.h.b16 %v3082
          %v3136 = vunpack.c.l.b16 %v3083
          %v3137 = vunpack.c.l.b16 %v3084
          %v3138 = vunpack.c.h.b16 %v3084
          %v3139 = vunpack.c.l.b16 %v3085
          %v3140 = vunpack.c.l.b16 %v3086
          %v3141 = vunpack.c.h.b16 %v3086
          %v3142 = vunpack.c.l.b16 %v3087
          %v3143 = vunpack.c.l.b16 %v3088
          %v3144 = vunpack.c.h.b16 %v3088
          %v3145 = vunpack.c.l.b16 %v3089
          %v3146 = vunpack.c.l.b16 %v3090
          %v3147 = vunpack.c.h.b16 %v3090
          %v3148 = vunpack.c.l.b16 %v3091
          %v3149 = vunpack.c.l.b16 %v3092
          %v3150 = vunpack.c.h.b16 %v3092
          %v3151 = vunpack.c.l.b16 %v3093
          %v3152 = vpack.c.b16 %v3131, %v3128
          %v3153 = vpack.c.b16 %v3132, %v3129
          %v3154 = vpack.c.b16 %v3133, %v3130
          %v3155 = vpack.c.b16 %v3137, %v3134
          %v3156 = vpack.c.b16 %v3138, %v3135
          %v3157 = vpack.c.b16 %v3139, %v3136
          %v3158 = vpack.c.b16 %v3143, %v3140
          %v3159 = vpack.c.b16 %v3144, %v3141
          %v3160 = vpack.c.b16 %v3145, %v3142
          %v3161 = vpack.c.b16 %v3149, %v3146
          %v3162 = vpack.c.b16 %v3150, %v3147
          %v3163 = vpack.c.b16 %v3151, %v3148
          %v3177 = vsel %vm916, %v2138, 0
          %3179 = vmatprep.subr.bf16.mxu0 %v3153
          %3180 = vmatpush1.bf16.msra.mxu0 %v3152
          %3181 = vmatprep.subr.bf16.mxu0 %v3156
          %3182 = vmatpush1.bf16.msra.mxu0 %v3155
          %3183 = vmatprep.subr.bf16.mxu0 %v3159
          %3184 = vmatpush1.bf16.msra.mxu0 %v3158
          %3185 = vmatprep.subr.bf16.mxu0 %v3162
          %3186 = vmatpush1.bf16.msra.mxu0 %v3161
          %3187 = vmatprep.subr.bf16.mxu0 0
          %3188 = vmatpush1.bf16.msra.mxu0 0
          %3189 = vmatprep.subr.bf16.mxu0 0
          %3190 = vmatpush1.bf16.msra.mxu0 0
          %3191 = vmatprep.subr.bf16.mxu0 0
          %3192 = vmatpush1.bf16.msra.mxu0 0
          %3193 = vmatprep.subr.bf16.mxu0 0
          %3194 = vmatpush1.bf16.msra.mxu0 0
          %3195 = vmatprep.subr.bf16.mxu0 0
          %3196 = vmatpush1.bf16.msra.mxu0 0
          %3197 = vmatprep.subr.bf16.mxu0 0
          %3198 = vmatpush1.bf16.msra.mxu0 0
          %3199 = vmatprep.subr.bf16.mxu0 0
          %3200 = vmatpush1.bf16.msra.mxu0 0
          %3201 = vmatprep.subr.bf16.mxu0 0
          %3202 = vmatpush1.bf16.msra.mxu0 0
          %3203 = vmatprep.subr.bf16.mxu0 0
          %3204 = vmatpush1.bf16.msra.mxu0 0
          %3205 = vmatprep.subr.bf16.mxu0 0
          %3206 = vmatpush1.bf16.msra.mxu0 0
          %3207 = vmatprep.subr.bf16.mxu0 0
          %3208 = vmatpush1.bf16.msra.mxu0 0
          %3209 = vmatprep.subr.bf16.mxu0 0
          %3210 = vmatpush1.bf16.msra.mxu0 0
          %3211 = vmatprep.mubr.bf16.mxu0 0
          %3212 = vmatmul.mubr.bf16.gmra.mrb[0].mxu0 %v3177
          %v3213 = vpop.f32.mrb[0].mxu0
          %v3214 = vadd.f32 %v3100, %v3213
          %v3215 = vpop.f32.mrb[0].mxu0
          %v3216 = vadd.f32 %v3104, %v3215
          %v3217 = vpop.f32.mrb[0].mxu0
          %v3218 = vadd.f32 %v3100, %v3217
          %v3219 = vpop.f32.mrb[0].mxu0
          %v3220 = vadd.f32 %v3104, %v3219
          %3221 = vdwg.mxu0
          %3222 = vmatprep.subr.bf16.mxu0 0
          %3223 = vmatpush1.bf16.msra.mxu0 %v3154
          %3224 = vmatprep.subr.bf16.mxu0 0
          %3225 = vmatpush1.bf16.msra.mxu0 %v3157
          %3226 = vmatprep.subr.bf16.mxu0 0
          %3227 = vmatpush1.bf16.msra.mxu0 %v3160
          %3228 = vmatprep.subr.bf16.mxu0 0
          %3229 = vmatpush1.bf16.msra.mxu0 %v3163
          %3230 = vmatprep.subr.bf16.mxu0 0
          %3231 = vmatpush1.bf16.msra.mxu0 0
          %3232 = vmatprep.subr.bf16.mxu0 0
          %3233 = vmatpush1.bf16.msra.mxu0 0
          %3234 = vmatprep.subr.bf16.mxu0 0
          %3235 = vmatpush1.bf16.msra.mxu0 0
          %3236 = vmatprep.subr.bf16.mxu0 0
          %3237 = vmatpush1.bf16.msra.mxu0 0
          %3238 = vmatprep.subr.bf16.mxu0 0
          %3239 = vmatpush1.bf16.msra.mxu0 0
          %3240 = vmatprep.subr.bf16.mxu0 0
          %3241 = vmatpush1.bf16.msra.mxu0 0
          %3242 = vmatprep.subr.bf16.mxu0 0
          %3243 = vmatpush1.bf16.msra.mxu0 0
          %3244 = vmatprep.subr.bf16.mxu0 0
          %3245 = vmatpush1.bf16.msra.mxu0 0
          %3246 = vmatprep.subr.bf16.mxu0 0
          %3247 = vmatpush1.bf16.msra.mxu0 0
          %3248 = vmatprep.subr.bf16.mxu0 0
          %3249 = vmatpush1.bf16.msra.mxu0 0
          %3250 = vmatprep.subr.bf16.mxu0 0
          %3251 = vmatpush1.bf16.msra.mxu0 0
          %3252 = vmatprep.subr.bf16.mxu0 0
          %3253 = vmatpush1.bf16.msra.mxu0 0
          %3254 = vmatprep.mubr.bf16.mxu0 0
          %3255 = vmatmul.mubr.bf16.gmra.mrb[0].mxu0 %v3177
          %v3256 = vpop.f32.mrb[0].mxu0
          %v3257 = vadd.f32 %v3108, %v3256
          %v3258 = vpop.f32.mrb[0].mxu0
          %v3259 = vpop.f32.mrb[0].mxu0
          %v3260 = vadd.f32 %v3108, %v3259
          %v3261 = vpop.f32.mrb[0].mxu0
          %3262 = vdwg.mxu0
          %v3263 = vpack.c.bf16 %v2972, %v2972
          %v3264 = vpack.c.bf16 %v2979, %v2979
          %v3265 = vpack.c.bf16 %v2986, %v2986
          %v3266 = vpack.c.bf16 %v2993, %v2993
          %v3267 = vpack.c.bf16 %v3000, %v3000
          %v3268 = vpack.c.bf16 %v3007, %v3007
          %v3269 = vpack.c.bf16 %v3014, %v3014
          %v3270 = vpack.c.bf16 %v3021, %v3021
          %v3271 = vpack.c.bf16 %v3028, %v3028
          %v3272 = vpack.c.bf16 %v3035, %v3035
          %v3273 = vpack.c.bf16 %v3042, %v3042
          %v3274 = vpack.c.bf16 %v3049, %v3049
          %v3275 = vpack.c.bf16 %v3056, %v3056
          %v3276 = vpack.c.bf16 %v3063, %v3063
          %v3277 = vpack.c.bf16 %v3070, %v3070
          %v3278 = vpack.c.bf16 %v3077, %v3077
          %s3279 = scalar_lea.vmem [#allocation9], 96
          %v3280 = vld [vmem:[%s3279] sm:$0xff]
          %v3281 = vld [vmem:[%s3279 + $0x8] sm:$0xf]
          %v3282 = vld [vmem:[%s3279 + $0xc] sm:$0xff]
          %v3283 = vld [vmem:[%s3279 + $0x14] sm:$0xf]
          %v3284 = vld [vmem:[%s3279 + $0x18] sm:$0xff]
          %v3285 = vld [vmem:[%s3279 + $0x20] sm:$0xf]
          %v3286 = vld [vmem:[%s3279 + $0x24] sm:$0xff]
          %v3287 = vld [vmem:[%s3279 + $0x2c] sm:$0xf]
          %v3288 = vld [vmem:[%s3279 + $0x30] sm:$0xff]
          %v3289 = vld [vmem:[%s3279 + $0x38] sm:$0xf]
          %v3290 = vld [vmem:[%s3279 + $0x3c] sm:$0xff]
          %v3291 = vld [vmem:[%s3279 + $0x44] sm:$0xf]
          %v3292 = vld [vmem:[%s3279 + $0x48] sm:$0xff]
          %v3293 = vld [vmem:[%s3279 + $0x50] sm:$0xf]
          %v3294 = vld [vmem:[%s3279 + $0x54] sm:$0xff]
          %v3295 = vld [vmem:[%s3279 + $0x5c] sm:$0xf]
          %s3296 = scalar_lea.vmem %s5, 3
          %v3297 = vld [vmem:[%s3296] sm:$0x7]
          %v3299 = vlaneseq
          %v3300 = vshrl.u32 %v3299, 7
          %v3301 = vsub.s32 0, %v3300
          %v3302 = vrot.slane %v3297, %v3301
          %v3303 = vlaneseq
          %v3304 = vshrl.u32 %v3303, 7
          %v3305 = vsub.s32 1, %v3304
          %v3306 = vrot.slane %v3297, %v3305
          %v3307 = vlaneseq
          %v3308 = vshrl.u32 %v3307, 7
          %v3309 = vsub.s32 2, %v3308
          %v3310 = vrot.slane %v3297, %v3309
          %v3330 = vunpack.c.l.b16 %v3263
          %v3331 = vunpack.c.l.b16 %v3264
          %v3332 = vunpack.c.l.b16 %v3265
          %v3333 = vunpack.c.l.b16 %v3266
          %v3334 = vunpack.c.l.b16 %v3267
          %v3335 = vunpack.c.l.b16 %v3268
          %v3336 = vunpack.c.l.b16 %v3269
          %v3337 = vunpack.c.l.b16 %v3270
          %v3338 = vunpack.c.l.b16 %v3271
          %v3339 = vunpack.c.l.b16 %v3272
          %v3340 = vunpack.c.l.b16 %v3273
          %v3341 = vunpack.c.l.b16 %v3274
          %v3342 = vunpack.c.l.b16 %v3275
          %v3343 = vunpack.c.l.b16 %v3276
          %v3344 = vunpack.c.l.b16 %v3277
          %v3345 = vunpack.c.l.b16 %v3278
          %v3346 = vsel %vm1047, %v3331, %v3330
          %v3347 = vsel %vm1049, %v3332, %v3346
          %v3348 = vsel %vm1051, %v3333, %v3347
          %v3349 = vsel %vm1053, %v3334, %v3348
          %v3350 = vsel %vm1055, %v3335, %v3349
          %v3351 = vsel %vm1057, %v3336, %v3350
          %v3352 = vsel %vm1059, %v3337, %v3351
          %v3353 = vsel %vm1047, %v3339, %v3338
          %v3354 = vsel %vm1049, %v3340, %v3353
          %v3355 = vsel %vm1051, %v3341, %v3354
          %v3356 = vsel %vm1053, %v3342, %v3355
          %v3357 = vsel %vm1055, %v3343, %v3356
          %v3358 = vsel %vm1057, %v3344, %v3357
          %v3359 = vsel %vm1059, %v3345, %v3358
          %v3360 = vpack.c.b16 %v3359, %v3352
          %v3377 = vunpack.c.l.b16 %v3280
          %v3378 = vunpack.c.h.b16 %v3280
          %v3379 = vunpack.c.l.b16 %v3281
          %v3380 = vunpack.c.l.b16 %v3282
          %v3381 = vunpack.c.h.b16 %v3282
          %v3382 = vunpack.c.l.b16 %v3283
          %v3383 = vunpack.c.l.b16 %v3284
          %v3384 = vunpack.c.h.b16 %v3284
          %v3385 = vunpack.c.l.b16 %v3285
          %v3386 = vunpack.c.l.b16 %v3286
          %v3387 = vunpack.c.h.b16 %v3286
          %v3388 = vunpack.c.l.b16 %v3287
          %v3389 = vunpack.c.l.b16 %v3288
          %v3390 = vunpack.c.h.b16 %v3288
          %v3391 = vunpack.c.l.b16 %v3289
          %v3392 = vunpack.c.l.b16 %v3290
          %v3393 = vunpack.c.h.b16 %v3290
          %v3394 = vunpack.c.l.b16 %v3291
          %v3395 = vunpack.c.l.b16 %v3292
          %v3396 = vunpack.c.h.b16 %v3292
          %v3397 = vunpack.c.l.b16 %v3293
          %v3398 = vunpack.c.l.b16 %v3294
          %v3399 = vunpack.c.h.b16 %v3294
          %v3400 = vunpack.c.l.b16 %v3295
          %v3401 = vpack.c.b16 %v3380, %v3377
          %v3402 = vpack.c.b16 %v3381, %v3378
          %v3403 = vpack.c.b16 %v3382, %v3379
          %v3404 = vpack.c.b16 %v3386, %v3383
          %v3405 = vpack.c.b16 %v3387, %v3384
          %v3406 = vpack.c.b16 %v3388, %v3385
          %v3407 = vpack.c.b16 %v3392, %v3389
          %v3408 = vpack.c.b16 %v3393, %v3390
          %v3409 = vpack.c.b16 %v3394, %v3391
          %v3410 = vpack.c.b16 %v3398, %v3395
          %v3411 = vpack.c.b16 %v3399, %v3396
          %v3412 = vpack.c.b16 %v3400, %v3397
          %v3426 = vsel %vm916, %v3360, 0
          %3428 = vmatprep.subr.bf16.mxu0 %v3402
          %3429 = vmatpush1.bf16.msra.mxu0 %v3401
          %3430 = vmatprep.subr.bf16.mxu0 %v3405
          %3431 = vmatpush1.bf16.msra.mxu0 %v3404
          %3432 = vmatprep.subr.bf16.mxu0 %v3408
          %3433 = vmatpush1.bf16.msra.mxu0 %v3407
          %3434 = vmatprep.subr.bf16.mxu0 %v3411
          %3435 = vmatpush1.bf16.msra.mxu0 %v3410
          %3436 = vmatprep.subr.bf16.mxu0 0
          %3437 = vmatpush1.bf16.msra.mxu0 0
          %3438 = vmatprep.subr.bf16.mxu0 0
          %3439 = vmatpush1.bf16.msra.mxu0 0
          %3440 = vmatprep.subr.bf16.mxu0 0
          %3441 = vmatpush1.bf16.msra.mxu0 0
          %3442 = vmatprep.subr.bf16.mxu0 0
          %3443 = vmatpush1.bf16.msra.mxu0 0
          %3444 = vmatprep.subr.bf16.mxu0 0
          %3445 = vmatpush1.bf16.msra.mxu0 0
          %3446 = vmatprep.subr.bf16.mxu0 0
          %3447 = vmatpush1.bf16.msra.mxu0 0
          %3448 = vmatprep.subr.bf16.mxu0 0
          %3449 = vmatpush1.bf16.msra.mxu0 0
          %3450 = vmatprep.subr.bf16.mxu0 0
          %3451 = vmatpush1.bf16.msra.mxu0 0
          %3452 = vmatprep.subr.bf16.mxu0 0
          %3453 = vmatpush1.bf16.msra.mxu0 0
          %3454 = vmatprep.subr.bf16.mxu0 0
          %3455 = vmatpush1.bf16.msra.mxu0 0
          %3456 = vmatprep.subr.bf16.mxu0 0
          %3457 = vmatpush1.bf16.msra.mxu0 0
          %3458 = vmatprep.subr.bf16.mxu0 0
          %3459 = vmatpush1.bf16.msra.mxu0 0
          %3460 = vmatprep.mubr.bf16.mxu0 0
          %3461 = vmatmul.mubr.bf16.gmra.mrb[0].mxu0 %v3426
          %v3462 = vpop.f32.mrb[0].mxu0
          %v3463 = vadd.f32 %v3302, %v3462
          %v3464 = vpop.f32.mrb[0].mxu0
          %v3465 = vadd.f32 %v3306, %v3464
          %v3466 = vpop.f32.mrb[0].mxu0
          %v3467 = vadd.f32 %v3302, %v3466
          %v3468 = vpop.f32.mrb[0].mxu0
          %v3469 = vadd.f32 %v3306, %v3468
          %3470 = vdwg.mxu0
          %3471 = vmatprep.subr.bf16.mxu0 0
          %3472 = vmatpush1.bf16.msra.mxu0 %v3403
          %3473 = vmatprep.subr.bf16.mxu0 0
          %3474 = vmatpush1.bf16.msra.mxu0 %v3406
          %3475 = vmatprep.subr.bf16.mxu0 0
          %3476 = vmatpush1.bf16.msra.mxu0 %v3409
          %3477 = vmatprep.subr.bf16.mxu0 0
          %3478 = vmatpush1.bf16.msra.mxu0 %v3412
          %3479 = vmatprep.subr.bf16.mxu0 0
          %3480 = vmatpush1.bf16.msra.mxu0 0
          %3481 = vmatprep.subr.bf16.mxu0 0
          %3482 = vmatpush1.bf16.msra.mxu0 0
          %3483 = vmatprep.subr.bf16.mxu0 0
          %3484 = vmatpush1.bf16.msra.mxu0 0
          %3485 = vmatprep.subr.bf16.mxu0 0
          %3486 = vmatpush1.bf16.msra.mxu0 0
          %3487 = vmatprep.subr.bf16.mxu0 0
          %3488 = vmatpush1.bf16.msra.mxu0 0
          %3489 = vmatprep.subr.bf16.mxu0 0
          %3490 = vmatpush1.bf16.msra.mxu0 0
          %3491 = vmatprep.subr.bf16.mxu0 0
          %3492 = vmatpush1.bf16.msra.mxu0 0
          %3493 = vmatprep.subr.bf16.mxu0 0
          %3494 = vmatpush1.bf16.msra.mxu0 0
          %3495 = vmatprep.subr.bf16.mxu0 0
          %3496 = vmatpush1.bf16.msra.mxu0 0
          %3497 = vmatprep.subr.bf16.mxu0 0
          %3498 = vmatpush1.bf16.msra.mxu0 0
          %3499 = vmatprep.subr.bf16.mxu0 0
          %3500 = vmatpush1.bf16.msra.mxu0 0
          %3501 = vmatprep.subr.bf16.mxu0 0
          %3502 = vmatpush1.bf16.msra.mxu0 0
          %3503 = vmatprep.mubr.bf16.mxu0 0
          %3504 = vmatmul.mubr.bf16.gmra.mrb[0].mxu0 %v3426
          %v3505 = vpop.f32.mrb[0].mxu0
          %v3506 = vadd.f32 %v3310, %v3505
          %v3507 = vpop.f32.mrb[0].mxu0
          %v3508 = vpop.f32.mrb[0].mxu0
          %v3509 = vadd.f32 %v3310, %v3508
          %v3510 = vpop.f32.mrb[0].mxu0
          %3511 = vdwg.mxu0
          %v3512 = vadd.f32 %v3214, %v3463
          %v3513 = vadd.f32 %v3218, %v3467
          %v3514 = vxor.u32 %v3512, 2147483648
          %v3515 = vxor.u32 %v3513, 2147483648
          %v3516 = vmul.f32 %v3514, 1.442695
          %v3517 = vpow.pop %v3516
          %v3518 = vmul.f32 %v3515, 1.442695
          %v3519 = vpow.pop %v3518
          %v3520 = vadd.f32 %v3517, 1.0
          %v3521 = vadd.f32 %v3519, 1.0
          %v3522 = vrcp.pop %v3520
          %v3523 = vmul.f32 1.0, %v3522
          %v3524 = vrcp.pop %v3521
          %v3525 = vmul.f32 1.0, %v3524
          %v3526 = vadd.f32 %v3216, %v3465
          %v3527 = vadd.f32 %v3220, %v3469
          %v3528 = vxor.u32 %v3526, 2147483648
          %v3529 = vxor.u32 %v3527, 2147483648
          %v3530 = vmul.f32 %v3528, 1.442695
          %v3531 = vpow.pop %v3530
          %v3532 = vmul.f32 %v3529, 1.442695
          %v3533 = vpow.pop %v3532
          %v3534 = vadd.f32 %v3531, 1.0
          %v3535 = vadd.f32 %v3533, 1.0
          %v3536 = vrcp.pop %v3534
          %v3537 = vmul.f32 1.0, %v3536
          %v3538 = vrcp.pop %v3535
          %v3539 = vmul.f32 1.0, %v3538
          %v3540 = vmul.f32 %v3523, %v3506
          %v3541 = vmul.f32 %v3525, %v3509
          %v3542 = vadd.f32 %v3257, %v3540
          %v3543 = vadd.f32 %v3260, %v3541
          %v3544 = vtanh.pop %v3542
          %v3545 = vtanh.pop %v3543
          %v3546 = vsub.f32 1.0, %v3537
          %v3547 = vsub.f32 1.0, %v3539
          %v3548 = vmul.f32 %v3546, %v3544
          %v3549 = vmul.f32 %v3547, %v3545
          %v3566 = vsel %vm1047, %v2979, %v2972
          %v3567 = vsel %vm1049, %v2986, %v3566
          %v3568 = vsel %vm1051, %v2993, %v3567
          %v3569 = vsel %vm1053, %v3000, %v3568
          %v3570 = vsel %vm1055, %v3007, %v3569
          %v3571 = vsel %vm1057, %v3014, %v3570
          %v3572 = vsel %vm1059, %v3021, %v3571
          %v3573 = vsel %vm1047, %v3035, %v3028
          %v3574 = vsel %vm1049, %v3042, %v3573
          %v3575 = vsel %vm1051, %v3049, %v3574
          %v3576 = vsel %vm1053, %v3056, %v3575
          %v3577 = vsel %vm1055, %v3063, %v3576
          %v3578 = vsel %vm1057, %v3070, %v3577
          %v3579 = vsel %vm1059, %v3077, %v3578
          %v3582 = vmul.f32 %v3537, %v3572
          %v3583 = vmul.f32 %v3539, %v3579
          %v3584 = vadd.f32 %v3548, %v3582
          %v3585 = vadd.f32 %v3549, %v3583
          %s3586 = scalar_lea.vmem %s669, 16 [#allocation19]
          %3587 = vst.msk [vmem:[%s3586] sm:$0xff] %vm916, %v3584
          %3588 = vst.msk [vmem:[%s3586 + $0x8] sm:$0xff] %vm916, %v3585
          %v3589 = vpack.c.bf16 %v3585, %v3584
          %v3590 = vld [vmem:[#allocation14] sm:$0xf]
          %v3591 = vld [vmem:[#allocation14 + $0x4] sm:$0xf]
          %v3592 = vld [vmem:[#allocation14 + $0x8] sm:$0xf]
          %v3593 = vld [vmem:[#allocation14 + $0xc] sm:$0xf]
          %v3594 = vld [vmem:[#allocation14 + $0x10] sm:$0xf]
          %v3595 = vld [vmem:[#allocation14 + $0x14] sm:$0xf]
          %v3596 = vld [vmem:[#allocation14 + $0x18] sm:$0xf]
          %v3597 = vld [vmem:[#allocation14 + $0x1c] sm:$0xf]
          %v3598 = vld [vmem:[%s9] sm:$0x1]
          %v3600 = vlaneseq
          %v3601 = vshrl.u32 %v3600, 7
          %v3602 = vsub.s32 0, %v3601
          %v3603 = vrot.slane %v3598, %v3602
          %v3613 = vunpack.c.l.b16 %v3590
          %v3614 = vunpack.c.l.b16 %v3591
          %v3615 = vunpack.c.l.b16 %v3592
          %v3616 = vunpack.c.l.b16 %v3593
          %v3617 = vunpack.c.l.b16 %v3594
          %v3618 = vunpack.c.l.b16 %v3595
          %v3619 = vunpack.c.l.b16 %v3596
          %v3620 = vunpack.c.l.b16 %v3597
          %v3621 = vpack.c.b16 %v3614, %v3613
          %v3622 = vpack.c.b16 %v3616, %v3615
          %v3623 = vpack.c.b16 %v3618, %v3617
          %v3624 = vpack.c.b16 %v3620, %v3619
          %v3630 = vsel %vm916, %v3589, 0
          %3632 = vmatprep.subr.bf16.mxu0 0
          %3633 = vmatpush1.bf16.msra.mxu0 %v3621
          %3634 = vmatprep.subr.bf16.mxu0 0
          %3635 = vmatpush1.bf16.msra.mxu0 %v3622
          %3636 = vmatprep.subr.bf16.mxu0 0
          %3637 = vmatpush1.bf16.msra.mxu0 %v3623
          %3638 = vmatprep.subr.bf16.mxu0 0
          %3639 = vmatpush1.bf16.msra.mxu0 %v3624
          %3640 = vmatprep.subr.bf16.mxu0 0
          %3641 = vmatpush1.bf16.msra.mxu0 0
          %3642 = vmatprep.subr.bf16.mxu0 0
          %3643 = vmatpush1.bf16.msra.mxu0 0
          %3644 = vmatprep.subr.bf16.mxu0 0
          %3645 = vmatpush1.bf16.msra.mxu0 0
          %3646 = vmatprep.subr.bf16.mxu0 0
          %3647 = vmatpush1.bf16.msra.mxu0 0
          %3648 = vmatprep.subr.bf16.mxu0 0
          %3649 = vmatpush1.bf16.msra.mxu0 0
          %3650 = vmatprep.subr.bf16.mxu0 0
          %3651 = vmatpush1.bf16.msra.mxu0 0
          %3652 = vmatprep.subr.bf16.mxu0 0
          %3653 = vmatpush1.bf16.msra.mxu0 0
          %3654 = vmatprep.subr.bf16.mxu0 0
          %3655 = vmatpush1.bf16.msra.mxu0 0
          %3656 = vmatprep.subr.bf16.mxu0 0
          %3657 = vmatpush1.bf16.msra.mxu0 0
          %3658 = vmatprep.subr.bf16.mxu0 0
          %3659 = vmatpush1.bf16.msra.mxu0 0
          %3660 = vmatprep.subr.bf16.mxu0 0
          %3661 = vmatpush1.bf16.msra.mxu0 0
          %3662 = vmatprep.subr.bf16.mxu0 0
          %3663 = vmatpush1.bf16.msra.mxu0 0
          %3664 = vmatprep.mubr.bf16.mxu0 0
          %3665 = vmatmul.mubr.bf16.gmra.mrb[0].mxu0 %v3630
          %v3666 = vpop.f32.mrb[0].mxu0
          %v3667 = vadd.f32 %v3603, %v3666
          %v3668 = vpop.f32.mrb[0].mxu0
          %v3669 = vpop.f32.mrb[0].mxu0
          %v3670 = vadd.f32 %v3603, %v3669
          %v3671 = vpop.f32.mrb[0].mxu0
          %3672 = vdwg.mxu0
          %v3673 = vpack.c.bf16 %v3670, %v3667
          %v3674 = vld [vmem:[#allocation15] sm:$0xff]
          %v3675 = vld [vmem:[#allocation15 + $0x8] sm:$0xff]
          %v3676 = vld [vmem:[#allocation15 + $0x10] sm:$0xff]
          %v3677 = vld [vmem:[#allocation15 + $0x18] sm:$0xff]
          %v3678 = vld [vmem:[#allocation15 + $0x20] sm:$0xff]
          %v3679 = vld [vmem:[#allocation15 + $0x28] sm:$0xff]
          %v3680 = vld [vmem:[#allocation15 + $0x30] sm:$0xff]
          %v3681 = vld [vmem:[#allocation15 + $0x38] sm:$0xff]
          %v3682 = vld [vmem:[#allocation15 + $0x40] sm:$0xff]
          %v3683 = vld [vmem:[#allocation15 + $0x48] sm:$0xff]
          %v3684 = vld [vmem:[#allocation15 + $0x50] sm:$0xff]
          %v3685 = vld [vmem:[#allocation15 + $0x58] sm:$0xff]
          %v3686 = vld [vmem:[#allocation15 + $0x60] sm:$0xff]
          %v3687 = vld [vmem:[#allocation15 + $0x68] sm:$0xff]
          %v3688 = vld [vmem:[#allocation15 + $0x70] sm:$0xff]
          %v3689 = vld [vmem:[#allocation15 + $0x78] sm:$0xff]
          %v3690 = vld [vmem:[%s11] sm:$0x3]
          %v3692 = vlaneseq
          %v3693 = vshrl.u32 %v3692, 7
          %v3694 = vsub.s32 0, %v3693
          %v3695 = vrot.slane %v3690, %v3694
          %v3696 = vlaneseq
          %v3697 = vshrl.u32 %v3696, 7
          %v3698 = vsub.s32 1, %v3697
          %v3699 = vrot.slane %v3690, %v3698
          %v3718 = vunpack.c.l.b16 %v3674
          %v3719 = vunpack.c.h.b16 %v3674
          %v3720 = vunpack.c.l.b16 %v3675
          %v3721 = vunpack.c.h.b16 %v3675
          %v3722 = vunpack.c.l.b16 %v3676
          %v3723 = vunpack.c.h.b16 %v3676
          %v3724 = vunpack.c.l.b16 %v3677
          %v3725 = vunpack.c.h.b16 %v3677
          %v3726 = vunpack.c.l.b16 %v3678
          %v3727 = vunpack.c.h.b16 %v3678
          %v3728 = vunpack.c.l.b16 %v3679
          %v3729 = vunpack.c.h.b16 %v3679
          %v3730 = vunpack.c.l.b16 %v3680
          %v3731 = vunpack.c.h.b16 %v3680
          %v3732 = vunpack.c.l.b16 %v3681
          %v3733 = vunpack.c.h.b16 %v3681
          %v3734 = vunpack.c.l.b16 %v3682
          %v3735 = vunpack.c.h.b16 %v3682
          %v3736 = vunpack.c.l.b16 %v3683
          %v3737 = vunpack.c.h.b16 %v3683
          %v3738 = vunpack.c.l.b16 %v3684
          %v3739 = vunpack.c.h.b16 %v3684
          %v3740 = vunpack.c.l.b16 %v3685
          %v3741 = vunpack.c.h.b16 %v3685
          %v3742 = vunpack.c.l.b16 %v3686
          %v3743 = vunpack.c.h.b16 %v3686
          %v3744 = vunpack.c.l.b16 %v3687
          %v3745 = vunpack.c.h.b16 %v3687
          %v3746 = vunpack.c.l.b16 %v3688
          %v3747 = vunpack.c.h.b16 %v3688
          %v3748 = vunpack.c.l.b16 %v3689
          %v3749 = vunpack.c.h.b16 %v3689
          %v3750 = vpack.c.b16 %v3720, %v3718
          %v3751 = vpack.c.b16 %v3721, %v3719
          %v3752 = vpack.c.b16 %v3724, %v3722
          %v3753 = vpack.c.b16 %v3725, %v3723
          %v3754 = vpack.c.b16 %v3728, %v3726
          %v3755 = vpack.c.b16 %v3729, %v3727
          %v3756 = vpack.c.b16 %v3732, %v3730
          %v3757 = vpack.c.b16 %v3733, %v3731
          %v3758 = vpack.c.b16 %v3736, %v3734
          %v3759 = vpack.c.b16 %v3737, %v3735
          %v3760 = vpack.c.b16 %v3740, %v3738
          %v3761 = vpack.c.b16 %v3741, %v3739
          %v3762 = vpack.c.b16 %v3744, %v3742
          %v3763 = vpack.c.b16 %v3745, %v3743
          %v3764 = vpack.c.b16 %v3748, %v3746
          %v3765 = vpack.c.b16 %v3749, %v3747
          %3782 = vmatprep.subr.bf16.mxu0 %v3751
          %3783 = vmatpush1.bf16.msra.mxu0 %v3750
          %3784 = vmatprep.subr.bf16.mxu0 %v3753
          %3785 = vmatpush1.bf16.msra.mxu0 %v3752
          %3786 = vmatprep.subr.bf16.mxu0 %v3755
          %3787 = vmatpush1.bf16.msra.mxu0 %v3754
          %3788 = vmatprep.subr.bf16.mxu0 %v3757
          %3789 = vmatpush1.bf16.msra.mxu0 %v3756
          %3790 = vmatprep.subr.bf16.mxu0 %v3759
          %3791 = vmatpush1.bf16.msra.mxu0 %v3758
          %3792 = vmatprep.subr.bf16.mxu0 %v3761
          %3793 = vmatpush1.bf16.msra.mxu0 %v3760
          %3794 = vmatprep.subr.bf16.mxu0 %v3763
          %3795 = vmatpush1.bf16.msra.mxu0 %v3762
          %3796 = vmatprep.subr.bf16.mxu0 %v3765
          %3797 = vmatpush1.bf16.msra.mxu0 %v3764
          %3798 = vmatprep.subr.bf16.mxu0 0
          %3799 = vmatpush1.bf16.msra.mxu0 0
          %3800 = vmatprep.subr.bf16.mxu0 0
          %3801 = vmatpush1.bf16.msra.mxu0 0
          %3802 = vmatprep.subr.bf16.mxu0 0
          %3803 = vmatpush1.bf16.msra.mxu0 0
          %3804 = vmatprep.subr.bf16.mxu0 0
          %3805 = vmatpush1.bf16.msra.mxu0 0
          %3806 = vmatprep.subr.bf16.mxu0 0
          %3807 = vmatpush1.bf16.msra.mxu0 0
          %3808 = vmatprep.subr.bf16.mxu0 0
          %3809 = vmatpush1.bf16.msra.mxu0 0
          %3810 = vmatprep.subr.bf16.mxu0 0
          %3811 = vmatpush1.bf16.msra.mxu0 0
          %3812 = vmatprep.subr.bf16.mxu0 0
          %3813 = vmatpush1.bf16.msra.mxu0 0
          %3814 = vmatprep.mubr.bf16.mxu0 0
          %3815 = vmatmul.mubr.bf16.gmra.mrb[0].mxu0 %v3673
          %v3816 = vpop.f32.mrb[0].mxu0
          %v3817 = vadd.f32 %v3695, %v3816
          %v3818 = vpop.f32.mrb[0].mxu0
          %v3819 = vadd.f32 %v3699, %v3818
          %v3820 = vpop.f32.mrb[0].mxu0
          %v3821 = vadd.f32 %v3695, %v3820
          %v3822 = vpop.f32.mrb[0].mxu0
          %v3823 = vadd.f32 %v3699, %v3822
          %3824 = vdwg.mxu0
          %v3825 = vpack.c.bf16 %v3821, %v3817
          %v3826 = vpack.c.bf16 %v3823, %v3819
          %3827 = vst [vmem:[#allocation2] sm:$0xff] %v3825
          %3828 = vst [vmem:[#allocation2 + $0x8] sm:$0xff] %v3826
        $region116: #{tpu_custom_call.1} parent=75 // pred_fallthru
          _
        %v3829 = vld [vmem:[#allocation2] sm:$0xff]
        %v3830 = vld [vmem:[#allocation2 + $0x8] sm:$0xff]
        %v3831 = vld [vmem:[%s614] sm:$0xf]
        %v3832 = vld [vmem:[%s614 + $0x4] sm:$0xf]
        %v3833 = vld [vmem:[%s614 + $0x8] sm:$0xf]
        %v3834 = vld [vmem:[%s614 + $0xc] sm:$0xf]
        %v3835 = vld [vmem:[%s614 + $0x10] sm:$0xf]
        %v3836 = vld [vmem:[%s614 + $0x14] sm:$0xf]
        %v3837 = vld [vmem:[%s614 + $0x18] sm:$0xf]
        %v3838 = vld [vmem:[%s614 + $0x1c] sm:$0xf]
        %v3839 = vld [vmem:[%s614 + $0x20] sm:$0xf]
        %v3840 = vld [vmem:[%s614 + $0x24] sm:$0xf]
        %v3841 = vld [vmem:[%s614 + $0x28] sm:$0xf]
        %v3842 = vld [vmem:[%s614 + $0x2c] sm:$0xf]
        %v3843 = vld [vmem:[%s614 + $0x30] sm:$0xf]
        %v3844 = vld [vmem:[%s614 + $0x34] sm:$0xf]
        %v3845 = vld [vmem:[%s614 + $0x38] sm:$0xf]
        %v3846 = vld [vmem:[%s614 + $0x3c] sm:$0xf]
        %v3847 = vld [vmem:[%s614 + $0x40] sm:$0xf]
        %v3848 = vld [vmem:[%s614 + $0x44] sm:$0xf]
        %v3849 = vld [vmem:[%s614 + $0x48] sm:$0xf]
        %v3850 = vld [vmem:[%s614 + $0x4c] sm:$0xf]
        %v3851 = vld [vmem:[%s614 + $0x50] sm:$0xf]
        %v3852 = vld [vmem:[%s614 + $0x54] sm:$0xf]
        %v3853 = vld [vmem:[%s614 + $0x58] sm:$0xf]
        %v3854 = vld [vmem:[%s614 + $0x5c] sm:$0xf]
        %v3855 = vld [vmem:[%s614 + $0x60] sm:$0xf]
        %v3856 = vld [vmem:[%s614 + $0x64] sm:$0xf]
        %v3857 = vld [vmem:[%s614 + $0x68] sm:$0xf]
        %v3858 = vld [vmem:[%s614 + $0x6c] sm:$0xf]
        %v3859 = vld [vmem:[%s614 + $0x70] sm:$0xf]
        %v3860 = vld [vmem:[%s614 + $0x74] sm:$0xf]
        %v3861 = vld [vmem:[%s614 + $0x78] sm:$0xf]
        %v3862 = vld [vmem:[%s614 + $0x7c] sm:$0xf]
        %v3863 = vld [vmem:[%s674] sm:$0x1]
        %v3865 = vlaneseq
        %v3866 = vshrl.u32 %v3865, 7
        %v3867 = vsub.s32 0, %v3866
        %v3868 = vrot.slane %v3863, %v3867
        %v3902 = vunpack.c.l.b16 %v3831
        %v3903 = vunpack.c.l.b16 %v3832
        %v3904 = vunpack.c.l.b16 %v3833
        %v3905 = vunpack.c.l.b16 %v3834
        %v3906 = vunpack.c.l.b16 %v3835
        %v3907 = vunpack.c.l.b16 %v3836
        %v3908 = vunpack.c.l.b16 %v3837
        %v3909 = vunpack.c.l.b16 %v3838
        %v3910 = vunpack.c.l.b16 %v3839
        %v3911 = vunpack.c.l.b16 %v3840
        %v3912 = vunpack.c.l.b16 %v3841
        %v3913 = vunpack.c.l.b16 %v3842
        %v3914 = vunpack.c.l.b16 %v3843
        %v3915 = vunpack.c.l.b16 %v3844
        %v3916 = vunpack.c.l.b16 %v3845
        %v3917 = vunpack.c.l.b16 %v3846
        %v3918 = vunpack.c.l.b16 %v3847
        %v3919 = vunpack.c.l.b16 %v3848
        %v3920 = vunpack.c.l.b16 %v3849
        %v3921 = vunpack.c.l.b16 %v3850
        %v3922 = vunpack.c.l.b16 %v3851
        %v3923 = vunpack.c.l.b16 %v3852
        %v3924 = vunpack.c.l.b16 %v3853
        %v3925 = vunpack.c.l.b16 %v3854
        %v3926 = vunpack.c.l.b16 %v3855
        %v3927 = vunpack.c.l.b16 %v3856
        %v3928 = vunpack.c.l.b16 %v3857
        %v3929 = vunpack.c.l.b16 %v3858
        %v3930 = vunpack.c.l.b16 %v3859
        %v3931 = vunpack.c.l.b16 %v3860
        %v3932 = vunpack.c.l.b16 %v3861
        %v3933 = vunpack.c.l.b16 %v3862
        %v3934 = vpack.c.b16 %v3903, %v3902
        %v3935 = vpack.c.b16 %v3905, %v3904
        %v3936 = vpack.c.b16 %v3907, %v3906
        %v3937 = vpack.c.b16 %v3909, %v3908
        %v3938 = vpack.c.b16 %v3911, %v3910
        %v3939 = vpack.c.b16 %v3913, %v3912
        %v3940 = vpack.c.b16 %v3915, %v3914
        %v3941 = vpack.c.b16 %v3917, %v3916
        %v3942 = vpack.c.b16 %v3919, %v3918
        %v3943 = vpack.c.b16 %v3921, %v3920
        %v3944 = vpack.c.b16 %v3923, %v3922
        %v3945 = vpack.c.b16 %v3925, %v3924
        %v3946 = vpack.c.b16 %v3927, %v3926
        %v3947 = vpack.c.b16 %v3929, %v3928
        %v3948 = vpack.c.b16 %v3931, %v3930
        %v3949 = vpack.c.b16 %v3933, %v3932
        %3966 = vmatprep.subr.bf16.mxu0 0
        %3967 = vmatpush1.bf16.msra.mxu0 %v3934
        %3968 = vmatprep.subr.bf16.mxu0 0
        %3969 = vmatpush1.bf16.msra.mxu0 %v3935
        %3970 = vmatprep.subr.bf16.mxu0 0
        %3971 = vmatpush1.bf16.msra.mxu0 %v3936
        %3972 = vmatprep.subr.bf16.mxu0 0
        %3973 = vmatpush1.bf16.msra.mxu0 %v3937
        %3974 = vmatprep.subr.bf16.mxu0 0
        %3975 = vmatpush1.bf16.msra.mxu0 %v3938
        %3976 = vmatprep.subr.bf16.mxu0 0
        %3977 = vmatpush1.bf16.msra.mxu0 %v3939
        %3978 = vmatprep.subr.bf16.mxu0 0
        %3979 = vmatpush1.bf16.msra.mxu0 %v3940
        %3980 = vmatprep.subr.bf16.mxu0 0
        %3981 = vmatpush1.bf16.msra.mxu0 %v3941
        %3982 = vmatprep.subr.bf16.mxu0 0
        %3983 = vmatpush1.bf16.msra.mxu0 %v3942
        %3984 = vmatprep.subr.bf16.mxu0 0
        %3985 = vmatpush1.bf16.msra.mxu0 %v3943
        %3986 = vmatprep.subr.bf16.mxu0 0
        %3987 = vmatpush1.bf16.msra.mxu0 %v3944
        %3988 = vmatprep.subr.bf16.mxu0 0
        %3989 = vmatpush1.bf16.msra.mxu0 %v3945
        %3990 = vmatprep.subr.bf16.mxu0 0
        %3991 = vmatpush1.bf16.msra.mxu0 %v3946
        %3992 = vmatprep.subr.bf16.mxu0 0
        %3993 = vmatpush1.bf16.msra.mxu0 %v3947
        %3994 = vmatprep.subr.bf16.mxu0 0
        %3995 = vmatpush1.bf16.msra.mxu0 %v3948
        %3996 = vmatprep.subr.bf16.mxu0 0
        %3997 = vmatpush1.bf16.msra.mxu0 %v3949
        %3998 = vmatprep.mubr.bf16.mxu0 %v3830
        %3999 = vmatmul.mubr.bf16.gmra.mrb[0].mxu0 %v3829
        %v4000 = vpop.f32.mrb[0].mxu0
        %v4001 = vadd.f32 %v3868, %v4000
        %v4002 = vpop.f32.mrb[0].mxu0
        %v4003 = vpop.f32.mrb[0].mxu0
        %v4004 = vadd.f32 %v3868, %v4003
        %v4005 = vpop.f32.mrb[0].mxu0
        %4006 = vdwg.mxu0
        %4007 = vst [vmem:[%s662] sm:$0xff] %v4001
        %4008 = vst [vmem:[%s662 + $0x8] sm:$0xff] %v4004
        %s4009 = sand.u32 %s368, 1
        %s4010 = scalar_lea.sflag [#allocation5], %s4009
        %s4011 = sand.u32 %s368, 1
        %s4012 = smul.addr %s4011, 16
        %s4013 = scalar_lea.vmem [#allocation18], %s4012
        %s4014 = sand.u32 %s394, 1
        %s4015 = scalar_lea.sflag [#allocation20], %s4014
        %s4016 = sand.u32 %s394, 1
        %s4017 = smul.addr %s4016, 32
        %s4018 = scalar_lea.vmem [#allocation19], %s4017
        // Predicated region
        $region117: #{tpu_custom_call.1} parent=75 // pred_check
          %p4019 = pneg %p378
        $region118: #{tpu_custom_call.1} parent=75 // pred_check_branch
          %4021 = sbr.rel (%p4019) target = $region120
        $region119: #{tpu_custom_call.1} parent=75 // pred_region
          %s4022 = sadd.s32 %s42, %s43
          %s4024 = ssub.s32 256, 256
          %4025 = vsyncadd %s4010, %s4024
          %s4026 = smul.addr %s4022, 128
          %s4027 = scalar_lea.hbm %s14, %s4026
          %s4028 = sshll.u32 %s4013, 4
          %s4029 = int_to_ptr.vmem [resolvable:$true] %s4028
          %4034 = dma.vmem_to_hbm [thread:$0]  %s4029, 256, %s4027, %s4010, 128, 256, 8
        $region120: #{tpu_custom_call.1} parent=75 // pred_fallthru
          _
        // Predicated region
        $region121: #{tpu_custom_call.1} parent=75 // pred_check
          %p4035 = pneg %p404
        $region122: #{tpu_custom_call.1} parent=75 // pred_check_branch
          %4037 = sbr.rel (%p4035) target = $region124
        $region123: #{tpu_custom_call.1} parent=75 // pred_region
          %s4039 = ssub.s32 512, 512
          %4040 = vsyncadd %s4015, %s4039
          %s4041 = smul.addr %s42, 4
          %s4042 = smul.addr %s4041, 128
          %s4043 = scalar_lea.hbm %s15, %s4042
          %s4044 = sshll.u32 %s4018, 4
          %s4045 = int_to_ptr.vmem [resolvable:$true] %s4044
          %4050 = dma.vmem_to_hbm [thread:$0]  %s4045, 512, %s4043, %s4015, 128, 128, 8
        $region124: #{tpu_custom_call.1} parent=75 // pred_fallthru
          _
      $region76: #{tpu_custom_call.1} parent=5 // pred_fallthru
        _
      %p4051 = scmp.le.s32.totalorder 2, %s33
      // Predicated region
      $region125: #{tpu_custom_call.1} parent=5 // pred_check
        %p4052 = pneg %p4051
      $region126: #{tpu_custom_call.1} parent=5 // pred_check_branch
        %4054 = sbr.rel (%p4052) target = $region128
      $region127: #{tpu_custom_call.1} parent=5 // pred_region
        %s4055 = ssub.s32 %s33, 2
        // Predicated region
        $region129: #{tpu_custom_call.1} parent=127 // pred_check
          %p4056 = pneg %p384
        $region130: #{tpu_custom_call.1} parent=127 // pred_check_branch
          %4058 = sbr.rel (%p4056) target = $region132
        $region131: #{tpu_custom_call.1} parent=127 // pred_region
          %s4059 = sand.u32 %s369, 1
          %s4060 = scalar_lea.sflag [#allocation5], %s4059
          %s4061 = sand.u32 %s369, 1
          %s4062 = smul.addr %s4061, 16
          %s4063 = scalar_lea.vmem [#allocation18], %s4062
          %4064 = dma.done %s4060, 256
        $region132: #{tpu_custom_call.1} parent=127 // pred_fallthru
          _
        // Predicated region
        $region133: #{tpu_custom_call.1} parent=127 // pred_check
          %p4065 = pneg %p410
        $region134: #{tpu_custom_call.1} parent=127 // pred_check_branch
          %4067 = sbr.rel (%p4065) target = $region136
        $region135: #{tpu_custom_call.1} parent=127 // pred_region
          %s4068 = sand.u32 %s395, 1
          %s4069 = scalar_lea.sflag [#allocation20], %s4068
          %s4070 = sand.u32 %s395, 1
          %s4071 = smul.addr %s4070, 32
          %s4072 = scalar_lea.vmem [#allocation19], %s4071
          %4073 = dma.done %s4069, 512
        $region136: #{tpu_custom_call.1} parent=127 // pred_fallthru
          _
      $region128: #{tpu_custom_call.1} parent=5 // pred_fallthru
        _
    $region6: #{tpu_custom_call.1} parent=1 // loop_footer
      %s37 = sadd.s32 1, %s33
    $region7: #{tpu_custom_call.1} parent=1 // loop_footer_branch
      %32 = sbr.rel target = $region3
    $region8: #{tpu_custom_call.1} parent=1 // loop_exit
      _
    %4074 = vsyncpa [#allocation4], 1
    %s4075 = scalar_lea.sflag [#allocation4], 1
    %4076 = vsyncpa %s4075, 1
    %4077 = vsyncpa [#allocation7], 1
    %4078 = vsyncpa [#allocation10], 1
    %4079 = vsyncpa [#allocation13], 1
    %4080 = vsyncpa [#allocation16], 1
    %4081 = vsyncpa [#allocation5], 1
    %s4082 = scalar_lea.sflag [#allocation5], 1
    %4083 = vsyncpa %s4082, 1
    %4084 = vsyncpa [#allocation20], 1
    %s4085 = scalar_lea.sflag [#allocation20], 1
    %4086 = vsyncpa %s4085, 1

</llo_original>
